<compile_context>
chip_gen: v5e
topology: v5e:2x2
jax: 0.10.0
libtpu: 0.0.40
codegen_flags: <defaults>
</compile_context>

<pallas_src>
import functools
import math

import jax
import jax.numpy as jnp
from jax.experimental import pallas as pl
from jax.experimental.pallas import tpu as pltpu


def qkv_attention_kernel(x_ref, skip_ref,
                         wqkv_ref, bqkv_ref,
                         wo_ref, bo_ref,
                         out_ref,
                         *, seq_len, heads, dh):
    """One batch element per grid step: fused bf16 QKV projection, batched-head
    attention (heads in the einsum batch dim), output projection, skip add."""
    channels = heads * dh

    x = x_ref[...]                                                  # (L, C) bf16

    # Fused Q/K/V projection — a single MXU pass with N = 3C.  The 1/sqrt(dh)
    # softmax scale is already folded into the Q columns by the wrapper.
    qkv = jnp.dot(x, wqkv_ref[...], preferred_element_type=jnp.float32)
    qkv = qkv + bqkv_ref[...]                                       # (L, 3C) f32

    # Heads into the batch dim: one reshape + one transpose (minor dim dh stays
    # minor), then cheap leading-dim slices.  No per-head lane slicing, no
    # lane-axis concatenation.
    qkv = qkv.reshape(seq_len, 3 * heads, dh).transpose(1, 0, 2)    # (3H, L, dh)
    q = qkv[:heads].astype(jnp.bfloat16)                            # (H, L, dh)
    k = qkv[heads:2 * heads].astype(jnp.bfloat16)                   # (H, L, dh)
    v = qkv[2 * heads:].astype(jnp.bfloat16)                        # (H, L, dh)

    # Scores for all heads in one batched MXU op (scale already folded in).
    s = jnp.einsum('hqd,hkd->hqk', q, k,
                   preferred_element_type=jnp.float32)              # (H, L, L) f32

    # Softmax kept entirely in f32.
    m = jnp.max(s, axis=-1, keepdims=True)
    p = jnp.exp(s - m)
    denom = jnp.sum(p, axis=-1, keepdims=True)                      # (H, L, 1)

    # Unnormalized p @ v first, then scale the small (H, L, dh) result by the
    # exact reciprocal of the denominator.
    pv = jnp.einsum('hqk,hkd->hqd', p.astype(jnp.bfloat16), v,
                    preferred_element_type=jnp.float32)             # (H, L, dh) f32
    o = pv * pl.reciprocal(denom)                                   # exact

    attn = o.transpose(1, 0, 2).reshape(seq_len, channels)          # (L, C) f32

    out = jnp.dot(attn.astype(jnp.bfloat16), wo_ref[...],
                  preferred_element_type=jnp.float32) + bo_ref[...] # (L, C) f32
    out_ref[...] = (out + skip_ref[...]).astype(out_ref.dtype)


@functools.partial(jax.jit, static_argnames=("heads",))
def qkv_attention_two(pe_lin_encoding, pe_lin_skip, params, *, heads):
    """Wrapper: PyTorch reshape glue, weight fusion/scaling, per-head lane
    padding, and a batch-parallel Pallas grid."""
    # PyTorch: x = x.reshape(x.shape[0], x.shape[1], -1)
    x = pe_lin_encoding.reshape(pe_lin_encoding.shape[0], pe_lin_encoding.shape[1], -1)
    skip = pe_lin_skip.reshape(pe_lin_skip.shape[0], pe_lin_skip.shape[1], -1)

    B, L, C = x.shape
    assert C % heads == 0
    assert L % 8 == 0, "sequence length must be a multiple of 8 sublanes"
    dh = C // heads
    wq, bq, wk, bk, wv, bv, wo, bo = params

    # ---- lane-dense padding -------------------------------------------------
    # Pad each head's width so heads * dh_pad is a multiple of 128 lanes.
    LANE = 128
    step = LANE // math.gcd(LANE, heads)          # smallest k with heads*k % 128 == 0
    dh_pad = ((dh + step - 1) // step) * step
    c_pad = heads * dh_pad

    scale = 1.0 / math.sqrt(dh)                   # softmax scale uses the REAL dh

    def pad_in_proj(w, b):
        # w: (C, C) (in, out), output columns grouped per head; b: (1, C).
        w3 = jnp.pad(w.reshape(C, heads, dh),
                     ((0, c_pad - C), (0, 0), (0, dh_pad - dh)))
        b3 = jnp.pad(b.reshape(1, heads, dh),
                     ((0, 0), (0, 0), (0, dh_pad - dh)))
        return w3.reshape(c_pad, c_pad), b3.reshape(1, c_pad)

    wq_p, bq_p = pad_in_proj(wq * scale, bq * scale)   # fold softmax scale into Q
    wk_p, bk_p = pad_in_proj(wk, bk)
    wv_p, bv_p = pad_in_proj(wv, bv)

    # Fused (C_pad, 3*C_pad) bf16 weight: one MXU pass for Q, K and V.
    w_qkv = jnp.concatenate([wq_p, wk_p, wv_p], axis=1).astype(jnp.bfloat16)
    b_qkv = jnp.concatenate([bq_p, bk_p, bv_p], axis=1)               # f32

    # Output projection: input rows grouped per head, output cols plain C→C_pad.
    wo_p = jnp.pad(wo.reshape(heads, dh, C),
                   ((0, 0), (0, dh_pad - dh), (0, c_pad - C)))
    wo_p = wo_p.reshape(c_pad, c_pad).astype(jnp.bfloat16)
    bo_p = jnp.pad(bo, ((0, 0), (0, c_pad - C)))                      # f32

    # Activations: flatten batch into rows, pad channels to full lanes.
    x2 = jnp.pad(x.reshape(B * L, C), ((0, 0), (0, c_pad - C))).astype(jnp.bfloat16)
    skip2 = jnp.pad(skip.reshape(B * L, C), ((0, 0), (0, c_pad - C)))  # f32

    kernel = functools.partial(qkv_attention_kernel,
                               seq_len=L, heads=heads, dh=dh_pad)

    out2 = pl.pallas_call(
        kernel,
        out_shape=jax.ShapeDtypeStruct((B * L, c_pad), jnp.float32),
        grid_spec=pltpu.PrefetchScalarGridSpec(
            num_scalar_prefetch=0,
            grid=(B,),                                            # one batch element / step
            in_specs=[
                pl.BlockSpec((L, c_pad), lambda b: (b, 0)),           # x
                pl.BlockSpec((L, c_pad), lambda b: (b, 0)),           # skip
                pl.BlockSpec((c_pad, 3 * c_pad), lambda b: (0, 0)),   # fused QKV W (resident)
                pl.BlockSpec((1, 3 * c_pad), lambda b: (0, 0)),       # fused QKV b (resident)
                pl.BlockSpec((c_pad, c_pad), lambda b: (0, 0)),       # out W (resident)
                pl.BlockSpec((1, c_pad), lambda b: (0, 0)),           # out b (resident)
            ],
            out_specs=pl.BlockSpec((L, c_pad), lambda b: (b, 0)),
        ),
        compiler_params=pltpu.CompilerParams(
            dimension_semantics=("parallel",)),       # v7x: 2nd TensorCore takes half the batch
        input_output_aliases={1: 0},                  # skip buffer reused as the output buffer
    )(x2, skip2, w_qkv, b_qkv, wo_p, bo_p)

    return out2[:, :C].reshape(B, L, C)


def _init_linear(key, in_features, out_features):
    """Deterministic PyTorch-style nn.Linear init.  Returns (W.T, b[None, :])
    i.e. weight already transposed to (in, out) for y = x @ W + b."""
    kw, kb = jax.random.split(key)
    bound = 1.0 / math.sqrt(in_features)
    w_torch = jax.random.uniform(kw, (out_features, in_features),
                                 minval=-bound, maxval=bound, dtype=jnp.float32)
    b = jax.random.uniform(kb, (out_features,),
                           minval=-bound, maxval=bound, dtype=jnp.float32)
    return w_torch.T, b[None, :]


def _reference(x, skip, params, heads):
    """Pure-JAX f32 reference of the same forward, for a correctness check."""
    wq, bq, wk, bk, wv, bv, wo, bo = params
    B, L, C = x.shape
    dh = C // heads
    q = x @ wq + bq
    k = x @ wk + bk
    v = x @ wv + bv
    qh = q.reshape(B, L, heads, dh).transpose(0, 2, 1, 3)
    kh = k.reshape(B, L, heads, dh).transpose(0, 2, 1, 3)
    vh = v.reshape(B, L, heads, dh).transpose(0, 2, 1, 3)
    s = jnp.einsum('bhqd,bhkd->bhqk', qh, kh) / math.sqrt(dh)
    p = jax.nn.softmax(s, axis=-1)
    o = jnp.einsum('bhqk,bhkd->bhqd', p, vh)
    o = o.transpose(0, 2, 1, 3).reshape(B, L, C)
    return o @ wo + bo + skip


if __name__ == "__main__":
    B, L, C = 2, 64, 32          # batch, sequence, channels
    HEADS = 4                    # channels % heads == 0
    MAX_SEQ_LENGTH = L           # unused by the forward math (as in the module)

    root = jax.random.PRNGKey(0)
    kx, ks, k0, k1, k2, k3 = jax.random.split(root, 6)

    pe_lin_encoding = jax.random.normal(kx, (B, L, C), dtype=jnp.float32)
    pe_lin_skip = jax.random.normal(ks, (B, L, C), dtype=jnp.float32)

    wq, bq = _init_linear(k0, C, C)
    wk, bk = _init_linear(k1, C, C)
    wv, bv = _init_linear(k2, C, C)
    wo, bo = _init_linear(k3, C, C)
    params = (wq, bq, wk, bk, wv, bv, wo, bo)

    out = qkv_attention_two(pe_lin_encoding, pe_lin_skip, params, heads=HEADS)
    out = jax.block_until_ready(out)

    ref = _reference(pe_lin_encoding, pe_lin_skip, params, HEADS)
    assert out.shape == (B, L, C)
    # Tolerance 3e-2 because the matmuls use bf16 operands (f32 accumulation
    # and f32 softmax); a structural bug would produce O(1) errors.
    assert jnp.allclose(out, ref, atol=3e-2, rtol=3e-2), "mismatch vs JAX reference"

    print("KERNEL_OK")
</pallas_src>

<mosaic_0001>
module attributes {stable_mosaic.version = 11 : i64} {
  func.func @qkv_attention_kernel(%arg0: i32, %arg1: memref<64x128xbf16, #tpu.memory_space<vmem>>, %arg2: memref<64x128xf32, #tpu.memory_space<vmem>>, %arg3: memref<128x384xbf16, #tpu.memory_space<vmem>>, %arg4: memref<1x384xf32, #tpu.memory_space<vmem>>, %arg5: memref<128x128xbf16, #tpu.memory_space<vmem>>, %arg6: memref<1x128xf32, #tpu.memory_space<vmem>>, %arg7: memref<64x128xf32, #tpu.memory_space<vmem>>) attributes {dimension_semantics = [#tpu.dimension_semantics<parallel>], iteration_bounds = array<i64: 2>, scalar_prefetch = 0 : i64, scratch_operands = 0 : i64, tpu.core_type = #tpu.core_type<tc>, window_params = [{transform_indices = @transform_0, window_bounds = array<i64: 64, 128>}, {transform_indices = @transform_1, window_bounds = array<i64: 64, 128>}, {pipeline_mode = #tpu.pipeline_mode<synchronous>, transform_indices = @transform_2, window_bounds = array<i64: 128, 384>}, {pipeline_mode = #tpu.pipeline_mode<synchronous>, transform_indices = @transform_3, window_bounds = array<i64: 1, 384>}, {pipeline_mode = #tpu.pipeline_mode<synchronous>, transform_indices = @transform_4, window_bounds = array<i64: 128, 128>}, {pipeline_mode = #tpu.pipeline_mode<synchronous>, transform_indices = @transform_5, window_bounds = array<i64: 1, 128>}, {transform_indices = @transform_6, window_bounds = array<i64: 64, 128>}]} {
    %c0 = arith.constant 0 : index
    %c0_0 = arith.constant 0 : index
    %0 = vector.load %arg1[%c0, %c0_0] : memref<64x128xbf16, #tpu.memory_space<vmem>>, vector<64x128xbf16>
    %c0_1 = arith.constant 0 : index
    %c0_2 = arith.constant 0 : index
    %1 = vector.load %arg3[%c0_1, %c0_2] : memref<128x384xbf16, #tpu.memory_space<vmem>>, vector<128x384xbf16>
    %cst = arith.constant dense<0.000000e+00> : vector<64x384xf32>
    %2 = tpu.matmul %0, %1, %cst {dimension_numbers = #tpu.dot_dimension_numbers<[1], [0], [0], [1], [0, 0, 1, 1], [], []>} : vector<64x128xbf16>, vector<128x384xbf16>, vector<64x384xf32> -> vector<64x384xf32>
    %c0_3 = arith.constant 0 : index
    %c0_4 = arith.constant 0 : index
    %3 = vector.load %arg4[%c0_3, %c0_4] : memref<1x384xf32, #tpu.memory_space<vmem>>, vector<1x384xf32>
    %4 = vector.broadcast %3 : vector<1x384xf32> to vector<64x384xf32>
    %5 = arith.addf %2, %4 : vector<64x384xf32>
    %6 = vector.shape_cast %5 : vector<64x384xf32> to vector<64x12x32xf32>
    %7 = tpu.transpose %6, [1, 0, 2] : vector<64x12x32xf32> -> vector<12x64x32xf32>
    %8 = vector.extract_strided_slice %7 {offsets = [0, 0, 0], sizes = [4, 64, 32], strides = [1, 1, 1]} : vector<12x64x32xf32> to vector<4x64x32xf32>
    %9 = arith.truncf %8 : vector<4x64x32xf32> to vector<4x64x32xbf16>
    %10 = vector.extract_strided_slice %7 {offsets = [4, 0, 0], sizes = [4, 64, 32], strides = [1, 1, 1]} : vector<12x64x32xf32> to vector<4x64x32xf32>
    %11 = arith.truncf %10 : vector<4x64x32xf32> to vector<4x64x32xbf16>
    %12 = vector.extract_strided_slice %7 {offsets = [8, 0, 0], sizes = [4, 64, 32], strides = [1, 1, 1]} : vector<12x64x32xf32> to vector<4x64x32xf32>
    %13 = arith.truncf %12 : vector<4x64x32xf32> to vector<4x64x32xbf16>
    "tpu.trace_start"() <{level = 10 : i32, message = "hqd,hkd->hqk"}> : () -> ()
    %cst_5 = arith.constant dense<0.000000e+00> : vector<4x64x64xf32>
    %14 = tpu.matmul %9, %11, %cst_5 {dimension_numbers = #tpu.dot_dimension_numbers<[2], [2], [1], [1], [0, 0, 0, 1, 1, 1], [0], [0]>} : vector<4x64x32xbf16>, vector<4x64x32xbf16>, vector<4x64x64xf32> -> vector<4x64x64xf32>
    "tpu.trace_stop"() : () -> ()
    %cst_6 = arith.constant dense<0xFF800000> : vector<4x64xf32>
    %15 = vector.multi_reduction <maximumf>, %14, %cst_6 [2] : vector<4x64x64xf32> to vector<4x64xf32>
    %16 = vector.shape_cast %15 : vector<4x64xf32> to vector<4x64x1xf32>
    %17 = vector.broadcast %16 : vector<4x64x1xf32> to vector<4x64x64xf32>
    %18 = arith.subf %14, %17 : vector<4x64x64xf32>
    %19 = math.exp %18 : vector<4x64x64xf32>
    %cst_7 = arith.constant dense<0.000000e+00> : vector<4x64xf32>
    %20 = vector.multi_reduction <add>, %19, %cst_7 [2] : vector<4x64x64xf32> to vector<4x64xf32>
    %21 = vector.shape_cast %20 : vector<4x64xf32> to vector<4x64x1xf32>
    %22 = arith.truncf %19 : vector<4x64x64xf32> to vector<4x64x64xbf16>
    "tpu.trace_start"() <{level = 10 : i32, message = "hqk,hkd->hqd"}> : () -> ()
    %cst_8 = arith.constant dense<0.000000e+00> : vector<4x64x32xf32>
    %23 = tpu.matmul %22, %13, %cst_8 {dimension_numbers = #tpu.dot_dimension_numbers<[2], [1], [1], [2], [0, 0, 0, 1, 1, 2], [0], [0]>} : vector<4x64x64xbf16>, vector<4x64x32xbf16>, vector<4x64x32xf32> -> vector<4x64x32xf32>
    "tpu.trace_stop"() : () -> ()
    %24 = tpu.reciprocal %21 : vector<4x64x1xf32> -> vector<4x64x1xf32>
    %25 = vector.broadcast %24 : vector<4x64x1xf32> to vector<4x64x32xf32>
    %26 = arith.mulf %23, %25 : vector<4x64x32xf32>
    %27 = tpu.transpose %26, [1, 0, 2] : vector<4x64x32xf32> -> vector<64x4x32xf32>
    %28 = vector.shape_cast %27 : vector<64x4x32xf32> to vector<64x128xf32>
    %29 = arith.truncf %28 : vector<64x128xf32> to vector<64x128xbf16>
    %c0_9 = arith.constant 0 : index
    %c0_10 = arith.constant 0 : index
    %30 = vector.load %arg5[%c0_9, %c0_10] : memref<128x128xbf16, #tpu.memory_space<vmem>>, vector<128x128xbf16>
    %cst_11 = arith.constant dense<0.000000e+00> : vector<64x128xf32>
    %31 = tpu.matmul %29, %30, %cst_11 {dimension_numbers = #tpu.dot_dimension_numbers<[1], [0], [0], [1], [0, 0, 1, 1], [], []>} : vector<64x128xbf16>, vector<128x128xbf16>, vector<64x128xf32> -> vector<64x128xf32>
    %c0_12 = arith.constant 0 : index
    %c0_13 = arith.constant 0 : index
    %32 = vector.load %arg6[%c0_12, %c0_13] : memref<1x128xf32, #tpu.memory_space<vmem>>, vector<1x128xf32>
    %33 = vector.broadcast %32 : vector<1x128xf32> to vector<64x128xf32>
    %34 = arith.addf %31, %33 : vector<64x128xf32>
    %c0_14 = arith.constant 0 : index
    %c0_15 = arith.constant 0 : index
    %35 = vector.load %arg2[%c0_14, %c0_15] : memref<64x128xf32, #tpu.memory_space<vmem>>, vector<64x128xf32>
    %36 = arith.addf %34, %35 : vector<64x128xf32>
    %c0_16 = arith.constant 0 : index
    %c0_17 = arith.constant 0 : index
    %37 = vector.load %arg7[%c0_16, %c0_17] : memref<64x128xf32, #tpu.memory_space<vmem>>, vector<64x128xf32>
    tpu.vector_store %arg7[%c0_16, %c0_17], %36 {strides = array<i32>} : memref<64x128xf32, #tpu.memory_space<vmem>>, vector<64x128xf32>,
    return
  }
  func.func @transform_0(%arg0: i32) -> (i32, i32) {
    %c0_i32 = arith.constant 0 : i32
    %c0_i32_0 = arith.constant 0 : i32
    return %arg0, %c0_i32 : i32, i32
  }
  func.func @transform_1(%arg0: i32) -> (i32, i32) {
    %c0_i32 = arith.constant 0 : i32
    %c0_i32_0 = arith.constant 0 : i32
    return %arg0, %c0_i32 : i32, i32
  }
  func.func @transform_2(%arg0: i32) -> (i32, i32) {
    %c0_i32 = arith.constant 0 : i32
    %c0_i32_0 = arith.constant 0 : i32
    %c0_i32_1 = arith.constant 0 : i32
    return %c0_i32, %c0_i32_0 : i32, i32
  }
  func.func @transform_3(%arg0: i32) -> (i32, i32) {
    %c0_i32 = arith.constant 0 : i32
    %c0_i32_0 = arith.constant 0 : i32
    %c0_i32_1 = arith.constant 0 : i32
    return %c0_i32, %c0_i32_0 : i32, i32
  }
  func.func @transform_4(%arg0: i32) -> (i32, i32) {
    %c0_i32 = arith.constant 0 : i32
    %c0_i32_0 = arith.constant 0 : i32
    %c0_i32_1 = arith.constant 0 : i32
    return %c0_i32, %c0_i32_0 : i32, i32
  }
  func.func @transform_5(%arg0: i32) -> (i32, i32) {
    %c0_i32 = arith.constant 0 : i32
    %c0_i32_0 = arith.constant 0 : i32
    %c0_i32_1 = arith.constant 0 : i32
    return %c0_i32, %c0_i32_0 : i32, i32
  }
  func.func @transform_6(%arg0: i32) -> (i32, i32) {
    %c0_i32 = arith.constant 0 : i32
    %c0_i32_0 = arith.constant 0 : i32
    return %arg0, %c0_i32 : i32, i32
  }
}

</mosaic_0001>

<llo_original>
// kernel: qkv_attention_two.1
$region0: #{qkv_attention_two.1}
  #allocation0 [shape = 'u32[]', space=smem, size = 0x4, offset = 0x4, fixed_abs, tag = 'smem constant byte address 0x4 - core index']
  #allocation1 [shape = 'u32[72,128]{1,0:T(1,128)}', space=vmem, size = 0x9000, scoped, tag = 'internal scratch']
  %s0 = inlined_call_operand.vmem [shape: bf16[128,128], index: 0, kind: input, shape index: {}]
  %s1 = inlined_call_operand.vmem [shape: f32[128,128], index: 1, kind: input, shape index: {}, may-alias: {1,6}]
  %s2 = inlined_call_operand.vmem [shape: bf16[128,384], index: 2, kind: input, shape index: {}]
  %s3 = inlined_call_operand.vmem [shape: f32[1,384], index: 3, kind: input, shape index: {}]
  %s4 = inlined_call_operand.vmem [shape: bf16[128,128], index: 4, kind: input, shape index: {}]
  %s5 = inlined_call_operand.vmem [shape: f32[1,128], index: 5, kind: input, shape index: {}]
  %s6 = inlined_call_operand.vmem [shape: f32[128,128], index: 6, kind: output, shape index: {}, may-alias: {1,6}]
  %s7 = sld [smem:[#allocation0]]
  $region57: #{qkv_attention_two.1} parent=0
    _
  %s9 = ssub.s32 1, %s7
  %s10 = scalar_select 0, %s9, %s7
  loop: start=0, step=1, limit=4
  $region2: #{qkv_attention_two.1} parent=0 // loop_pre_header
    _
  $region3: #{qkv_attention_two.1} parent=0 // loop_header
    %s12 = sphi 0, %s16
    %p13 = scmp.ge.s32.totalorder %s12, 4
    %s22 = sphi 0, %s24
    %s25 = sphi 0, %s22
    %s26 = sphi 0, %s25
    %s42 = sphi 0, %s26
    %s48 = sphi 0, %s50
    %s51 = sphi 0, %s48
    %s52 = sphi 0, %s51
    %s68 = sphi 0, %s52
    %s72 = sphi 0, %s72
    %s74 = sphi 0, %s72
    %s75 = sphi 0, %s74
    %s89 = sphi 0, %s75
    %s93 = sphi 0, %s93
    %s95 = sphi 0, %s93
    %s96 = sphi 0, %s95
    %s110 = sphi 0, %s96
    %s114 = sphi 0, %s114
    %s116 = sphi 0, %s114
    %s117 = sphi 0, %s116
    %s131 = sphi 0, %s117
    %s135 = sphi 0, %s135
    %s137 = sphi 0, %s135
    %s138 = sphi 0, %s137
    %s152 = sphi 0, %s138
    %s158 = sphi 0, %s160
    %s161 = sphi 0, %s158
    %s162 = sphi 0, %s161
    %s178 = sphi 0, %s162
  $region4: #{qkv_attention_two.1} parent=0 // loop_header_branch
    %15 = sbr.rel (%p13) target = $region8
  $region5: #{qkv_attention_two.1} parent=0 // loop_body
    %s17 = ssub.s32 %s12, 1
    %s18 = ssub.s32 %s12, 2
    %s19 = sadd.s32 %s12, 1
    %s20 = ssub.s32 %s12, %s19
    %p21 = scmp.eq.s32.totalorder %s20, 0
    %s23 = sadd.s32 %s22, 1
    %s24 = scalar_select %p21, %s22, %s23
    %p27 = pneg %p21
    %p28 = scmp.eq.s32.totalorder %s12, 1
    %p29 = por %p27, %p28
    %p30 = scmp.ne.s32.totalorder %s22, %s25
    %p31 = scmp.eq.s32.totalorder %s12, 0
    %p32 = por %p30, %p31
    %p33 = scmp.ne.s32.totalorder %s22, %s25
    %p34 = scmp.eq.s32.totalorder %s17, 1
    %p35 = por %p33, %p34
    %p36 = scmp.ne.s32.totalorder %s25, %s26
    %p37 = scmp.eq.s32.totalorder %s17, 0
    %p38 = por %p36, %p37
    %p39 = scmp.ne.s32.totalorder %s25, %s26
    %p40 = scmp.eq.s32.totalorder %s18, 1
    %p41 = por %p39, %p40
    %p43 = scmp.ne.s32.totalorder %s26, %s42
    %p44 = scmp.eq.s32.totalorder %s18, 0
    %p45 = por %p43, %p44
    %s46 = ssub.s32 %s12, %s19
    %p47 = scmp.eq.s32.totalorder %s46, 0
    %s49 = sadd.s32 %s48, 1
    %s50 = scalar_select %p47, %s48, %s49
    %p53 = pneg %p47
    %p54 = scmp.eq.s32.totalorder %s12, 1
    %p55 = por %p53, %p54
    %p56 = scmp.ne.s32.totalorder %s48, %s51
    %p57 = scmp.eq.s32.totalorder %s12, 0
    %p58 = por %p56, %p57
    %p59 = scmp.ne.s32.totalorder %s48, %s51
    %p60 = scmp.eq.s32.totalorder %s17, 1
    %p61 = por %p59, %p60
    %p62 = scmp.ne.s32.totalorder %s51, %s52
    %p63 = scmp.eq.s32.totalorder %s17, 0
    %p64 = por %p62, %p63
    %p65 = scmp.ne.s32.totalorder %s51, %s52
    %p66 = scmp.eq.s32.totalorder %s18, 1
    %p67 = por %p65, %p66
    %p69 = scmp.ne.s32.totalorder %s52, %s68
    %p70 = scmp.eq.s32.totalorder %s18, 0
    %p71 = por %p69, %p70
    %s73 = sadd.s32 %s72, 1
    %p76 = scmp.eq.s32.totalorder %s12, 1
    %p77 = scmp.ne.s32.totalorder %s72, %s74
    %p78 = scmp.eq.s32.totalorder %s12, 0
    %p79 = por %p77, %p78
    %p80 = scmp.ne.s32.totalorder %s72, %s74
    %p81 = scmp.eq.s32.totalorder %s17, 1
    %p82 = por %p80, %p81
    %p83 = scmp.ne.s32.totalorder %s74, %s75
    %p84 = scmp.eq.s32.totalorder %s17, 0
    %p85 = por %p83, %p84
    %p86 = scmp.ne.s32.totalorder %s74, %s75
    %p87 = scmp.eq.s32.totalorder %s18, 1
    %p88 = por %p86, %p87
    %p90 = scmp.ne.s32.totalorder %s75, %s89
    %p91 = scmp.eq.s32.totalorder %s18, 0
    %p92 = por %p90, %p91
    %s94 = sadd.s32 %s93, 1
    %p97 = scmp.eq.s32.totalorder %s12, 1
    %p98 = scmp.ne.s32.totalorder %s93, %s95
    %p99 = scmp.eq.s32.totalorder %s12, 0
    %p100 = por %p98, %p99
    %p101 = scmp.ne.s32.totalorder %s93, %s95
    %p102 = scmp.eq.s32.totalorder %s17, 1
    %p103 = por %p101, %p102
    %p104 = scmp.ne.s32.totalorder %s95, %s96
    %p105 = scmp.eq.s32.totalorder %s17, 0
    %p106 = por %p104, %p105
    %p107 = scmp.ne.s32.totalorder %s95, %s96
    %p108 = scmp.eq.s32.totalorder %s18, 1
    %p109 = por %p107, %p108
    %p111 = scmp.ne.s32.totalorder %s96, %s110
    %p112 = scmp.eq.s32.totalorder %s18, 0
    %p113 = por %p111, %p112
    %s115 = sadd.s32 %s114, 1
    %p118 = scmp.eq.s32.totalorder %s12, 1
    %p119 = scmp.ne.s32.totalorder %s114, %s116
    %p120 = scmp.eq.s32.totalorder %s12, 0
    %p121 = por %p119, %p120
    %p122 = scmp.ne.s32.totalorder %s114, %s116
    %p123 = scmp.eq.s32.totalorder %s17, 1
    %p124 = por %p122, %p123
    %p125 = scmp.ne.s32.totalorder %s116, %s117
    %p126 = scmp.eq.s32.totalorder %s17, 0
    %p127 = por %p125, %p126
    %p128 = scmp.ne.s32.totalorder %s116, %s117
    %p129 = scmp.eq.s32.totalorder %s18, 1
    %p130 = por %p128, %p129
    %p132 = scmp.ne.s32.totalorder %s117, %s131
    %p133 = scmp.eq.s32.totalorder %s18, 0
    %p134 = por %p132, %p133
    %s136 = sadd.s32 %s135, 1
    %p139 = scmp.eq.s32.totalorder %s12, 1
    %p140 = scmp.ne.s32.totalorder %s135, %s137
    %p141 = scmp.eq.s32.totalorder %s12, 0
    %p142 = por %p140, %p141
    %p143 = scmp.ne.s32.totalorder %s135, %s137
    %p144 = scmp.eq.s32.totalorder %s17, 1
    %p145 = por %p143, %p144
    %p146 = scmp.ne.s32.totalorder %s137, %s138
    %p147 = scmp.eq.s32.totalorder %s17, 0
    %p148 = por %p146, %p147
    %p149 = scmp.ne.s32.totalorder %s137, %s138
    %p150 = scmp.eq.s32.totalorder %s18, 1
    %p151 = por %p149, %p150
    %p153 = scmp.ne.s32.totalorder %s138, %s152
    %p154 = scmp.eq.s32.totalorder %s18, 0
    %p155 = por %p153, %p154
    %s156 = ssub.s32 %s12, %s19
    %p157 = scmp.eq.s32.totalorder %s156, 0
    %s159 = sadd.s32 %s158, 1
    %s160 = scalar_select %p157, %s158, %s159
    %p163 = pneg %p157
    %p164 = scmp.eq.s32.totalorder %s12, 1
    %p165 = por %p163, %p164
    %p166 = scmp.ne.s32.totalorder %s158, %s161
    %p167 = scmp.eq.s32.totalorder %s12, 0
    %p168 = por %p166, %p167
    %p169 = scmp.ne.s32.totalorder %s158, %s161
    %p170 = scmp.eq.s32.totalorder %s17, 1
    %p171 = por %p169, %p170
    %p172 = scmp.ne.s32.totalorder %s161, %s162
    %p173 = scmp.eq.s32.totalorder %s17, 0
    %p174 = por %p172, %p173
    %p175 = scmp.ne.s32.totalorder %s161, %s162
    %p176 = scmp.eq.s32.totalorder %s18, 1
    %p177 = por %p175, %p176
    %p179 = scmp.ne.s32.totalorder %s162, %s178
    %p180 = scmp.eq.s32.totalorder %s18, 0
    %p181 = por %p179, %p180
    %p182 = scmp.le.s32.totalorder 1, %s12
    %p183 = scmp.lt.s32.totalorder %s12, 3
    %p184 = pnand %p182, %p183
    %p185 = pneg %p184
    // Predicated region
    $region9: #{qkv_attention_two.1} parent=5 // pred_check
      _
    $region10: #{qkv_attention_two.1} parent=5 // pred_check_branch
      %187 = sbr.rel (%p184) target = $region12
    $region11: #{qkv_attention_two.1} parent=5 // pred_region
      %s188 = ssub.s32 %s12, 1
      // Predicated region
      $region13: #{qkv_attention_two.1} parent=11 // pred_check
        %p189 = pneg %p85
      $region14: #{qkv_attention_two.1} parent=11 // pred_check_branch
        %191 = sbr.rel (%p189) target = $region16
      $region15: #{qkv_attention_two.1} parent=11 // pred_region
        _
      $region16: #{qkv_attention_two.1} parent=11 // pred_fallthru
        _
      // Predicated region
      $region17: #{qkv_attention_two.1} parent=11 // pred_check
        %p192 = pneg %p106
      $region18: #{qkv_attention_two.1} parent=11 // pred_check_branch
        %194 = sbr.rel (%p192) target = $region20
      $region19: #{qkv_attention_two.1} parent=11 // pred_region
        _
      $region20: #{qkv_attention_two.1} parent=11 // pred_fallthru
        _
      // Predicated region
      $region21: #{qkv_attention_two.1} parent=11 // pred_check
        %p195 = pneg %p127
      $region22: #{qkv_attention_two.1} parent=11 // pred_check_branch
        %197 = sbr.rel (%p195) target = $region24
      $region23: #{qkv_attention_two.1} parent=11 // pred_region
        _
      $region24: #{qkv_attention_two.1} parent=11 // pred_fallthru
        _
      // Predicated region
      $region25: #{qkv_attention_two.1} parent=11 // pred_check
        %p198 = pneg %p148
      $region26: #{qkv_attention_two.1} parent=11 // pred_check_branch
        %200 = sbr.rel (%p198) target = $region28
      $region27: #{qkv_attention_two.1} parent=11 // pred_region
        _
      $region28: #{qkv_attention_two.1} parent=11 // pred_fallthru
        _
    $region12: #{qkv_attention_two.1} parent=5 // pred_fallthru
      _
    %p201 = scmp.lt.s32.totalorder %s12, 2
    // Predicated region
    $region29: #{qkv_attention_two.1} parent=5 // pred_check
      %p202 = pneg %p201
    $region30: #{qkv_attention_two.1} parent=5 // pred_check_branch
      %204 = sbr.rel (%p202) target = $region32
    $region31: #{qkv_attention_two.1} parent=5 // pred_region
      // Predicated region
      $region33: #{qkv_attention_two.1} parent=31 // pred_check
        %p205 = pneg %p32
      $region34: #{qkv_attention_two.1} parent=31 // pred_check_branch
        %207 = sbr.rel (%p205) target = $region36
      $region35: #{qkv_attention_two.1} parent=31 // pred_region
        %s208 = smul.u32 8, %s12
        %p209 = scmp.lt.s32.totalorder %s208, 15
        %s210 = scalar_select %p209, %s208, 15
        %s211 = smul.addr %s210, 4
        %s212 = scalar_lea.vmem %s0, %s211
        %s213 = smul.u32 8, %s12
      $region36: #{qkv_attention_two.1} parent=31 // pred_fallthru
        _
      // Predicated region
      $region37: #{qkv_attention_two.1} parent=31 // pred_check
        %p214 = pneg %p58
      $region38: #{qkv_attention_two.1} parent=31 // pred_check_branch
        %216 = sbr.rel (%p214) target = $region40
      $region39: #{qkv_attention_two.1} parent=31 // pred_region
        %s217 = smul.u32 8, %s12
        %p218 = scmp.lt.s32.totalorder %s217, 15
        %s219 = scalar_select %p218, %s217, 15
        %s220 = smul.addr %s219, 8
        %s221 = scalar_lea.vmem %s1, %s220
        %s222 = smul.u32 8, %s12
      $region40: #{qkv_attention_two.1} parent=31 // pred_fallthru
        _
    $region32: #{qkv_attention_two.1} parent=5 // pred_fallthru
      _
    %p223 = scmp.le.s32.totalorder 1, %s12
    %p224 = scmp.lt.s32.totalorder %s12, 3
    %p225 = pnand %p223, %p224
    %p226 = pneg %p225
    // Predicated region
    $region41: #{qkv_attention_two.1} parent=5 // pred_check
      _
    $region42: #{qkv_attention_two.1} parent=5 // pred_check_branch
      %228 = sbr.rel (%p225) target = $region44
    $region43: #{qkv_attention_two.1} parent=5 // pred_region
      %s229 = ssub.s32 %s12, 1
      %s230 = smul.u32 8, %s17
      %p231 = scmp.lt.s32.totalorder %s230, 15
      %s232 = scalar_select %p231, %s230, 15
      %s233 = smul.addr %s232, 4
      %s234 = scalar_lea.vmem %s0, %s233
      %p235 = pneg %p38
      %p236 = pneg %p35
      %s237 = smul.u32 8, %s17
      %p238 = scmp.lt.s32.totalorder %s237, 15
      %s239 = scalar_select %p238, %s237, 15
      %s240 = smul.addr %s239, 8
      %s241 = scalar_lea.vmem %s1, %s240
      %p242 = pneg %p64
      %p243 = pneg %p61
      %p244 = pneg %p85
      %p245 = pneg %p82
      %p246 = pneg %p106
      %p247 = pneg %p103
      %p248 = pneg %p127
      %p249 = pneg %p124
      %p250 = pneg %p148
      %p251 = pneg %p145
      %p252 = pneg %p174
      %p253 = pneg %p171
      %s254 = smul.u32 8, %s17
      %p255 = scmp.lt.s32.totalorder %s254, 15
      %s256 = scalar_select %p255, %s254, 15
      %s257 = smul.addr %s256, 8
      %s258 = scalar_lea.vmem %s6, %s257
      %s259 = smul.u32 8, %s17
      %p260 = scmp.lt.s32.totalorder %s259, 15
      %s261 = scalar_select %p260, %s259, 15
      %s262 = smul.addr %s261, 4
      %s263 = scalar_lea.vmem %s0, %s262
      %s264 = smul.u32 8, %s17
      %s265 = smul.u32 8, %s17
      %p266 = scmp.lt.s32.totalorder %s265, 15
      %s267 = scalar_select %p266, %s265, 15
      %s268 = smul.addr %s267, 8
      %s269 = scalar_lea.vmem %s1, %s268
      %s270 = smul.u32 8, %s17
      %s271 = smul.u32 8, %s17
      %p272 = scmp.lt.s32.totalorder %s271, 15
      %s273 = scalar_select %p272, %s271, 15
      %s274 = smul.addr %s273, 8
      %s275 = scalar_lea.vmem %s6, %s274
      %s276 = smul.u32 8, %s17
      %v278 = vld [vmem:[%s263] sm:$0xf]
      %v279 = vld [vmem:[%s263 + $0x4] sm:$0xf]
      %v280 = vld [vmem:[%s263 + $0x8] sm:$0xf]
      %v281 = vld [vmem:[%s263 + $0xc] sm:$0xf]
      %v282 = vld [vmem:[%s263 + $0x10] sm:$0xf]
      %v283 = vld [vmem:[%s263 + $0x14] sm:$0xf]
      %v284 = vld [vmem:[%s263 + $0x18] sm:$0xf]
      %v285 = vld [vmem:[%s263 + $0x1c] sm:$0xf]
      %v286 = vld [vmem:[%s2] sm:$0xff]
      %v287 = vld [vmem:[%s2 + $0x8] sm:$0xf]
      %v288 = vld [vmem:[%s2 + $0xc] sm:$0xff]
      %v289 = vld [vmem:[%s2 + $0x14] sm:$0xf]
      %v290 = vld [vmem:[%s2 + $0x18] sm:$0xff]
      %v291 = vld [vmem:[%s2 + $0x20] sm:$0xf]
      %v292 = vld [vmem:[%s2 + $0x24] sm:$0xff]
      %v293 = vld [vmem:[%s2 + $0x2c] sm:$0xf]
      %v294 = vld [vmem:[%s2 + $0x30] sm:$0xff]
      %v295 = vld [vmem:[%s2 + $0x38] sm:$0xf]
      %v296 = vld [vmem:[%s2 + $0x3c] sm:$0xff]
      %v297 = vld [vmem:[%s2 + $0x44] sm:$0xf]
      %v298 = vld [vmem:[%s2 + $0x48] sm:$0xff]
      %v299 = vld [vmem:[%s2 + $0x50] sm:$0xf]
      %v300 = vld [vmem:[%s2 + $0x54] sm:$0xff]
      %v301 = vld [vmem:[%s2 + $0x5c] sm:$0xf]
      %v302 = vld [vmem:[%s2 + $0x60] sm:$0xff]
      %v303 = vld [vmem:[%s2 + $0x68] sm:$0xf]
      %v304 = vld [vmem:[%s2 + $0x6c] sm:$0xff]
      %v305 = vld [vmem:[%s2 + $0x74] sm:$0xf]
      %v306 = vld [vmem:[%s2 + $0x78] sm:$0xff]
      %v307 = vld [vmem:[%s2 + $0x80] sm:$0xf]
      %v308 = vld [vmem:[%s2 + $0x84] sm:$0xff]
      %v309 = vld [vmem:[%s2 + $0x8c] sm:$0xf]
      %v310 = vld [vmem:[%s2 + $0x90] sm:$0xff]
      %v311 = vld [vmem:[%s2 + $0x98] sm:$0xf]
      %v312 = vld [vmem:[%s2 + $0x9c] sm:$0xff]
      %v313 = vld [vmem:[%s2 + $0xa4] sm:$0xf]
      %v314 = vld [vmem:[%s2 + $0xa8] sm:$0xff]
      %v315 = vld [vmem:[%s2 + $0xb0] sm:$0xf]
      %v316 = vld [vmem:[%s2 + $0xb4] sm:$0xff]
      %v317 = vld [vmem:[%s2 + $0xbc] sm:$0xf]
      %v318 = vld [vmem:[%s3] sm:$0x7]
      %v320 = vperm.slane %v318, 0
      %v321 = vperm.slane %v318, 1
      %v322 = vperm.slane %v318, 2
      %v334 = vunpack.c.l.b16 %v278
      %v335 = vunpack.c.l.b16 %v279
      %v336 = vunpack.c.l.b16 %v280
      %v337 = vunpack.c.l.b16 %v281
      %v338 = vunpack.c.l.b16 %v282
      %v339 = vunpack.c.l.b16 %v283
      %v340 = vunpack.c.l.b16 %v284
      %v341 = vunpack.c.l.b16 %v285
      %v342 = vpack.c.b16 %v335, %v334
      %v343 = vpack.c.b16 %v337, %v336
      %v344 = vpack.c.b16 %v339, %v338
      %v345 = vpack.c.b16 %v341, %v340
      %v382 = vunpack.c.l.b16 %v286
      %v383 = vunpack.c.h.b16 %v286
      %v384 = vunpack.c.l.b16 %v287
      %v385 = vunpack.c.l.b16 %v288
      %v386 = vunpack.c.h.b16 %v288
      %v387 = vunpack.c.l.b16 %v289
      %v388 = vunpack.c.l.b16 %v290
      %v389 = vunpack.c.h.b16 %v290
      %v390 = vunpack.c.l.b16 %v291
      %v391 = vunpack.c.l.b16 %v292
      %v392 = vunpack.c.h.b16 %v292
      %v393 = vunpack.c.l.b16 %v293
      %v394 = vunpack.c.l.b16 %v294
      %v395 = vunpack.c.h.b16 %v294
      %v396 = vunpack.c.l.b16 %v295
      %v397 = vunpack.c.l.b16 %v296
      %v398 = vunpack.c.h.b16 %v296
      %v399 = vunpack.c.l.b16 %v297
      %v400 = vunpack.c.l.b16 %v298
      %v401 = vunpack.c.h.b16 %v298
      %v402 = vunpack.c.l.b16 %v299
      %v403 = vunpack.c.l.b16 %v300
      %v404 = vunpack.c.h.b16 %v300
      %v405 = vunpack.c.l.b16 %v301
      %v406 = vunpack.c.l.b16 %v302
      %v407 = vunpack.c.h.b16 %v302
      %v408 = vunpack.c.l.b16 %v303
      %v409 = vunpack.c.l.b16 %v304
      %v410 = vunpack.c.h.b16 %v304
      %v411 = vunpack.c.l.b16 %v305
      %v412 = vunpack.c.l.b16 %v306
      %v413 = vunpack.c.h.b16 %v306
      %v414 = vunpack.c.l.b16 %v307
      %v415 = vunpack.c.l.b16 %v308
      %v416 = vunpack.c.h.b16 %v308
      %v417 = vunpack.c.l.b16 %v309
      %v418 = vunpack.c.l.b16 %v310
      %v419 = vunpack.c.h.b16 %v310
      %v420 = vunpack.c.l.b16 %v311
      %v421 = vunpack.c.l.b16 %v312
      %v422 = vunpack.c.h.b16 %v312
      %v423 = vunpack.c.l.b16 %v313
      %v424 = vunpack.c.l.b16 %v314
      %v425 = vunpack.c.h.b16 %v314
      %v426 = vunpack.c.l.b16 %v315
      %v427 = vunpack.c.l.b16 %v316
      %v428 = vunpack.c.h.b16 %v316
      %v429 = vunpack.c.l.b16 %v317
      %v430 = vpack.c.b16 %v385, %v382
      %v431 = vpack.c.b16 %v386, %v383
      %v432 = vpack.c.b16 %v387, %v384
      %v433 = vpack.c.b16 %v391, %v388
      %v434 = vpack.c.b16 %v392, %v389
      %v435 = vpack.c.b16 %v393, %v390
      %v436 = vpack.c.b16 %v397, %v394
      %v437 = vpack.c.b16 %v398, %v395
      %v438 = vpack.c.b16 %v399, %v396
      %v439 = vpack.c.b16 %v403, %v400
      %v440 = vpack.c.b16 %v404, %v401
      %v441 = vpack.c.b16 %v405, %v402
      %v442 = vpack.c.b16 %v409, %v406
      %v443 = vpack.c.b16 %v410, %v407
      %v444 = vpack.c.b16 %v411, %v408
      %v445 = vpack.c.b16 %v415, %v412
      %v446 = vpack.c.b16 %v416, %v413
      %v447 = vpack.c.b16 %v417, %v414
      %v448 = vpack.c.b16 %v421, %v418
      %v449 = vpack.c.b16 %v422, %v419
      %v450 = vpack.c.b16 %v423, %v420
      %v451 = vpack.c.b16 %v427, %v424
      %v452 = vpack.c.b16 %v428, %v425
      %v453 = vpack.c.b16 %v429, %v426
      %478 = vmatpush.bf16.msra.mxu0 %v451
      %479 = vmatpush.bf16.msra.mxu0 %v448
      %480 = vmatpush.bf16.msra.mxu0 %v445
      %481 = vmatpush.bf16.msra.mxu0 %v442
      %482 = vmatpush.bf16.msra.mxu0 %v439
      %483 = vmatpush.bf16.msra.mxu0 %v436
      %484 = vmatpush.bf16.msra.mxu0 %v433
      %485 = vmatpush.bf16.msra.mxu0 %v430
      %486 = vmatmul.bf16.gmra.mxu0 %v342
      %v487 = vpop.f32.mrf.mxu0
      %v488 = vadd.f32 %v320, %v487
      %v489 = vpop.f32.mrf.mxu0
      %v490 = vadd.f32 %v320, %v489
      %491 = vmatmul.bf16.gmra.mxu0 %v343
      %v492 = vpop.f32.mrf.mxu0
      %v493 = vadd.f32 %v320, %v492
      %v494 = vpop.f32.mrf.mxu0
      %v495 = vadd.f32 %v320, %v494
      %496 = vmatmul.bf16.gmra.mxu0 %v344
      %v497 = vpop.f32.mrf.mxu0
      %v498 = vadd.f32 %v320, %v497
      %v499 = vpop.f32.mrf.mxu0
      %v500 = vadd.f32 %v320, %v499
      %501 = vmatmul.bf16.gmra.mxu0 %v345
      %v502 = vpop.f32.mrf.mxu0
      %v503 = vadd.f32 %v320, %v502
      %v504 = vpop.f32.mrf.mxu0
      %v505 = vadd.f32 %v320, %v504
      %506 = vdwg.mxu0
      %507 = vmatpush.bf16.msra.mxu0 %v452
      %508 = vmatpush.bf16.msra.mxu0 %v449
      %509 = vmatpush.bf16.msra.mxu0 %v446
      %510 = vmatpush.bf16.msra.mxu0 %v443
      %511 = vmatpush.bf16.msra.mxu0 %v440
      %512 = vmatpush.bf16.msra.mxu0 %v437
      %513 = vmatpush.bf16.msra.mxu0 %v434
      %514 = vmatpush.bf16.msra.mxu0 %v431
      %515 = vmatmul.bf16.gmra.mxu0 %v342
      %v516 = vpop.f32.mrf.mxu0
      %v517 = vadd.f32 %v321, %v516
      %v518 = vpop.f32.mrf.mxu0
      %v519 = vadd.f32 %v321, %v518
      %520 = vmatmul.bf16.gmra.mxu0 %v343
      %v521 = vpop.f32.mrf.mxu0
      %v522 = vadd.f32 %v321, %v521
      %v523 = vpop.f32.mrf.mxu0
      %v524 = vadd.f32 %v321, %v523
      %525 = vmatmul.bf16.gmra.mxu0 %v344
      %v526 = vpop.f32.mrf.mxu0
      %v527 = vadd.f32 %v321, %v526
      %v528 = vpop.f32.mrf.mxu0
      %v529 = vadd.f32 %v321, %v528
      %530 = vmatmul.bf16.gmra.mxu0 %v345
      %v531 = vpop.f32.mrf.mxu0
      %v532 = vadd.f32 %v321, %v531
      %v533 = vpop.f32.mrf.mxu0
      %v534 = vadd.f32 %v321, %v533
      %535 = vdwg.mxu0
      %536 = vmatpush.bf16.msra.mxu0 %v453
      %537 = vmatpush.bf16.msra.mxu0 %v450
      %538 = vmatpush.bf16.msra.mxu0 %v447
      %539 = vmatpush.bf16.msra.mxu0 %v444
      %540 = vmatpush.bf16.msra.mxu0 %v441
      %541 = vmatpush.bf16.msra.mxu0 %v438
      %542 = vmatpush.bf16.msra.mxu0 %v435
      %543 = vmatpush.bf16.msra.mxu0 %v432
      %544 = vmatmul.bf16.gmra.mxu0 %v342
      %v545 = vpop.f32.mrf.mxu0
      %v546 = vadd.f32 %v322, %v545
      %v547 = vpop.f32.mrf.mxu0
      %v548 = vadd.f32 %v322, %v547
      %549 = vmatmul.bf16.gmra.mxu0 %v343
      %v550 = vpop.f32.mrf.mxu0
      %v551 = vadd.f32 %v322, %v550
      %v552 = vpop.f32.mrf.mxu0
      %v553 = vadd.f32 %v322, %v552
      %554 = vmatmul.bf16.gmra.mxu0 %v344
      %v555 = vpop.f32.mrf.mxu0
      %v556 = vadd.f32 %v322, %v555
      %v557 = vpop.f32.mrf.mxu0
      %v558 = vadd.f32 %v322, %v557
      %559 = vmatmul.bf16.gmra.mxu0 %v345
      %v560 = vpop.f32.mrf.mxu0
      %v561 = vadd.f32 %v322, %v560
      %v562 = vpop.f32.mrf.mxu0
      %v563 = vadd.f32 %v322, %v562
      %564 = vdwg.mxu0
      %573 = vrot.lane.b32.xlu0 %v488, 96
      %v574 = vpop.permute.xlu0 %573
      %575 = vrot.lane.b32.xlu0 %v490, 96
      %v576 = vpop.permute.xlu0 %575
      %577 = vrot.lane.b32.xlu0 %v493, 96
      %v578 = vpop.permute.xlu0 %577
      %579 = vrot.lane.b32.xlu0 %v495, 96
      %v580 = vpop.permute.xlu0 %579
      %581 = vrot.lane.b32.xlu0 %v498, 96
      %v582 = vpop.permute.xlu0 %581
      %583 = vrot.lane.b32.xlu0 %v500, 96
      %v584 = vpop.permute.xlu0 %583
      %585 = vrot.lane.b32.xlu0 %v503, 96
      %v586 = vpop.permute.xlu0 %585
      %587 = vrot.lane.b32.xlu0 %v505, 96
      %v588 = vpop.permute.xlu0 %587
      %597 = vrot.lane.b32.xlu0 %v488, 64
      %v598 = vpop.permute.xlu0 %597
      %599 = vrot.lane.b32.xlu0 %v490, 64
      %v600 = vpop.permute.xlu0 %599
      %601 = vrot.lane.b32.xlu0 %v493, 64
      %v602 = vpop.permute.xlu0 %601
      %603 = vrot.lane.b32.xlu0 %v495, 64
      %v604 = vpop.permute.xlu0 %603
      %605 = vrot.lane.b32.xlu0 %v498, 64
      %v606 = vpop.permute.xlu0 %605
      %607 = vrot.lane.b32.xlu0 %v500, 64
      %v608 = vpop.permute.xlu0 %607
      %609 = vrot.lane.b32.xlu0 %v503, 64
      %v610 = vpop.permute.xlu0 %609
      %611 = vrot.lane.b32.xlu0 %v505, 64
      %v612 = vpop.permute.xlu0 %611
      %621 = vrot.lane.b32.xlu0 %v488, 32
      %v622 = vpop.permute.xlu0 %621
      %623 = vrot.lane.b32.xlu0 %v490, 32
      %v624 = vpop.permute.xlu0 %623
      %625 = vrot.lane.b32.xlu0 %v493, 32
      %v626 = vpop.permute.xlu0 %625
      %627 = vrot.lane.b32.xlu0 %v495, 32
      %v628 = vpop.permute.xlu0 %627
      %629 = vrot.lane.b32.xlu0 %v498, 32
      %v630 = vpop.permute.xlu0 %629
      %631 = vrot.lane.b32.xlu0 %v500, 32
      %v632 = vpop.permute.xlu0 %631
      %633 = vrot.lane.b32.xlu0 %v503, 32
      %v634 = vpop.permute.xlu0 %633
      %635 = vrot.lane.b32.xlu0 %v505, 32
      %v636 = vpop.permute.xlu0 %635
      %653 = vrot.lane.b32.xlu0 %v517, 96
      %v654 = vpop.permute.xlu0 %653
      %655 = vrot.lane.b32.xlu0 %v519, 96
      %v656 = vpop.permute.xlu0 %655
      %657 = vrot.lane.b32.xlu0 %v522, 96
      %v658 = vpop.permute.xlu0 %657
      %659 = vrot.lane.b32.xlu0 %v524, 96
      %v660 = vpop.permute.xlu0 %659
      %661 = vrot.lane.b32.xlu0 %v527, 96
      %v662 = vpop.permute.xlu0 %661
      %663 = vrot.lane.b32.xlu0 %v529, 96
      %v664 = vpop.permute.xlu0 %663
      %665 = vrot.lane.b32.xlu0 %v532, 96
      %v666 = vpop.permute.xlu0 %665
      %667 = vrot.lane.b32.xlu0 %v534, 96
      %v668 = vpop.permute.xlu0 %667
      %677 = vrot.lane.b32.xlu0 %v517, 64
      %v678 = vpop.permute.xlu0 %677
      %679 = vrot.lane.b32.xlu0 %v519, 64
      %v680 = vpop.permute.xlu0 %679
      %681 = vrot.lane.b32.xlu0 %v522, 64
      %v682 = vpop.permute.xlu0 %681
      %683 = vrot.lane.b32.xlu0 %v524, 64
      %v684 = vpop.permute.xlu0 %683
      %685 = vrot.lane.b32.xlu0 %v527, 64
      %v686 = vpop.permute.xlu0 %685
      %687 = vrot.lane.b32.xlu0 %v529, 64
      %v688 = vpop.permute.xlu0 %687
      %689 = vrot.lane.b32.xlu0 %v532, 64
      %v690 = vpop.permute.xlu0 %689
      %691 = vrot.lane.b32.xlu0 %v534, 64
      %v692 = vpop.permute.xlu0 %691
      %701 = vrot.lane.b32.xlu0 %v517, 32
      %v702 = vpop.permute.xlu0 %701
      %703 = vrot.lane.b32.xlu0 %v519, 32
      %v704 = vpop.permute.xlu0 %703
      %705 = vrot.lane.b32.xlu0 %v522, 32
      %v706 = vpop.permute.xlu0 %705
      %707 = vrot.lane.b32.xlu0 %v524, 32
      %v708 = vpop.permute.xlu0 %707
      %709 = vrot.lane.b32.xlu0 %v527, 32
      %v710 = vpop.permute.xlu0 %709
      %711 = vrot.lane.b32.xlu0 %v529, 32
      %v712 = vpop.permute.xlu0 %711
      %713 = vrot.lane.b32.xlu0 %v532, 32
      %v714 = vpop.permute.xlu0 %713
      %715 = vrot.lane.b32.xlu0 %v534, 32
      %v716 = vpop.permute.xlu0 %715
      %733 = vrot.lane.b32.xlu0 %v546, 96
      %v734 = vpop.permute.xlu0 %733
      %735 = vrot.lane.b32.xlu0 %v548, 96
      %v736 = vpop.permute.xlu0 %735
      %737 = vrot.lane.b32.xlu0 %v551, 96
      %v738 = vpop.permute.xlu0 %737
      %739 = vrot.lane.b32.xlu0 %v553, 96
      %v740 = vpop.permute.xlu0 %739
      %741 = vrot.lane.b32.xlu0 %v556, 96
      %v742 = vpop.permute.xlu0 %741
      %743 = vrot.lane.b32.xlu0 %v558, 96
      %v744 = vpop.permute.xlu0 %743
      %745 = vrot.lane.b32.xlu0 %v561, 96
      %v746 = vpop.permute.xlu0 %745
      %747 = vrot.lane.b32.xlu0 %v563, 96
      %v748 = vpop.permute.xlu0 %747
      %757 = vrot.lane.b32.xlu0 %v546, 64
      %v758 = vpop.permute.xlu0 %757
      %759 = vrot.lane.b32.xlu0 %v548, 64
      %v760 = vpop.permute.xlu0 %759
      %761 = vrot.lane.b32.xlu0 %v551, 64
      %v762 = vpop.permute.xlu0 %761
      %763 = vrot.lane.b32.xlu0 %v553, 64
      %v764 = vpop.permute.xlu0 %763
      %765 = vrot.lane.b32.xlu0 %v556, 64
      %v766 = vpop.permute.xlu0 %765
      %767 = vrot.lane.b32.xlu0 %v558, 64
      %v768 = vpop.permute.xlu0 %767
      %769 = vrot.lane.b32.xlu0 %v561, 64
      %v770 = vpop.permute.xlu0 %769
      %771 = vrot.lane.b32.xlu0 %v563, 64
      %v772 = vpop.permute.xlu0 %771
      %781 = vrot.lane.b32.xlu0 %v546, 32
      %v782 = vpop.permute.xlu0 %781
      %783 = vrot.lane.b32.xlu0 %v548, 32
      %v784 = vpop.permute.xlu0 %783
      %785 = vrot.lane.b32.xlu0 %v551, 32
      %v786 = vpop.permute.xlu0 %785
      %787 = vrot.lane.b32.xlu0 %v553, 32
      %v788 = vpop.permute.xlu0 %787
      %789 = vrot.lane.b32.xlu0 %v556, 32
      %v790 = vpop.permute.xlu0 %789
      %791 = vrot.lane.b32.xlu0 %v558, 32
      %v792 = vpop.permute.xlu0 %791
      %793 = vrot.lane.b32.xlu0 %v561, 32
      %v794 = vpop.permute.xlu0 %793
      %795 = vrot.lane.b32.xlu0 %v563, 32
      %v796 = vpop.permute.xlu0 %795
      %v805 = vrot.slane %v598, 4
      %vm806 = vcmask 1047556
      %v807 = vsel %vm806, %v805, %v488
      %v808 = vrot.slane %v488, 4
      %v809 = vsel %vm806, %v598, %v808
      %v811 = vunpack.c.l.s4 1983009808
      %v812 = vunpack.c.0.s8 %v811
      %v813 = vperm.slane %v807, %v812
      %v815 = vunpack.c.l.s4 1983009808
      %v816 = vunpack.c.0.s8 %v815
      %v817 = vperm.slane %v809, %v816
      %v818 = vrot.slane %v622, 4
      %v819 = vsel %vm806, %v818, %v574
      %v820 = vrot.slane %v574, 4
      %v821 = vsel %vm806, %v622, %v820
      %v823 = vunpack.c.l.s4 1983009808
      %v824 = vunpack.c.0.s8 %v823
      %v825 = vperm.slane %v819, %v824
      %v827 = vunpack.c.l.s4 1983009808
      %v828 = vunpack.c.0.s8 %v827
      %v829 = vperm.slane %v821, %v828
      %v830 = vrot.slane %v678, 4
      %v831 = vsel %vm806, %v830, %v517
      %v832 = vrot.slane %v517, 4
      %v833 = vsel %vm806, %v678, %v832
      %v835 = vunpack.c.l.s4 1983009808
      %v836 = vunpack.c.0.s8 %v835
      %v837 = vperm.slane %v831, %v836
      %v839 = vunpack.c.l.s4 1983009808
      %v840 = vunpack.c.0.s8 %v839
      %v841 = vperm.slane %v833, %v840
      %v842 = vrot.slane %v702, 4
      %v843 = vsel %vm806, %v842, %v654
      %v844 = vrot.slane %v654, 4
      %v845 = vsel %vm806, %v702, %v844
      %v847 = vunpack.c.l.s4 1983009808
      %v848 = vunpack.c.0.s8 %v847
      %v849 = vperm.slane %v843, %v848
      %v851 = vunpack.c.l.s4 1983009808
      %v852 = vunpack.c.0.s8 %v851
      %v853 = vperm.slane %v845, %v852
      %v854 = vrot.slane %v825, 4
      %v855 = vsel %vm806, %v854, %v813
      %v856 = vrot.slane %v813, 4
      %v857 = vsel %vm806, %v825, %v856
      %v859 = vunpack.c.l.s4 1934713408
      %v860 = vunpack.c.0.s8 %v859
      %v861 = vperm.slane %v855, %v860
      %v863 = vunpack.c.l.s4 1934713408
      %v864 = vunpack.c.0.s8 %v863
      %v865 = vperm.slane %v857, %v864
      %v866 = vrot.slane %v829, 4
      %v867 = vsel %vm806, %v866, %v817
      %v868 = vrot.slane %v817, 4
      %v869 = vsel %vm806, %v829, %v868
      %v871 = vunpack.c.l.s4 1934713408
      %v872 = vunpack.c.0.s8 %v871
      %v873 = vperm.slane %v867, %v872
      %v875 = vunpack.c.l.s4 1934713408
      %v876 = vunpack.c.0.s8 %v875
      %v877 = vperm.slane %v869, %v876
      %v878 = vrot.slane %v849, 4
      %v879 = vsel %vm806, %v878, %v837
      %v880 = vrot.slane %v837, 4
      %v881 = vsel %vm806, %v849, %v880
      %v883 = vunpack.c.l.s4 1934713408
      %v884 = vunpack.c.0.s8 %v883
      %v885 = vperm.slane %v879, %v884
      %v887 = vunpack.c.l.s4 1934713408
      %v888 = vunpack.c.0.s8 %v887
      %v889 = vperm.slane %v881, %v888
      %v890 = vrot.slane %v853, 4
      %v891 = vsel %vm806, %v890, %v841
      %v892 = vrot.slane %v841, 4
      %v893 = vsel %vm806, %v853, %v892
      %v895 = vunpack.c.l.s4 1934713408
      %v896 = vunpack.c.0.s8 %v895
      %v897 = vperm.slane %v891, %v896
      %v899 = vunpack.c.l.s4 1934713408
      %v900 = vunpack.c.0.s8 %v899
      %v901 = vperm.slane %v893, %v900
      %v902 = vrot.slane %v885, 4
      %v903 = vsel %vm806, %v902, %v861
      %v904 = vrot.slane %v861, 4
      %v905 = vsel %vm806, %v885, %v904
      %v906 = vrot.slane %v889, 4
      %v907 = vsel %vm806, %v906, %v865
      %v908 = vrot.slane %v865, 4
      %v909 = vsel %vm806, %v889, %v908
      %v910 = vrot.slane %v897, 4
      %v911 = vsel %vm806, %v910, %v873
      %v912 = vrot.slane %v873, 4
      %v913 = vsel %vm806, %v897, %v912
      %v914 = vrot.slane %v901, 4
      %v915 = vsel %vm806, %v914, %v877
      %v916 = vrot.slane %v877, 4
      %v917 = vsel %vm806, %v901, %v916
      %v918 = vrot.slane %v758, 4
      %v919 = vsel %vm806, %v918, %v546
      %v920 = vrot.slane %v546, 4
      %v921 = vsel %vm806, %v758, %v920
      %v923 = vunpack.c.l.s4 1983009808
      %v924 = vunpack.c.0.s8 %v923
      %v925 = vperm.slane %v919, %v924
      %v927 = vunpack.c.l.s4 1983009808
      %v928 = vunpack.c.0.s8 %v927
      %v929 = vperm.slane %v921, %v928
      %v930 = vrot.slane %v782, 4
      %v931 = vsel %vm806, %v930, %v734
      %v932 = vrot.slane %v734, 4
      %v933 = vsel %vm806, %v782, %v932
      %v935 = vunpack.c.l.s4 1983009808
      %v936 = vunpack.c.0.s8 %v935
      %v937 = vperm.slane %v931, %v936
      %v939 = vunpack.c.l.s4 1983009808
      %v940 = vunpack.c.0.s8 %v939
      %v941 = vperm.slane %v933, %v940
      %v942 = vrot.slane %v937, 4
      %v943 = vsel %vm806, %v942, %v925
      %v944 = vrot.slane %v925, 4
      %v945 = vsel %vm806, %v937, %v944
      %v947 = vunpack.c.l.s4 1934713408
      %v948 = vunpack.c.0.s8 %v947
      %v949 = vperm.slane %v943, %v948
      %v951 = vunpack.c.l.s4 1934713408
      %v952 = vunpack.c.0.s8 %v951
      %v953 = vperm.slane %v945, %v952
      %v954 = vrot.slane %v941, 4
      %v955 = vsel %vm806, %v954, %v929
      %v956 = vrot.slane %v929, 4
      %v957 = vsel %vm806, %v941, %v956
      %v959 = vunpack.c.l.s4 1934713408
      %v960 = vunpack.c.0.s8 %v959
      %v961 = vperm.slane %v955, %v960
      %v963 = vunpack.c.l.s4 1934713408
      %v964 = vunpack.c.0.s8 %v963
      %v965 = vperm.slane %v957, %v964
      %v966 = vrot.slane %v949, 4
      %v967 = vsel %vm806, 0.0, %v966
      %v968 = vrot.slane %v953, 4
      %v969 = vsel %vm806, 0.0, %v968
      %v970 = vrot.slane %v961, 4
      %v971 = vsel %vm806, 0.0, %v970
      %v972 = vrot.slane %v965, 4
      %v973 = vsel %vm806, 0.0, %v972
      %v974 = vrot.slane %v600, 4
      %v975 = vsel %vm806, %v974, %v490
      %v976 = vrot.slane %v490, 4
      %v977 = vsel %vm806, %v600, %v976
      %v979 = vunpack.c.l.s4 1983009808
      %v980 = vunpack.c.0.s8 %v979
      %v981 = vperm.slane %v975, %v980
      %v983 = vunpack.c.l.s4 1983009808
      %v984 = vunpack.c.0.s8 %v983
      %v985 = vperm.slane %v977, %v984
      %v986 = vrot.slane %v624, 4
      %v987 = vsel %vm806, %v986, %v576
      %v988 = vrot.slane %v576, 4
      %v989 = vsel %vm806, %v624, %v988
      %v991 = vunpack.c.l.s4 1983009808
      %v992 = vunpack.c.0.s8 %v991
      %v993 = vperm.slane %v987, %v992
      %v995 = vunpack.c.l.s4 1983009808
      %v996 = vunpack.c.0.s8 %v995
      %v997 = vperm.slane %v989, %v996
      %v998 = vrot.slane %v680, 4
      %v999 = vsel %vm806, %v998, %v519
      %v1000 = vrot.slane %v519, 4
      %v1001 = vsel %vm806, %v680, %v1000
      %v1003 = vunpack.c.l.s4 1983009808
      %v1004 = vunpack.c.0.s8 %v1003
      %v1005 = vperm.slane %v999, %v1004
      %v1007 = vunpack.c.l.s4 1983009808
      %v1008 = vunpack.c.0.s8 %v1007
      %v1009 = vperm.slane %v1001, %v1008
      %v1010 = vrot.slane %v704, 4
      %v1011 = vsel %vm806, %v1010, %v656
      %v1012 = vrot.slane %v656, 4
      %v1013 = vsel %vm806, %v704, %v1012
      %v1015 = vunpack.c.l.s4 1983009808
      %v1016 = vunpack.c.0.s8 %v1015
      %v1017 = vperm.slane %v1011, %v1016
      %v1019 = vunpack.c.l.s4 1983009808
      %v1020 = vunpack.c.0.s8 %v1019
      %v1021 = vperm.slane %v1013, %v1020
      %v1022 = vrot.slane %v993, 4
      %v1023 = vsel %vm806, %v1022, %v981
      %v1024 = vrot.slane %v981, 4
      %v1025 = vsel %vm806, %v993, %v1024
      %v1027 = vunpack.c.l.s4 1934713408
      %v1028 = vunpack.c.0.s8 %v1027
      %v1029 = vperm.slane %v1023, %v1028
      %v1031 = vunpack.c.l.s4 1934713408
      %v1032 = vunpack.c.0.s8 %v1031
      %v1033 = vperm.slane %v1025, %v1032
      %v1034 = vrot.slane %v997, 4
      %v1035 = vsel %vm806, %v1034, %v985
      %v1036 = vrot.slane %v985, 4
      %v1037 = vsel %vm806, %v997, %v1036
      %v1039 = vunpack.c.l.s4 1934713408
      %v1040 = vunpack.c.0.s8 %v1039
      %v1041 = vperm.slane %v1035, %v1040
      %v1043 = vunpack.c.l.s4 1934713408
      %v1044 = vunpack.c.0.s8 %v1043
      %v1045 = vperm.slane %v1037, %v1044
      %v1046 = vrot.slane %v1017, 4
      %v1047 = vsel %vm806, %v1046, %v1005
      %v1048 = vrot.slane %v1005, 4
      %v1049 = vsel %vm806, %v1017, %v1048
      %v1051 = vunpack.c.l.s4 1934713408
      %v1052 = vunpack.c.0.s8 %v1051
      %v1053 = vperm.slane %v1047, %v1052
      %v1055 = vunpack.c.l.s4 1934713408
      %v1056 = vunpack.c.0.s8 %v1055
      %v1057 = vperm.slane %v1049, %v1056
      %v1058 = vrot.slane %v1021, 4
      %v1059 = vsel %vm806, %v1058, %v1009
      %v1060 = vrot.slane %v1009, 4
      %v1061 = vsel %vm806, %v1021, %v1060
      %v1063 = vunpack.c.l.s4 1934713408
      %v1064 = vunpack.c.0.s8 %v1063
      %v1065 = vperm.slane %v1059, %v1064
      %v1067 = vunpack.c.l.s4 1934713408
      %v1068 = vunpack.c.0.s8 %v1067
      %v1069 = vperm.slane %v1061, %v1068
      %v1070 = vrot.slane %v1053, 4
      %v1071 = vsel %vm806, %v1070, %v1029
      %v1072 = vrot.slane %v1029, 4
      %v1073 = vsel %vm806, %v1053, %v1072
      %v1074 = vrot.slane %v1057, 4
      %v1075 = vsel %vm806, %v1074, %v1033
      %v1076 = vrot.slane %v1033, 4
      %v1077 = vsel %vm806, %v1057, %v1076
      %v1078 = vrot.slane %v1065, 4
      %v1079 = vsel %vm806, %v1078, %v1041
      %v1080 = vrot.slane %v1041, 4
      %v1081 = vsel %vm806, %v1065, %v1080
      %v1082 = vrot.slane %v1069, 4
      %v1083 = vsel %vm806, %v1082, %v1045
      %v1084 = vrot.slane %v1045, 4
      %v1085 = vsel %vm806, %v1069, %v1084
      %v1086 = vrot.slane %v760, 4
      %v1087 = vsel %vm806, %v1086, %v548
      %v1088 = vrot.slane %v548, 4
      %v1089 = vsel %vm806, %v760, %v1088
      %v1091 = vunpack.c.l.s4 1983009808
      %v1092 = vunpack.c.0.s8 %v1091
      %v1093 = vperm.slane %v1087, %v1092
      %v1095 = vunpack.c.l.s4 1983009808
      %v1096 = vunpack.c.0.s8 %v1095
      %v1097 = vperm.slane %v1089, %v1096
      %v1098 = vrot.slane %v784, 4
      %v1099 = vsel %vm806, %v1098, %v736
      %v1100 = vrot.slane %v736, 4
      %v1101 = vsel %vm806, %v784, %v1100
      %v1103 = vunpack.c.l.s4 1983009808
      %v1104 = vunpack.c.0.s8 %v1103
      %v1105 = vperm.slane %v1099, %v1104
      %v1107 = vunpack.c.l.s4 1983009808
      %v1108 = vunpack.c.0.s8 %v1107
      %v1109 = vperm.slane %v1101, %v1108
      %v1110 = vrot.slane %v1105, 4
      %v1111 = vsel %vm806, %v1110, %v1093
      %v1112 = vrot.slane %v1093, 4
      %v1113 = vsel %vm806, %v1105, %v1112
      %v1115 = vunpack.c.l.s4 1934713408
      %v1116 = vunpack.c.0.s8 %v1115
      %v1117 = vperm.slane %v1111, %v1116
      %v1119 = vunpack.c.l.s4 1934713408
      %v1120 = vunpack.c.0.s8 %v1119
      %v1121 = vperm.slane %v1113, %v1120
      %v1122 = vrot.slane %v1109, 4
      %v1123 = vsel %vm806, %v1122, %v1097
      %v1124 = vrot.slane %v1097, 4
      %v1125 = vsel %vm806, %v1109, %v1124
      %v1127 = vunpack.c.l.s4 1934713408
      %v1128 = vunpack.c.0.s8 %v1127
      %v1129 = vperm.slane %v1123, %v1128
      %v1131 = vunpack.c.l.s4 1934713408
      %v1132 = vunpack.c.0.s8 %v1131
      %v1133 = vperm.slane %v1125, %v1132
      %v1134 = vrot.slane %v1117, 4
      %v1135 = vsel %vm806, 0.0, %v1134
      %v1136 = vrot.slane %v1121, 4
      %v1137 = vsel %vm806, 0.0, %v1136
      %v1138 = vrot.slane %v1129, 4
      %v1139 = vsel %vm806, 0.0, %v1138
      %v1140 = vrot.slane %v1133, 4
      %v1141 = vsel %vm806, 0.0, %v1140
      %v1142 = vrot.slane %v602, 4
      %v1143 = vsel %vm806, %v1142, %v493
      %v1144 = vrot.slane %v493, 4
      %v1145 = vsel %vm806, %v602, %v1144
      %v1147 = vunpack.c.l.s4 1983009808
      %v1148 = vunpack.c.0.s8 %v1147
      %v1149 = vperm.slane %v1143, %v1148
      %v1151 = vunpack.c.l.s4 1983009808
      %v1152 = vunpack.c.0.s8 %v1151
      %v1153 = vperm.slane %v1145, %v1152
      %v1154 = vrot.slane %v626, 4
      %v1155 = vsel %vm806, %v1154, %v578
      %v1156 = vrot.slane %v578, 4
      %v1157 = vsel %vm806, %v626, %v1156
      %v1159 = vunpack.c.l.s4 1983009808
      %v1160 = vunpack.c.0.s8 %v1159
      %v1161 = vperm.slane %v1155, %v1160
      %v1163 = vunpack.c.l.s4 1983009808
      %v1164 = vunpack.c.0.s8 %v1163
      %v1165 = vperm.slane %v1157, %v1164
      %v1166 = vrot.slane %v682, 4
      %v1167 = vsel %vm806, %v1166, %v522
      %v1168 = vrot.slane %v522, 4
      %v1169 = vsel %vm806, %v682, %v1168
      %v1171 = vunpack.c.l.s4 1983009808
      %v1172 = vunpack.c.0.s8 %v1171
      %v1173 = vperm.slane %v1167, %v1172
      %v1175 = vunpack.c.l.s4 1983009808
      %v1176 = vunpack.c.0.s8 %v1175
      %v1177 = vperm.slane %v1169, %v1176
      %v1178 = vrot.slane %v706, 4
      %v1179 = vsel %vm806, %v1178, %v658
      %v1180 = vrot.slane %v658, 4
      %v1181 = vsel %vm806, %v706, %v1180
      %v1183 = vunpack.c.l.s4 1983009808
      %v1184 = vunpack.c.0.s8 %v1183
      %v1185 = vperm.slane %v1179, %v1184
      %v1187 = vunpack.c.l.s4 1983009808
      %v1188 = vunpack.c.0.s8 %v1187
      %v1189 = vperm.slane %v1181, %v1188
      %v1190 = vrot.slane %v1161, 4
      %v1191 = vsel %vm806, %v1190, %v1149
      %v1192 = vrot.slane %v1149, 4
      %v1193 = vsel %vm806, %v1161, %v1192
      %v1195 = vunpack.c.l.s4 1934713408
      %v1196 = vunpack.c.0.s8 %v1195
      %v1197 = vperm.slane %v1191, %v1196
      %v1199 = vunpack.c.l.s4 1934713408
      %v1200 = vunpack.c.0.s8 %v1199
      %v1201 = vperm.slane %v1193, %v1200
      %v1202 = vrot.slane %v1165, 4
      %v1203 = vsel %vm806, %v1202, %v1153
      %v1204 = vrot.slane %v1153, 4
      %v1205 = vsel %vm806, %v1165, %v1204
      %v1207 = vunpack.c.l.s4 1934713408
      %v1208 = vunpack.c.0.s8 %v1207
      %v1209 = vperm.slane %v1203, %v1208
      %v1211 = vunpack.c.l.s4 1934713408
      %v1212 = vunpack.c.0.s8 %v1211
      %v1213 = vperm.slane %v1205, %v1212
      %v1214 = vrot.slane %v1185, 4
      %v1215 = vsel %vm806, %v1214, %v1173
      %v1216 = vrot.slane %v1173, 4
      %v1217 = vsel %vm806, %v1185, %v1216
      %v1219 = vunpack.c.l.s4 1934713408
      %v1220 = vunpack.c.0.s8 %v1219
      %v1221 = vperm.slane %v1215, %v1220
      %v1223 = vunpack.c.l.s4 1934713408
      %v1224 = vunpack.c.0.s8 %v1223
      %v1225 = vperm.slane %v1217, %v1224
      %v1226 = vrot.slane %v1189, 4
      %v1227 = vsel %vm806, %v1226, %v1177
      %v1228 = vrot.slane %v1177, 4
      %v1229 = vsel %vm806, %v1189, %v1228
      %v1231 = vunpack.c.l.s4 1934713408
      %v1232 = vunpack.c.0.s8 %v1231
      %v1233 = vperm.slane %v1227, %v1232
      %v1235 = vunpack.c.l.s4 1934713408
      %v1236 = vunpack.c.0.s8 %v1235
      %v1237 = vperm.slane %v1229, %v1236
      %v1238 = vrot.slane %v1221, 4
      %v1239 = vsel %vm806, %v1238, %v1197
      %v1240 = vrot.slane %v1197, 4
      %v1241 = vsel %vm806, %v1221, %v1240
      %v1242 = vrot.slane %v1225, 4
      %v1243 = vsel %vm806, %v1242, %v1201
      %v1244 = vrot.slane %v1201, 4
      %v1245 = vsel %vm806, %v1225, %v1244
      %v1246 = vrot.slane %v1233, 4
      %v1247 = vsel %vm806, %v1246, %v1209
      %v1248 = vrot.slane %v1209, 4
      %v1249 = vsel %vm806, %v1233, %v1248
      %v1250 = vrot.slane %v1237, 4
      %v1251 = vsel %vm806, %v1250, %v1213
      %v1252 = vrot.slane %v1213, 4
      %v1253 = vsel %vm806, %v1237, %v1252
      %v1254 = vrot.slane %v762, 4
      %v1255 = vsel %vm806, %v1254, %v551
      %v1256 = vrot.slane %v551, 4
      %v1257 = vsel %vm806, %v762, %v1256
      %v1259 = vunpack.c.l.s4 1983009808
      %v1260 = vunpack.c.0.s8 %v1259
      %v1261 = vperm.slane %v1255, %v1260
      %v1263 = vunpack.c.l.s4 1983009808
      %v1264 = vunpack.c.0.s8 %v1263
      %v1265 = vperm.slane %v1257, %v1264
      %v1266 = vrot.slane %v786, 4
      %v1267 = vsel %vm806, %v1266, %v738
      %v1268 = vrot.slane %v738, 4
      %v1269 = vsel %vm806, %v786, %v1268
      %v1271 = vunpack.c.l.s4 1983009808
      %v1272 = vunpack.c.0.s8 %v1271
      %v1273 = vperm.slane %v1267, %v1272
      %v1275 = vunpack.c.l.s4 1983009808
      %v1276 = vunpack.c.0.s8 %v1275
      %v1277 = vperm.slane %v1269, %v1276
      %v1278 = vrot.slane %v1273, 4
      %v1279 = vsel %vm806, %v1278, %v1261
      %v1280 = vrot.slane %v1261, 4
      %v1281 = vsel %vm806, %v1273, %v1280
      %v1283 = vunpack.c.l.s4 1934713408
      %v1284 = vunpack.c.0.s8 %v1283
      %v1285 = vperm.slane %v1279, %v1284
      %v1287 = vunpack.c.l.s4 1934713408
      %v1288 = vunpack.c.0.s8 %v1287
      %v1289 = vperm.slane %v1281, %v1288
      %v1290 = vrot.slane %v1277, 4
      %v1291 = vsel %vm806, %v1290, %v1265
      %v1292 = vrot.slane %v1265, 4
      %v1293 = vsel %vm806, %v1277, %v1292
      %v1295 = vunpack.c.l.s4 1934713408
      %v1296 = vunpack.c.0.s8 %v1295
      %v1297 = vperm.slane %v1291, %v1296
      %v1299 = vunpack.c.l.s4 1934713408
      %v1300 = vunpack.c.0.s8 %v1299
      %v1301 = vperm.slane %v1293, %v1300
      %v1302 = vrot.slane %v1285, 4
      %v1303 = vsel %vm806, 0.0, %v1302
      %v1304 = vrot.slane %v1289, 4
      %v1305 = vsel %vm806, 0.0, %v1304
      %v1306 = vrot.slane %v1297, 4
      %v1307 = vsel %vm806, 0.0, %v1306
      %v1308 = vrot.slane %v1301, 4
      %v1309 = vsel %vm806, 0.0, %v1308
      %v1310 = vrot.slane %v604, 4
      %v1311 = vsel %vm806, %v1310, %v495
      %v1312 = vrot.slane %v495, 4
      %v1313 = vsel %vm806, %v604, %v1312
      %v1315 = vunpack.c.l.s4 1983009808
      %v1316 = vunpack.c.0.s8 %v1315
      %v1317 = vperm.slane %v1311, %v1316
      %v1319 = vunpack.c.l.s4 1983009808
      %v1320 = vunpack.c.0.s8 %v1319
      %v1321 = vperm.slane %v1313, %v1320
      %v1322 = vrot.slane %v628, 4
      %v1323 = vsel %vm806, %v1322, %v580
      %v1324 = vrot.slane %v580, 4
      %v1325 = vsel %vm806, %v628, %v1324
      %v1327 = vunpack.c.l.s4 1983009808
      %v1328 = vunpack.c.0.s8 %v1327
      %v1329 = vperm.slane %v1323, %v1328
      %v1331 = vunpack.c.l.s4 1983009808
      %v1332 = vunpack.c.0.s8 %v1331
      %v1333 = vperm.slane %v1325, %v1332
      %v1334 = vrot.slane %v684, 4
      %v1335 = vsel %vm806, %v1334, %v524
      %v1336 = vrot.slane %v524, 4
      %v1337 = vsel %vm806, %v684, %v1336
      %v1339 = vunpack.c.l.s4 1983009808
      %v1340 = vunpack.c.0.s8 %v1339
      %v1341 = vperm.slane %v1335, %v1340
      %v1343 = vunpack.c.l.s4 1983009808
      %v1344 = vunpack.c.0.s8 %v1343
      %v1345 = vperm.slane %v1337, %v1344
      %v1346 = vrot.slane %v708, 4
      %v1347 = vsel %vm806, %v1346, %v660
      %v1348 = vrot.slane %v660, 4
      %v1349 = vsel %vm806, %v708, %v1348
      %v1351 = vunpack.c.l.s4 1983009808
      %v1352 = vunpack.c.0.s8 %v1351
      %v1353 = vperm.slane %v1347, %v1352
      %v1355 = vunpack.c.l.s4 1983009808
      %v1356 = vunpack.c.0.s8 %v1355
      %v1357 = vperm.slane %v1349, %v1356
      %v1358 = vrot.slane %v1329, 4
      %v1359 = vsel %vm806, %v1358, %v1317
      %v1360 = vrot.slane %v1317, 4
      %v1361 = vsel %vm806, %v1329, %v1360
      %v1363 = vunpack.c.l.s4 1934713408
      %v1364 = vunpack.c.0.s8 %v1363
      %v1365 = vperm.slane %v1359, %v1364
      %v1367 = vunpack.c.l.s4 1934713408
      %v1368 = vunpack.c.0.s8 %v1367
      %v1369 = vperm.slane %v1361, %v1368
      %v1370 = vrot.slane %v1333, 4
      %v1371 = vsel %vm806, %v1370, %v1321
      %v1372 = vrot.slane %v1321, 4
      %v1373 = vsel %vm806, %v1333, %v1372
      %v1375 = vunpack.c.l.s4 1934713408
      %v1376 = vunpack.c.0.s8 %v1375
      %v1377 = vperm.slane %v1371, %v1376
      %v1379 = vunpack.c.l.s4 1934713408
      %v1380 = vunpack.c.0.s8 %v1379
      %v1381 = vperm.slane %v1373, %v1380
      %v1382 = vrot.slane %v1353, 4
      %v1383 = vsel %vm806, %v1382, %v1341
      %v1384 = vrot.slane %v1341, 4
      %v1385 = vsel %vm806, %v1353, %v1384
      %v1387 = vunpack.c.l.s4 1934713408
      %v1388 = vunpack.c.0.s8 %v1387
      %v1389 = vperm.slane %v1383, %v1388
      %v1391 = vunpack.c.l.s4 1934713408
      %v1392 = vunpack.c.0.s8 %v1391
      %v1393 = vperm.slane %v1385, %v1392
      %v1394 = vrot.slane %v1357, 4
      %v1395 = vsel %vm806, %v1394, %v1345
      %v1396 = vrot.slane %v1345, 4
      %v1397 = vsel %vm806, %v1357, %v1396
      %v1399 = vunpack.c.l.s4 1934713408
      %v1400 = vunpack.c.0.s8 %v1399
      %v1401 = vperm.slane %v1395, %v1400
      %v1403 = vunpack.c.l.s4 1934713408
      %v1404 = vunpack.c.0.s8 %v1403
      %v1405 = vperm.slane %v1397, %v1404
      %v1406 = vrot.slane %v1389, 4
      %v1407 = vsel %vm806, %v1406, %v1365
      %v1408 = vrot.slane %v1365, 4
      %v1409 = vsel %vm806, %v1389, %v1408
      %v1410 = vrot.slane %v1393, 4
      %v1411 = vsel %vm806, %v1410, %v1369
      %v1412 = vrot.slane %v1369, 4
      %v1413 = vsel %vm806, %v1393, %v1412
      %v1414 = vrot.slane %v1401, 4
      %v1415 = vsel %vm806, %v1414, %v1377
      %v1416 = vrot.slane %v1377, 4
      %v1417 = vsel %vm806, %v1401, %v1416
      %v1418 = vrot.slane %v1405, 4
      %v1419 = vsel %vm806, %v1418, %v1381
      %v1420 = vrot.slane %v1381, 4
      %v1421 = vsel %vm806, %v1405, %v1420
      %v1422 = vrot.slane %v764, 4
      %v1423 = vsel %vm806, %v1422, %v553
      %v1424 = vrot.slane %v553, 4
      %v1425 = vsel %vm806, %v764, %v1424
      %v1427 = vunpack.c.l.s4 1983009808
      %v1428 = vunpack.c.0.s8 %v1427
      %v1429 = vperm.slane %v1423, %v1428
      %v1431 = vunpack.c.l.s4 1983009808
      %v1432 = vunpack.c.0.s8 %v1431
      %v1433 = vperm.slane %v1425, %v1432
      %v1434 = vrot.slane %v788, 4
      %v1435 = vsel %vm806, %v1434, %v740
      %v1436 = vrot.slane %v740, 4
      %v1437 = vsel %vm806, %v788, %v1436
      %v1439 = vunpack.c.l.s4 1983009808
      %v1440 = vunpack.c.0.s8 %v1439
      %v1441 = vperm.slane %v1435, %v1440
      %v1443 = vunpack.c.l.s4 1983009808
      %v1444 = vunpack.c.0.s8 %v1443
      %v1445 = vperm.slane %v1437, %v1444
      %v1446 = vrot.slane %v1441, 4
      %v1447 = vsel %vm806, %v1446, %v1429
      %v1448 = vrot.slane %v1429, 4
      %v1449 = vsel %vm806, %v1441, %v1448
      %v1451 = vunpack.c.l.s4 1934713408
      %v1452 = vunpack.c.0.s8 %v1451
      %v1453 = vperm.slane %v1447, %v1452
      %v1455 = vunpack.c.l.s4 1934713408
      %v1456 = vunpack.c.0.s8 %v1455
      %v1457 = vperm.slane %v1449, %v1456
      %v1458 = vrot.slane %v1445, 4
      %v1459 = vsel %vm806, %v1458, %v1433
      %v1460 = vrot.slane %v1433, 4
      %v1461 = vsel %vm806, %v1445, %v1460
      %v1463 = vunpack.c.l.s4 1934713408
      %v1464 = vunpack.c.0.s8 %v1463
      %v1465 = vperm.slane %v1459, %v1464
      %v1467 = vunpack.c.l.s4 1934713408
      %v1468 = vunpack.c.0.s8 %v1467
      %v1469 = vperm.slane %v1461, %v1468
      %v1470 = vrot.slane %v1453, 4
      %v1471 = vsel %vm806, 0.0, %v1470
      %v1472 = vrot.slane %v1457, 4
      %v1473 = vsel %vm806, 0.0, %v1472
      %v1474 = vrot.slane %v1465, 4
      %v1475 = vsel %vm806, 0.0, %v1474
      %v1476 = vrot.slane %v1469, 4
      %v1477 = vsel %vm806, 0.0, %v1476
      %v1478 = vrot.slane %v606, 4
      %v1479 = vsel %vm806, %v1478, %v498
      %v1480 = vrot.slane %v498, 4
      %v1481 = vsel %vm806, %v606, %v1480
      %v1483 = vunpack.c.l.s4 1983009808
      %v1484 = vunpack.c.0.s8 %v1483
      %v1485 = vperm.slane %v1479, %v1484
      %v1487 = vunpack.c.l.s4 1983009808
      %v1488 = vunpack.c.0.s8 %v1487
      %v1489 = vperm.slane %v1481, %v1488
      %v1490 = vrot.slane %v630, 4
      %v1491 = vsel %vm806, %v1490, %v582
      %v1492 = vrot.slane %v582, 4
      %v1493 = vsel %vm806, %v630, %v1492
      %v1495 = vunpack.c.l.s4 1983009808
      %v1496 = vunpack.c.0.s8 %v1495
      %v1497 = vperm.slane %v1491, %v1496
      %v1499 = vunpack.c.l.s4 1983009808
      %v1500 = vunpack.c.0.s8 %v1499
      %v1501 = vperm.slane %v1493, %v1500
      %v1502 = vrot.slane %v686, 4
      %v1503 = vsel %vm806, %v1502, %v527
      %v1504 = vrot.slane %v527, 4
      %v1505 = vsel %vm806, %v686, %v1504
      %v1507 = vunpack.c.l.s4 1983009808
      %v1508 = vunpack.c.0.s8 %v1507
      %v1509 = vperm.slane %v1503, %v1508
      %v1511 = vunpack.c.l.s4 1983009808
      %v1512 = vunpack.c.0.s8 %v1511
      %v1513 = vperm.slane %v1505, %v1512
      %v1514 = vrot.slane %v710, 4
      %v1515 = vsel %vm806, %v1514, %v662
      %v1516 = vrot.slane %v662, 4
      %v1517 = vsel %vm806, %v710, %v1516
      %v1519 = vunpack.c.l.s4 1983009808
      %v1520 = vunpack.c.0.s8 %v1519
      %v1521 = vperm.slane %v1515, %v1520
      %v1523 = vunpack.c.l.s4 1983009808
      %v1524 = vunpack.c.0.s8 %v1523
      %v1525 = vperm.slane %v1517, %v1524
      %v1526 = vrot.slane %v1497, 4
      %v1527 = vsel %vm806, %v1526, %v1485
      %v1528 = vrot.slane %v1485, 4
      %v1529 = vsel %vm806, %v1497, %v1528
      %v1531 = vunpack.c.l.s4 1934713408
      %v1532 = vunpack.c.0.s8 %v1531
      %v1533 = vperm.slane %v1527, %v1532
      %v1535 = vunpack.c.l.s4 1934713408
      %v1536 = vunpack.c.0.s8 %v1535
      %v1537 = vperm.slane %v1529, %v1536
      %v1538 = vrot.slane %v1501, 4
      %v1539 = vsel %vm806, %v1538, %v1489
      %v1540 = vrot.slane %v1489, 4
      %v1541 = vsel %vm806, %v1501, %v1540
      %v1543 = vunpack.c.l.s4 1934713408
      %v1544 = vunpack.c.0.s8 %v1543
      %v1545 = vperm.slane %v1539, %v1544
      %v1547 = vunpack.c.l.s4 1934713408
      %v1548 = vunpack.c.0.s8 %v1547
      %v1549 = vperm.slane %v1541, %v1548
      %v1550 = vrot.slane %v1521, 4
      %v1551 = vsel %vm806, %v1550, %v1509
      %v1552 = vrot.slane %v1509, 4
      %v1553 = vsel %vm806, %v1521, %v1552
      %v1555 = vunpack.c.l.s4 1934713408
      %v1556 = vunpack.c.0.s8 %v1555
      %v1557 = vperm.slane %v1551, %v1556
      %v1559 = vunpack.c.l.s4 1934713408
      %v1560 = vunpack.c.0.s8 %v1559
      %v1561 = vperm.slane %v1553, %v1560
      %v1562 = vrot.slane %v1525, 4
      %v1563 = vsel %vm806, %v1562, %v1513
      %v1564 = vrot.slane %v1513, 4
      %v1565 = vsel %vm806, %v1525, %v1564
      %v1567 = vunpack.c.l.s4 1934713408
      %v1568 = vunpack.c.0.s8 %v1567
      %v1569 = vperm.slane %v1563, %v1568
      %v1571 = vunpack.c.l.s4 1934713408
      %v1572 = vunpack.c.0.s8 %v1571
      %v1573 = vperm.slane %v1565, %v1572
      %v1574 = vrot.slane %v1557, 4
      %v1575 = vsel %vm806, %v1574, %v1533
      %v1576 = vrot.slane %v1533, 4
      %v1577 = vsel %vm806, %v1557, %v1576
      %v1578 = vrot.slane %v1561, 4
      %v1579 = vsel %vm806, %v1578, %v1537
      %v1580 = vrot.slane %v1537, 4
      %v1581 = vsel %vm806, %v1561, %v1580
      %v1582 = vrot.slane %v1569, 4
      %v1583 = vsel %vm806, %v1582, %v1545
      %v1584 = vrot.slane %v1545, 4
      %v1585 = vsel %vm806, %v1569, %v1584
      %v1586 = vrot.slane %v1573, 4
      %v1587 = vsel %vm806, %v1586, %v1549
      %v1588 = vrot.slane %v1549, 4
      %v1589 = vsel %vm806, %v1573, %v1588
      %v1590 = vrot.slane %v766, 4
      %v1591 = vsel %vm806, %v1590, %v556
      %v1592 = vrot.slane %v556, 4
      %v1593 = vsel %vm806, %v766, %v1592
      %v1595 = vunpack.c.l.s4 1983009808
      %v1596 = vunpack.c.0.s8 %v1595
      %v1597 = vperm.slane %v1591, %v1596
      %v1599 = vunpack.c.l.s4 1983009808
      %v1600 = vunpack.c.0.s8 %v1599
      %v1601 = vperm.slane %v1593, %v1600
      %v1602 = vrot.slane %v790, 4
      %v1603 = vsel %vm806, %v1602, %v742
      %v1604 = vrot.slane %v742, 4
      %v1605 = vsel %vm806, %v790, %v1604
      %v1607 = vunpack.c.l.s4 1983009808
      %v1608 = vunpack.c.0.s8 %v1607
      %v1609 = vperm.slane %v1603, %v1608
      %v1611 = vunpack.c.l.s4 1983009808
      %v1612 = vunpack.c.0.s8 %v1611
      %v1613 = vperm.slane %v1605, %v1612
      %v1614 = vrot.slane %v1609, 4
      %v1615 = vsel %vm806, %v1614, %v1597
      %v1616 = vrot.slane %v1597, 4
      %v1617 = vsel %vm806, %v1609, %v1616
      %v1619 = vunpack.c.l.s4 1934713408
      %v1620 = vunpack.c.0.s8 %v1619
      %v1621 = vperm.slane %v1615, %v1620
      %v1623 = vunpack.c.l.s4 1934713408
      %v1624 = vunpack.c.0.s8 %v1623
      %v1625 = vperm.slane %v1617, %v1624
      %v1626 = vrot.slane %v1613, 4
      %v1627 = vsel %vm806, %v1626, %v1601
      %v1628 = vrot.slane %v1601, 4
      %v1629 = vsel %vm806, %v1613, %v1628
      %v1631 = vunpack.c.l.s4 1934713408
      %v1632 = vunpack.c.0.s8 %v1631
      %v1633 = vperm.slane %v1627, %v1632
      %v1635 = vunpack.c.l.s4 1934713408
      %v1636 = vunpack.c.0.s8 %v1635
      %v1637 = vperm.slane %v1629, %v1636
      %v1638 = vrot.slane %v1621, 4
      %v1639 = vsel %vm806, 0.0, %v1638
      %v1640 = vrot.slane %v1625, 4
      %v1641 = vsel %vm806, 0.0, %v1640
      %v1642 = vrot.slane %v1633, 4
      %v1643 = vsel %vm806, 0.0, %v1642
      %v1644 = vrot.slane %v1637, 4
      %v1645 = vsel %vm806, 0.0, %v1644
      %v1646 = vrot.slane %v608, 4
      %v1647 = vsel %vm806, %v1646, %v500
      %v1648 = vrot.slane %v500, 4
      %v1649 = vsel %vm806, %v608, %v1648
      %v1651 = vunpack.c.l.s4 1983009808
      %v1652 = vunpack.c.0.s8 %v1651
      %v1653 = vperm.slane %v1647, %v1652
      %v1655 = vunpack.c.l.s4 1983009808
      %v1656 = vunpack.c.0.s8 %v1655
      %v1657 = vperm.slane %v1649, %v1656
      %v1658 = vrot.slane %v632, 4
      %v1659 = vsel %vm806, %v1658, %v584
      %v1660 = vrot.slane %v584, 4
      %v1661 = vsel %vm806, %v632, %v1660
      %v1663 = vunpack.c.l.s4 1983009808
      %v1664 = vunpack.c.0.s8 %v1663
      %v1665 = vperm.slane %v1659, %v1664
      %v1667 = vunpack.c.l.s4 1983009808
      %v1668 = vunpack.c.0.s8 %v1667
      %v1669 = vperm.slane %v1661, %v1668
      %v1670 = vrot.slane %v688, 4
      %v1671 = vsel %vm806, %v1670, %v529
      %v1672 = vrot.slane %v529, 4
      %v1673 = vsel %vm806, %v688, %v1672
      %v1675 = vunpack.c.l.s4 1983009808
      %v1676 = vunpack.c.0.s8 %v1675
      %v1677 = vperm.slane %v1671, %v1676
      %v1679 = vunpack.c.l.s4 1983009808
      %v1680 = vunpack.c.0.s8 %v1679
      %v1681 = vperm.slane %v1673, %v1680
      %v1682 = vrot.slane %v712, 4
      %v1683 = vsel %vm806, %v1682, %v664
      %v1684 = vrot.slane %v664, 4
      %v1685 = vsel %vm806, %v712, %v1684
      %v1687 = vunpack.c.l.s4 1983009808
      %v1688 = vunpack.c.0.s8 %v1687
      %v1689 = vperm.slane %v1683, %v1688
      %v1691 = vunpack.c.l.s4 1983009808
      %v1692 = vunpack.c.0.s8 %v1691
      %v1693 = vperm.slane %v1685, %v1692
      %v1694 = vrot.slane %v1665, 4
      %v1695 = vsel %vm806, %v1694, %v1653
      %v1696 = vrot.slane %v1653, 4
      %v1697 = vsel %vm806, %v1665, %v1696
      %v1699 = vunpack.c.l.s4 1934713408
      %v1700 = vunpack.c.0.s8 %v1699
      %v1701 = vperm.slane %v1695, %v1700
      %v1703 = vunpack.c.l.s4 1934713408
      %v1704 = vunpack.c.0.s8 %v1703
      %v1705 = vperm.slane %v1697, %v1704
      %v1706 = vrot.slane %v1669, 4
      %v1707 = vsel %vm806, %v1706, %v1657
      %v1708 = vrot.slane %v1657, 4
      %v1709 = vsel %vm806, %v1669, %v1708
      %v1711 = vunpack.c.l.s4 1934713408
      %v1712 = vunpack.c.0.s8 %v1711
      %v1713 = vperm.slane %v1707, %v1712
      %v1715 = vunpack.c.l.s4 1934713408
      %v1716 = vunpack.c.0.s8 %v1715
      %v1717 = vperm.slane %v1709, %v1716
      %v1718 = vrot.slane %v1689, 4
      %v1719 = vsel %vm806, %v1718, %v1677
      %v1720 = vrot.slane %v1677, 4
      %v1721 = vsel %vm806, %v1689, %v1720
      %v1723 = vunpack.c.l.s4 1934713408
      %v1724 = vunpack.c.0.s8 %v1723
      %v1725 = vperm.slane %v1719, %v1724
      %v1727 = vunpack.c.l.s4 1934713408
      %v1728 = vunpack.c.0.s8 %v1727
      %v1729 = vperm.slane %v1721, %v1728
      %v1730 = vrot.slane %v1693, 4
      %v1731 = vsel %vm806, %v1730, %v1681
      %v1732 = vrot.slane %v1681, 4
      %v1733 = vsel %vm806, %v1693, %v1732
      %v1735 = vunpack.c.l.s4 1934713408
      %v1736 = vunpack.c.0.s8 %v1735
      %v1737 = vperm.slane %v1731, %v1736
      %v1739 = vunpack.c.l.s4 1934713408
      %v1740 = vunpack.c.0.s8 %v1739
      %v1741 = vperm.slane %v1733, %v1740
      %v1742 = vrot.slane %v1725, 4
      %v1743 = vsel %vm806, %v1742, %v1701
      %v1744 = vrot.slane %v1701, 4
      %v1745 = vsel %vm806, %v1725, %v1744
      %v1746 = vrot.slane %v1729, 4
      %v1747 = vsel %vm806, %v1746, %v1705
      %v1748 = vrot.slane %v1705, 4
      %v1749 = vsel %vm806, %v1729, %v1748
      %v1750 = vrot.slane %v1737, 4
      %v1751 = vsel %vm806, %v1750, %v1713
      %v1752 = vrot.slane %v1713, 4
      %v1753 = vsel %vm806, %v1737, %v1752
      %v1754 = vrot.slane %v1741, 4
      %v1755 = vsel %vm806, %v1754, %v1717
      %v1756 = vrot.slane %v1717, 4
      %v1757 = vsel %vm806, %v1741, %v1756
      %v1758 = vrot.slane %v768, 4
      %v1759 = vsel %vm806, %v1758, %v558
      %v1760 = vrot.slane %v558, 4
      %v1761 = vsel %vm806, %v768, %v1760
      %v1763 = vunpack.c.l.s4 1983009808
      %v1764 = vunpack.c.0.s8 %v1763
      %v1765 = vperm.slane %v1759, %v1764
      %v1767 = vunpack.c.l.s4 1983009808
      %v1768 = vunpack.c.0.s8 %v1767
      %v1769 = vperm.slane %v1761, %v1768
      %v1770 = vrot.slane %v792, 4
      %v1771 = vsel %vm806, %v1770, %v744
      %v1772 = vrot.slane %v744, 4
      %v1773 = vsel %vm806, %v792, %v1772
      %v1775 = vunpack.c.l.s4 1983009808
      %v1776 = vunpack.c.0.s8 %v1775
      %v1777 = vperm.slane %v1771, %v1776
      %v1779 = vunpack.c.l.s4 1983009808
      %v1780 = vunpack.c.0.s8 %v1779
      %v1781 = vperm.slane %v1773, %v1780
      %v1782 = vrot.slane %v1777, 4
      %v1783 = vsel %vm806, %v1782, %v1765
      %v1784 = vrot.slane %v1765, 4
      %v1785 = vsel %vm806, %v1777, %v1784
      %v1787 = vunpack.c.l.s4 1934713408
      %v1788 = vunpack.c.0.s8 %v1787
      %v1789 = vperm.slane %v1783, %v1788
      %v1791 = vunpack.c.l.s4 1934713408
      %v1792 = vunpack.c.0.s8 %v1791
      %v1793 = vperm.slane %v1785, %v1792
      %v1794 = vrot.slane %v1781, 4
      %v1795 = vsel %vm806, %v1794, %v1769
      %v1796 = vrot.slane %v1769, 4
      %v1797 = vsel %vm806, %v1781, %v1796
      %v1799 = vunpack.c.l.s4 1934713408
      %v1800 = vunpack.c.0.s8 %v1799
      %v1801 = vperm.slane %v1795, %v1800
      %v1803 = vunpack.c.l.s4 1934713408
      %v1804 = vunpack.c.0.s8 %v1803
      %v1805 = vperm.slane %v1797, %v1804
      %v1806 = vrot.slane %v1789, 4
      %v1807 = vsel %vm806, 0.0, %v1806
      %v1808 = vrot.slane %v1793, 4
      %v1809 = vsel %vm806, 0.0, %v1808
      %v1810 = vrot.slane %v1801, 4
      %v1811 = vsel %vm806, 0.0, %v1810
      %v1812 = vrot.slane %v1805, 4
      %v1813 = vsel %vm806, 0.0, %v1812
      %v1814 = vrot.slane %v610, 4
      %v1815 = vsel %vm806, %v1814, %v503
      %v1816 = vrot.slane %v503, 4
      %v1817 = vsel %vm806, %v610, %v1816
      %v1819 = vunpack.c.l.s4 1983009808
      %v1820 = vunpack.c.0.s8 %v1819
      %v1821 = vperm.slane %v1815, %v1820
      %v1823 = vunpack.c.l.s4 1983009808
      %v1824 = vunpack.c.0.s8 %v1823
      %v1825 = vperm.slane %v1817, %v1824
      %v1826 = vrot.slane %v634, 4
      %v1827 = vsel %vm806, %v1826, %v586
      %v1828 = vrot.slane %v586, 4
      %v1829 = vsel %vm806, %v634, %v1828
      %v1831 = vunpack.c.l.s4 1983009808
      %v1832 = vunpack.c.0.s8 %v1831
      %v1833 = vperm.slane %v1827, %v1832
      %v1835 = vunpack.c.l.s4 1983009808
      %v1836 = vunpack.c.0.s8 %v1835
      %v1837 = vperm.slane %v1829, %v1836
      %v1838 = vrot.slane %v690, 4
      %v1839 = vsel %vm806, %v1838, %v532
      %v1840 = vrot.slane %v532, 4
      %v1841 = vsel %vm806, %v690, %v1840
      %v1843 = vunpack.c.l.s4 1983009808
      %v1844 = vunpack.c.0.s8 %v1843
      %v1845 = vperm.slane %v1839, %v1844
      %v1847 = vunpack.c.l.s4 1983009808
      %v1848 = vunpack.c.0.s8 %v1847
      %v1849 = vperm.slane %v1841, %v1848
      %v1850 = vrot.slane %v714, 4
      %v1851 = vsel %vm806, %v1850, %v666
      %v1852 = vrot.slane %v666, 4
      %v1853 = vsel %vm806, %v714, %v1852
      %v1855 = vunpack.c.l.s4 1983009808
      %v1856 = vunpack.c.0.s8 %v1855
      %v1857 = vperm.slane %v1851, %v1856
      %v1859 = vunpack.c.l.s4 1983009808
      %v1860 = vunpack.c.0.s8 %v1859
      %v1861 = vperm.slane %v1853, %v1860
      %v1862 = vrot.slane %v1833, 4
      %v1863 = vsel %vm806, %v1862, %v1821
      %v1864 = vrot.slane %v1821, 4
      %v1865 = vsel %vm806, %v1833, %v1864
      %v1867 = vunpack.c.l.s4 1934713408
      %v1868 = vunpack.c.0.s8 %v1867
      %v1869 = vperm.slane %v1863, %v1868
      %v1871 = vunpack.c.l.s4 1934713408
      %v1872 = vunpack.c.0.s8 %v1871
      %v1873 = vperm.slane %v1865, %v1872
      %v1874 = vrot.slane %v1837, 4
      %v1875 = vsel %vm806, %v1874, %v1825
      %v1876 = vrot.slane %v1825, 4
      %v1877 = vsel %vm806, %v1837, %v1876
      %v1879 = vunpack.c.l.s4 1934713408
      %v1880 = vunpack.c.0.s8 %v1879
      %v1881 = vperm.slane %v1875, %v1880
      %v1883 = vunpack.c.l.s4 1934713408
      %v1884 = vunpack.c.0.s8 %v1883
      %v1885 = vperm.slane %v1877, %v1884
      %v1886 = vrot.slane %v1857, 4
      %v1887 = vsel %vm806, %v1886, %v1845
      %v1888 = vrot.slane %v1845, 4
      %v1889 = vsel %vm806, %v1857, %v1888
      %v1891 = vunpack.c.l.s4 1934713408
      %v1892 = vunpack.c.0.s8 %v1891
      %v1893 = vperm.slane %v1887, %v1892
      %v1895 = vunpack.c.l.s4 1934713408
      %v1896 = vunpack.c.0.s8 %v1895
      %v1897 = vperm.slane %v1889, %v1896
      %v1898 = vrot.slane %v1861, 4
      %v1899 = vsel %vm806, %v1898, %v1849
      %v1900 = vrot.slane %v1849, 4
      %v1901 = vsel %vm806, %v1861, %v1900
      %v1903 = vunpack.c.l.s4 1934713408
      %v1904 = vunpack.c.0.s8 %v1903
      %v1905 = vperm.slane %v1899, %v1904
      %v1907 = vunpack.c.l.s4 1934713408
      %v1908 = vunpack.c.0.s8 %v1907
      %v1909 = vperm.slane %v1901, %v1908
      %v1910 = vrot.slane %v1893, 4
      %v1911 = vsel %vm806, %v1910, %v1869
      %v1912 = vrot.slane %v1869, 4
      %v1913 = vsel %vm806, %v1893, %v1912
      %v1914 = vrot.slane %v1897, 4
      %v1915 = vsel %vm806, %v1914, %v1873
      %v1916 = vrot.slane %v1873, 4
      %v1917 = vsel %vm806, %v1897, %v1916
      %v1918 = vrot.slane %v1905, 4
      %v1919 = vsel %vm806, %v1918, %v1881
      %v1920 = vrot.slane %v1881, 4
      %v1921 = vsel %vm806, %v1905, %v1920
      %v1922 = vrot.slane %v1909, 4
      %v1923 = vsel %vm806, %v1922, %v1885
      %v1924 = vrot.slane %v1885, 4
      %v1925 = vsel %vm806, %v1909, %v1924
      %v1926 = vrot.slane %v770, 4
      %v1927 = vsel %vm806, %v1926, %v561
      %v1928 = vrot.slane %v561, 4
      %v1929 = vsel %vm806, %v770, %v1928
      %v1931 = vunpack.c.l.s4 1983009808
      %v1932 = vunpack.c.0.s8 %v1931
      %v1933 = vperm.slane %v1927, %v1932
      %v1935 = vunpack.c.l.s4 1983009808
      %v1936 = vunpack.c.0.s8 %v1935
      %v1937 = vperm.slane %v1929, %v1936
      %v1938 = vrot.slane %v794, 4
      %v1939 = vsel %vm806, %v1938, %v746
      %v1940 = vrot.slane %v746, 4
      %v1941 = vsel %vm806, %v794, %v1940
      %v1943 = vunpack.c.l.s4 1983009808
      %v1944 = vunpack.c.0.s8 %v1943
      %v1945 = vperm.slane %v1939, %v1944
      %v1947 = vunpack.c.l.s4 1983009808
      %v1948 = vunpack.c.0.s8 %v1947
      %v1949 = vperm.slane %v1941, %v1948
      %v1950 = vrot.slane %v1945, 4
      %v1951 = vsel %vm806, %v1950, %v1933
      %v1952 = vrot.slane %v1933, 4
      %v1953 = vsel %vm806, %v1945, %v1952
      %v1955 = vunpack.c.l.s4 1934713408
      %v1956 = vunpack.c.0.s8 %v1955
      %v1957 = vperm.slane %v1951, %v1956
      %v1959 = vunpack.c.l.s4 1934713408
      %v1960 = vunpack.c.0.s8 %v1959
      %v1961 = vperm.slane %v1953, %v1960
      %v1962 = vrot.slane %v1949, 4
      %v1963 = vsel %vm806, %v1962, %v1937
      %v1964 = vrot.slane %v1937, 4
      %v1965 = vsel %vm806, %v1949, %v1964
      %v1967 = vunpack.c.l.s4 1934713408
      %v1968 = vunpack.c.0.s8 %v1967
      %v1969 = vperm.slane %v1963, %v1968
      %v1971 = vunpack.c.l.s4 1934713408
      %v1972 = vunpack.c.0.s8 %v1971
      %v1973 = vperm.slane %v1965, %v1972
      %v1974 = vrot.slane %v1957, 4
      %v1975 = vsel %vm806, 0.0, %v1974
      %v1976 = vrot.slane %v1961, 4
      %v1977 = vsel %vm806, 0.0, %v1976
      %v1978 = vrot.slane %v1969, 4
      %v1979 = vsel %vm806, 0.0, %v1978
      %v1980 = vrot.slane %v1973, 4
      %v1981 = vsel %vm806, 0.0, %v1980
      %v1982 = vrot.slane %v612, 4
      %v1983 = vsel %vm806, %v1982, %v505
      %v1984 = vrot.slane %v505, 4
      %v1985 = vsel %vm806, %v612, %v1984
      %v1987 = vunpack.c.l.s4 1983009808
      %v1988 = vunpack.c.0.s8 %v1987
      %v1989 = vperm.slane %v1983, %v1988
      %v1991 = vunpack.c.l.s4 1983009808
      %v1992 = vunpack.c.0.s8 %v1991
      %v1993 = vperm.slane %v1985, %v1992
      %v1994 = vrot.slane %v636, 4
      %v1995 = vsel %vm806, %v1994, %v588
      %v1996 = vrot.slane %v588, 4
      %v1997 = vsel %vm806, %v636, %v1996
      %v1999 = vunpack.c.l.s4 1983009808
      %v2000 = vunpack.c.0.s8 %v1999
      %v2001 = vperm.slane %v1995, %v2000
      %v2003 = vunpack.c.l.s4 1983009808
      %v2004 = vunpack.c.0.s8 %v2003
      %v2005 = vperm.slane %v1997, %v2004
      %v2006 = vrot.slane %v692, 4
      %v2007 = vsel %vm806, %v2006, %v534
      %v2008 = vrot.slane %v534, 4
      %v2009 = vsel %vm806, %v692, %v2008
      %v2011 = vunpack.c.l.s4 1983009808
      %v2012 = vunpack.c.0.s8 %v2011
      %v2013 = vperm.slane %v2007, %v2012
      %v2015 = vunpack.c.l.s4 1983009808
      %v2016 = vunpack.c.0.s8 %v2015
      %v2017 = vperm.slane %v2009, %v2016
      %v2018 = vrot.slane %v716, 4
      %v2019 = vsel %vm806, %v2018, %v668
      %v2020 = vrot.slane %v668, 4
      %v2021 = vsel %vm806, %v716, %v2020
      %v2023 = vunpack.c.l.s4 1983009808
      %v2024 = vunpack.c.0.s8 %v2023
      %v2025 = vperm.slane %v2019, %v2024
      %v2027 = vunpack.c.l.s4 1983009808
      %v2028 = vunpack.c.0.s8 %v2027
      %v2029 = vperm.slane %v2021, %v2028
      %v2030 = vrot.slane %v2001, 4
      %v2031 = vsel %vm806, %v2030, %v1989
      %v2032 = vrot.slane %v1989, 4
      %v2033 = vsel %vm806, %v2001, %v2032
      %v2035 = vunpack.c.l.s4 1934713408
      %v2036 = vunpack.c.0.s8 %v2035
      %v2037 = vperm.slane %v2031, %v2036
      %v2039 = vunpack.c.l.s4 1934713408
      %v2040 = vunpack.c.0.s8 %v2039
      %v2041 = vperm.slane %v2033, %v2040
      %v2042 = vrot.slane %v2005, 4
      %v2043 = vsel %vm806, %v2042, %v1993
      %v2044 = vrot.slane %v1993, 4
      %v2045 = vsel %vm806, %v2005, %v2044
      %v2047 = vunpack.c.l.s4 1934713408
      %v2048 = vunpack.c.0.s8 %v2047
      %v2049 = vperm.slane %v2043, %v2048
      %v2051 = vunpack.c.l.s4 1934713408
      %v2052 = vunpack.c.0.s8 %v2051
      %v2053 = vperm.slane %v2045, %v2052
      %v2054 = vrot.slane %v2025, 4
      %v2055 = vsel %vm806, %v2054, %v2013
      %v2056 = vrot.slane %v2013, 4
      %v2057 = vsel %vm806, %v2025, %v2056
      %v2059 = vunpack.c.l.s4 1934713408
      %v2060 = vunpack.c.0.s8 %v2059
      %v2061 = vperm.slane %v2055, %v2060
      %v2063 = vunpack.c.l.s4 1934713408
      %v2064 = vunpack.c.0.s8 %v2063
      %v2065 = vperm.slane %v2057, %v2064
      %v2066 = vrot.slane %v2029, 4
      %v2067 = vsel %vm806, %v2066, %v2017
      %v2068 = vrot.slane %v2017, 4
      %v2069 = vsel %vm806, %v2029, %v2068
      %v2071 = vunpack.c.l.s4 1934713408
      %v2072 = vunpack.c.0.s8 %v2071
      %v2073 = vperm.slane %v2067, %v2072
      %v2075 = vunpack.c.l.s4 1934713408
      %v2076 = vunpack.c.0.s8 %v2075
      %v2077 = vperm.slane %v2069, %v2076
      %v2078 = vrot.slane %v2061, 4
      %v2079 = vsel %vm806, %v2078, %v2037
      %v2080 = vrot.slane %v2037, 4
      %v2081 = vsel %vm806, %v2061, %v2080
      %v2082 = vrot.slane %v2065, 4
      %v2083 = vsel %vm806, %v2082, %v2041
      %v2084 = vrot.slane %v2041, 4
      %v2085 = vsel %vm806, %v2065, %v2084
      %v2086 = vrot.slane %v2073, 4
      %v2087 = vsel %vm806, %v2086, %v2049
      %v2088 = vrot.slane %v2049, 4
      %v2089 = vsel %vm806, %v2073, %v2088
      %v2090 = vrot.slane %v2077, 4
      %v2091 = vsel %vm806, %v2090, %v2053
      %v2092 = vrot.slane %v2053, 4
      %v2093 = vsel %vm806, %v2077, %v2092
      %v2094 = vrot.slane %v772, 4
      %v2095 = vsel %vm806, %v2094, %v563
      %v2096 = vrot.slane %v563, 4
      %v2097 = vsel %vm806, %v772, %v2096
      %v2099 = vunpack.c.l.s4 1983009808
      %v2100 = vunpack.c.0.s8 %v2099
      %v2101 = vperm.slane %v2095, %v2100
      %v2103 = vunpack.c.l.s4 1983009808
      %v2104 = vunpack.c.0.s8 %v2103
      %v2105 = vperm.slane %v2097, %v2104
      %v2106 = vrot.slane %v796, 4
      %v2107 = vsel %vm806, %v2106, %v748
      %v2108 = vrot.slane %v748, 4
      %v2109 = vsel %vm806, %v796, %v2108
      %v2111 = vunpack.c.l.s4 1983009808
      %v2112 = vunpack.c.0.s8 %v2111
      %v2113 = vperm.slane %v2107, %v2112
      %v2115 = vunpack.c.l.s4 1983009808
      %v2116 = vunpack.c.0.s8 %v2115
      %v2117 = vperm.slane %v2109, %v2116
      %v2118 = vrot.slane %v2113, 4
      %v2119 = vsel %vm806, %v2118, %v2101
      %v2120 = vrot.slane %v2101, 4
      %v2121 = vsel %vm806, %v2113, %v2120
      %v2123 = vunpack.c.l.s4 1934713408
      %v2124 = vunpack.c.0.s8 %v2123
      %v2125 = vperm.slane %v2119, %v2124
      %v2127 = vunpack.c.l.s4 1934713408
      %v2128 = vunpack.c.0.s8 %v2127
      %v2129 = vperm.slane %v2121, %v2128
      %v2130 = vrot.slane %v2117, 4
      %v2131 = vsel %vm806, %v2130, %v2105
      %v2132 = vrot.slane %v2105, 4
      %v2133 = vsel %vm806, %v2117, %v2132
      %v2135 = vunpack.c.l.s4 1934713408
      %v2136 = vunpack.c.0.s8 %v2135
      %v2137 = vperm.slane %v2131, %v2136
      %v2139 = vunpack.c.l.s4 1934713408
      %v2140 = vunpack.c.0.s8 %v2139
      %v2141 = vperm.slane %v2133, %v2140
      %v2142 = vrot.slane %v2125, 4
      %v2143 = vsel %vm806, 0.0, %v2142
      %v2144 = vrot.slane %v2129, 4
      %v2145 = vsel %vm806, 0.0, %v2144
      %v2146 = vrot.slane %v2137, 4
      %v2147 = vsel %vm806, 0.0, %v2146
      %v2148 = vrot.slane %v2141, 4
      %v2149 = vsel %vm806, 0.0, %v2148
      %v2150 = vrot.slane %v907, 4
      %v2151 = vsel %vm806, %v2150, %v903
      %v2152 = vrot.slane %v903, 4
      %v2153 = vsel %vm806, %v907, %v2152
      %v2155 = vunpack.c.l.s4 1983009808
      %v2156 = vunpack.c.0.s8 %v2155
      %v2157 = vperm.slane %v2151, %v2156
      %v2159 = vunpack.c.l.s4 1983009808
      %v2160 = vunpack.c.0.s8 %v2159
      %v2161 = vperm.slane %v2153, %v2160
      %v2162 = vrot.slane %v909, 4
      %v2163 = vsel %vm806, %v2162, %v905
      %v2164 = vrot.slane %v905, 4
      %v2165 = vsel %vm806, %v909, %v2164
      %v2167 = vunpack.c.l.s4 1983009808
      %v2168 = vunpack.c.0.s8 %v2167
      %v2169 = vperm.slane %v2163, %v2168
      %v2171 = vunpack.c.l.s4 1983009808
      %v2172 = vunpack.c.0.s8 %v2171
      %v2173 = vperm.slane %v2165, %v2172
      %v2174 = vrot.slane %v915, 4
      %v2175 = vsel %vm806, %v2174, %v911
      %v2176 = vrot.slane %v911, 4
      %v2177 = vsel %vm806, %v915, %v2176
      %v2179 = vunpack.c.l.s4 1983009808
      %v2180 = vunpack.c.0.s8 %v2179
      %v2181 = vperm.slane %v2175, %v2180
      %v2183 = vunpack.c.l.s4 1983009808
      %v2184 = vunpack.c.0.s8 %v2183
      %v2185 = vperm.slane %v2177, %v2184
      %v2186 = vrot.slane %v917, 4
      %v2187 = vsel %vm806, %v2186, %v913
      %v2188 = vrot.slane %v913, 4
      %v2189 = vsel %vm806, %v917, %v2188
      %v2191 = vunpack.c.l.s4 1983009808
      %v2192 = vunpack.c.0.s8 %v2191
      %v2193 = vperm.slane %v2187, %v2192
      %v2195 = vunpack.c.l.s4 1983009808
      %v2196 = vunpack.c.0.s8 %v2195
      %v2197 = vperm.slane %v2189, %v2196
      %v2198 = vrot.slane %v2169, 4
      %v2199 = vsel %vm806, %v2198, %v2157
      %v2200 = vrot.slane %v2157, 4
      %v2201 = vsel %vm806, %v2169, %v2200
      %v2203 = vunpack.c.l.s4 1934713408
      %v2204 = vunpack.c.0.s8 %v2203
      %v2205 = vperm.slane %v2199, %v2204
      %v2207 = vunpack.c.l.s4 1934713408
      %v2208 = vunpack.c.0.s8 %v2207
      %v2209 = vperm.slane %v2201, %v2208
      %v2210 = vrot.slane %v2173, 4
      %v2211 = vsel %vm806, %v2210, %v2161
      %v2212 = vrot.slane %v2161, 4
      %v2213 = vsel %vm806, %v2173, %v2212
      %v2215 = vunpack.c.l.s4 1934713408
      %v2216 = vunpack.c.0.s8 %v2215
      %v2217 = vperm.slane %v2211, %v2216
      %v2219 = vunpack.c.l.s4 1934713408
      %v2220 = vunpack.c.0.s8 %v2219
      %v2221 = vperm.slane %v2213, %v2220
      %v2222 = vrot.slane %v2193, 4
      %v2223 = vsel %vm806, %v2222, %v2181
      %v2224 = vrot.slane %v2181, 4
      %v2225 = vsel %vm806, %v2193, %v2224
      %v2227 = vunpack.c.l.s4 1934713408
      %v2228 = vunpack.c.0.s8 %v2227
      %v2229 = vperm.slane %v2223, %v2228
      %v2231 = vunpack.c.l.s4 1934713408
      %v2232 = vunpack.c.0.s8 %v2231
      %v2233 = vperm.slane %v2225, %v2232
      %v2234 = vrot.slane %v2197, 4
      %v2235 = vsel %vm806, %v2234, %v2185
      %v2236 = vrot.slane %v2185, 4
      %v2237 = vsel %vm806, %v2197, %v2236
      %v2239 = vunpack.c.l.s4 1934713408
      %v2240 = vunpack.c.0.s8 %v2239
      %v2241 = vperm.slane %v2235, %v2240
      %v2243 = vunpack.c.l.s4 1934713408
      %v2244 = vunpack.c.0.s8 %v2243
      %v2245 = vperm.slane %v2237, %v2244
      %v2246 = vrot.slane %v2229, 4
      %v2247 = vsel %vm806, %v2246, %v2205
      %v2248 = vrot.slane %v2205, 4
      %v2249 = vsel %vm806, %v2229, %v2248
      %v2250 = vrot.slane %v2233, 4
      %v2251 = vsel %vm806, %v2250, %v2209
      %v2252 = vrot.slane %v2209, 4
      %v2253 = vsel %vm806, %v2233, %v2252
      %v2254 = vrot.slane %v2241, 4
      %v2255 = vsel %vm806, %v2254, %v2217
      %v2256 = vrot.slane %v2217, 4
      %v2257 = vsel %vm806, %v2241, %v2256
      %v2258 = vrot.slane %v2245, 4
      %v2259 = vsel %vm806, %v2258, %v2221
      %v2260 = vrot.slane %v2221, 4
      %v2261 = vsel %vm806, %v2245, %v2260
      %v2262 = vrot.slane %v1075, 4
      %v2263 = vsel %vm806, %v2262, %v1071
      %v2264 = vrot.slane %v1071, 4
      %v2265 = vsel %vm806, %v1075, %v2264
      %v2267 = vunpack.c.l.s4 1983009808
      %v2268 = vunpack.c.0.s8 %v2267
      %v2269 = vperm.slane %v2263, %v2268
      %v2271 = vunpack.c.l.s4 1983009808
      %v2272 = vunpack.c.0.s8 %v2271
      %v2273 = vperm.slane %v2265, %v2272
      %v2274 = vrot.slane %v1077, 4
      %v2275 = vsel %vm806, %v2274, %v1073
      %v2276 = vrot.slane %v1073, 4
      %v2277 = vsel %vm806, %v1077, %v2276
      %v2279 = vunpack.c.l.s4 1983009808
      %v2280 = vunpack.c.0.s8 %v2279
      %v2281 = vperm.slane %v2275, %v2280
      %v2283 = vunpack.c.l.s4 1983009808
      %v2284 = vunpack.c.0.s8 %v2283
      %v2285 = vperm.slane %v2277, %v2284
      %v2286 = vrot.slane %v1083, 4
      %v2287 = vsel %vm806, %v2286, %v1079
      %v2288 = vrot.slane %v1079, 4
      %v2289 = vsel %vm806, %v1083, %v2288
      %v2291 = vunpack.c.l.s4 1983009808
      %v2292 = vunpack.c.0.s8 %v2291
      %v2293 = vperm.slane %v2287, %v2292
      %v2295 = vunpack.c.l.s4 1983009808
      %v2296 = vunpack.c.0.s8 %v2295
      %v2297 = vperm.slane %v2289, %v2296
      %v2298 = vrot.slane %v1085, 4
      %v2299 = vsel %vm806, %v2298, %v1081
      %v2300 = vrot.slane %v1081, 4
      %v2301 = vsel %vm806, %v1085, %v2300
      %v2303 = vunpack.c.l.s4 1983009808
      %v2304 = vunpack.c.0.s8 %v2303
      %v2305 = vperm.slane %v2299, %v2304
      %v2307 = vunpack.c.l.s4 1983009808
      %v2308 = vunpack.c.0.s8 %v2307
      %v2309 = vperm.slane %v2301, %v2308
      %v2310 = vrot.slane %v2281, 4
      %v2311 = vsel %vm806, %v2310, %v2269
      %v2312 = vrot.slane %v2269, 4
      %v2313 = vsel %vm806, %v2281, %v2312
      %v2315 = vunpack.c.l.s4 1934713408
      %v2316 = vunpack.c.0.s8 %v2315
      %v2317 = vperm.slane %v2311, %v2316
      %v2319 = vunpack.c.l.s4 1934713408
      %v2320 = vunpack.c.0.s8 %v2319
      %v2321 = vperm.slane %v2313, %v2320
      %v2322 = vrot.slane %v2285, 4
      %v2323 = vsel %vm806, %v2322, %v2273
      %v2324 = vrot.slane %v2273, 4
      %v2325 = vsel %vm806, %v2285, %v2324
      %v2327 = vunpack.c.l.s4 1934713408
      %v2328 = vunpack.c.0.s8 %v2327
      %v2329 = vperm.slane %v2323, %v2328
      %v2331 = vunpack.c.l.s4 1934713408
      %v2332 = vunpack.c.0.s8 %v2331
      %v2333 = vperm.slane %v2325, %v2332
      %v2334 = vrot.slane %v2305, 4
      %v2335 = vsel %vm806, %v2334, %v2293
      %v2336 = vrot.slane %v2293, 4
      %v2337 = vsel %vm806, %v2305, %v2336
      %v2339 = vunpack.c.l.s4 1934713408
      %v2340 = vunpack.c.0.s8 %v2339
      %v2341 = vperm.slane %v2335, %v2340
      %v2343 = vunpack.c.l.s4 1934713408
      %v2344 = vunpack.c.0.s8 %v2343
      %v2345 = vperm.slane %v2337, %v2344
      %v2346 = vrot.slane %v2309, 4
      %v2347 = vsel %vm806, %v2346, %v2297
      %v2348 = vrot.slane %v2297, 4
      %v2349 = vsel %vm806, %v2309, %v2348
      %v2351 = vunpack.c.l.s4 1934713408
      %v2352 = vunpack.c.0.s8 %v2351
      %v2353 = vperm.slane %v2347, %v2352
      %v2355 = vunpack.c.l.s4 1934713408
      %v2356 = vunpack.c.0.s8 %v2355
      %v2357 = vperm.slane %v2349, %v2356
      %v2358 = vrot.slane %v2341, 4
      %v2359 = vsel %vm806, %v2358, %v2317
      %v2360 = vrot.slane %v2317, 4
      %v2361 = vsel %vm806, %v2341, %v2360
      %v2362 = vrot.slane %v2345, 4
      %v2363 = vsel %vm806, %v2362, %v2321
      %v2364 = vrot.slane %v2321, 4
      %v2365 = vsel %vm806, %v2345, %v2364
      %v2366 = vrot.slane %v2353, 4
      %v2367 = vsel %vm806, %v2366, %v2329
      %v2368 = vrot.slane %v2329, 4
      %v2369 = vsel %vm806, %v2353, %v2368
      %v2370 = vrot.slane %v2357, 4
      %v2371 = vsel %vm806, %v2370, %v2333
      %v2372 = vrot.slane %v2333, 4
      %v2373 = vsel %vm806, %v2357, %v2372
      %v2374 = vrot.slane %v1243, 4
      %v2375 = vsel %vm806, %v2374, %v1239
      %v2376 = vrot.slane %v1239, 4
      %v2377 = vsel %vm806, %v1243, %v2376
      %v2379 = vunpack.c.l.s4 1983009808
      %v2380 = vunpack.c.0.s8 %v2379
      %v2381 = vperm.slane %v2375, %v2380
      %v2383 = vunpack.c.l.s4 1983009808
      %v2384 = vunpack.c.0.s8 %v2383
      %v2385 = vperm.slane %v2377, %v2384
      %v2386 = vrot.slane %v1245, 4
      %v2387 = vsel %vm806, %v2386, %v1241
      %v2388 = vrot.slane %v1241, 4
      %v2389 = vsel %vm806, %v1245, %v2388
      %v2391 = vunpack.c.l.s4 1983009808
      %v2392 = vunpack.c.0.s8 %v2391
      %v2393 = vperm.slane %v2387, %v2392
      %v2395 = vunpack.c.l.s4 1983009808
      %v2396 = vunpack.c.0.s8 %v2395
      %v2397 = vperm.slane %v2389, %v2396
      %v2398 = vrot.slane %v1251, 4
      %v2399 = vsel %vm806, %v2398, %v1247
      %v2400 = vrot.slane %v1247, 4
      %v2401 = vsel %vm806, %v1251, %v2400
      %v2403 = vunpack.c.l.s4 1983009808
      %v2404 = vunpack.c.0.s8 %v2403
      %v2405 = vperm.slane %v2399, %v2404
      %v2407 = vunpack.c.l.s4 1983009808
      %v2408 = vunpack.c.0.s8 %v2407
      %v2409 = vperm.slane %v2401, %v2408
      %v2410 = vrot.slane %v1253, 4
      %v2411 = vsel %vm806, %v2410, %v1249
      %v2412 = vrot.slane %v1249, 4
      %v2413 = vsel %vm806, %v1253, %v2412
      %v2415 = vunpack.c.l.s4 1983009808
      %v2416 = vunpack.c.0.s8 %v2415
      %v2417 = vperm.slane %v2411, %v2416
      %v2419 = vunpack.c.l.s4 1983009808
      %v2420 = vunpack.c.0.s8 %v2419
      %v2421 = vperm.slane %v2413, %v2420
      %v2422 = vrot.slane %v2393, 4
      %v2423 = vsel %vm806, %v2422, %v2381
      %v2424 = vrot.slane %v2381, 4
      %v2425 = vsel %vm806, %v2393, %v2424
      %v2427 = vunpack.c.l.s4 1934713408
      %v2428 = vunpack.c.0.s8 %v2427
      %v2429 = vperm.slane %v2423, %v2428
      %v2431 = vunpack.c.l.s4 1934713408
      %v2432 = vunpack.c.0.s8 %v2431
      %v2433 = vperm.slane %v2425, %v2432
      %v2434 = vrot.slane %v2397, 4
      %v2435 = vsel %vm806, %v2434, %v2385
      %v2436 = vrot.slane %v2385, 4
      %v2437 = vsel %vm806, %v2397, %v2436
      %v2439 = vunpack.c.l.s4 1934713408
      %v2440 = vunpack.c.0.s8 %v2439
      %v2441 = vperm.slane %v2435, %v2440
      %v2443 = vunpack.c.l.s4 1934713408
      %v2444 = vunpack.c.0.s8 %v2443
      %v2445 = vperm.slane %v2437, %v2444
      %v2446 = vrot.slane %v2417, 4
      %v2447 = vsel %vm806, %v2446, %v2405
      %v2448 = vrot.slane %v2405, 4
      %v2449 = vsel %vm806, %v2417, %v2448
      %v2451 = vunpack.c.l.s4 1934713408
      %v2452 = vunpack.c.0.s8 %v2451
      %v2453 = vperm.slane %v2447, %v2452
      %v2455 = vunpack.c.l.s4 1934713408
      %v2456 = vunpack.c.0.s8 %v2455
      %v2457 = vperm.slane %v2449, %v2456
      %v2458 = vrot.slane %v2421, 4
      %v2459 = vsel %vm806, %v2458, %v2409
      %v2460 = vrot.slane %v2409, 4
      %v2461 = vsel %vm806, %v2421, %v2460
      %v2463 = vunpack.c.l.s4 1934713408
      %v2464 = vunpack.c.0.s8 %v2463
      %v2465 = vperm.slane %v2459, %v2464
      %v2467 = vunpack.c.l.s4 1934713408
      %v2468 = vunpack.c.0.s8 %v2467
      %v2469 = vperm.slane %v2461, %v2468
      %v2470 = vrot.slane %v2453, 4
      %v2471 = vsel %vm806, %v2470, %v2429
      %v2472 = vrot.slane %v2429, 4
      %v2473 = vsel %vm806, %v2453, %v2472
      %v2474 = vrot.slane %v2457, 4
      %v2475 = vsel %vm806, %v2474, %v2433
      %v2476 = vrot.slane %v2433, 4
      %v2477 = vsel %vm806, %v2457, %v2476
      %v2478 = vrot.slane %v2465, 4
      %v2479 = vsel %vm806, %v2478, %v2441
      %v2480 = vrot.slane %v2441, 4
      %v2481 = vsel %vm806, %v2465, %v2480
      %v2482 = vrot.slane %v2469, 4
      %v2483 = vsel %vm806, %v2482, %v2445
      %v2484 = vrot.slane %v2445, 4
      %v2485 = vsel %vm806, %v2469, %v2484
      %v2486 = vrot.slane %v1411, 4
      %v2487 = vsel %vm806, %v2486, %v1407
      %v2488 = vrot.slane %v1407, 4
      %v2489 = vsel %vm806, %v1411, %v2488
      %v2491 = vunpack.c.l.s4 1983009808
      %v2492 = vunpack.c.0.s8 %v2491
      %v2493 = vperm.slane %v2487, %v2492
      %v2495 = vunpack.c.l.s4 1983009808
      %v2496 = vunpack.c.0.s8 %v2495
      %v2497 = vperm.slane %v2489, %v2496
      %v2498 = vrot.slane %v1413, 4
      %v2499 = vsel %vm806, %v2498, %v1409
      %v2500 = vrot.slane %v1409, 4
      %v2501 = vsel %vm806, %v1413, %v2500
      %v2503 = vunpack.c.l.s4 1983009808
      %v2504 = vunpack.c.0.s8 %v2503
      %v2505 = vperm.slane %v2499, %v2504
      %v2507 = vunpack.c.l.s4 1983009808
      %v2508 = vunpack.c.0.s8 %v2507
      %v2509 = vperm.slane %v2501, %v2508
      %v2510 = vrot.slane %v1419, 4
      %v2511 = vsel %vm806, %v2510, %v1415
      %v2512 = vrot.slane %v1415, 4
      %v2513 = vsel %vm806, %v1419, %v2512
      %v2515 = vunpack.c.l.s4 1983009808
      %v2516 = vunpack.c.0.s8 %v2515
      %v2517 = vperm.slane %v2511, %v2516
      %v2519 = vunpack.c.l.s4 1983009808
      %v2520 = vunpack.c.0.s8 %v2519
      %v2521 = vperm.slane %v2513, %v2520
      %v2522 = vrot.slane %v1421, 4
      %v2523 = vsel %vm806, %v2522, %v1417
      %v2524 = vrot.slane %v1417, 4
      %v2525 = vsel %vm806, %v1421, %v2524
      %v2527 = vunpack.c.l.s4 1983009808
      %v2528 = vunpack.c.0.s8 %v2527
      %v2529 = vperm.slane %v2523, %v2528
      %v2531 = vunpack.c.l.s4 1983009808
      %v2532 = vunpack.c.0.s8 %v2531
      %v2533 = vperm.slane %v2525, %v2532
      %v2534 = vrot.slane %v2505, 4
      %v2535 = vsel %vm806, %v2534, %v2493
      %v2536 = vrot.slane %v2493, 4
      %v2537 = vsel %vm806, %v2505, %v2536
      %v2539 = vunpack.c.l.s4 1934713408
      %v2540 = vunpack.c.0.s8 %v2539
      %v2541 = vperm.slane %v2535, %v2540
      %v2543 = vunpack.c.l.s4 1934713408
      %v2544 = vunpack.c.0.s8 %v2543
      %v2545 = vperm.slane %v2537, %v2544
      %v2546 = vrot.slane %v2509, 4
      %v2547 = vsel %vm806, %v2546, %v2497
      %v2548 = vrot.slane %v2497, 4
      %v2549 = vsel %vm806, %v2509, %v2548
      %v2551 = vunpack.c.l.s4 1934713408
      %v2552 = vunpack.c.0.s8 %v2551
      %v2553 = vperm.slane %v2547, %v2552
      %v2555 = vunpack.c.l.s4 1934713408
      %v2556 = vunpack.c.0.s8 %v2555
      %v2557 = vperm.slane %v2549, %v2556
      %v2558 = vrot.slane %v2529, 4
      %v2559 = vsel %vm806, %v2558, %v2517
      %v2560 = vrot.slane %v2517, 4
      %v2561 = vsel %vm806, %v2529, %v2560
      %v2563 = vunpack.c.l.s4 1934713408
      %v2564 = vunpack.c.0.s8 %v2563
      %v2565 = vperm.slane %v2559, %v2564
      %v2567 = vunpack.c.l.s4 1934713408
      %v2568 = vunpack.c.0.s8 %v2567
      %v2569 = vperm.slane %v2561, %v2568
      %v2570 = vrot.slane %v2533, 4
      %v2571 = vsel %vm806, %v2570, %v2521
      %v2572 = vrot.slane %v2521, 4
      %v2573 = vsel %vm806, %v2533, %v2572
      %v2575 = vunpack.c.l.s4 1934713408
      %v2576 = vunpack.c.0.s8 %v2575
      %v2577 = vperm.slane %v2571, %v2576
      %v2579 = vunpack.c.l.s4 1934713408
      %v2580 = vunpack.c.0.s8 %v2579
      %v2581 = vperm.slane %v2573, %v2580
      %v2582 = vrot.slane %v2565, 4
      %v2583 = vsel %vm806, %v2582, %v2541
      %v2584 = vrot.slane %v2541, 4
      %v2585 = vsel %vm806, %v2565, %v2584
      %v2586 = vrot.slane %v2569, 4
      %v2587 = vsel %vm806, %v2586, %v2545
      %v2588 = vrot.slane %v2545, 4
      %v2589 = vsel %vm806, %v2569, %v2588
      %v2590 = vrot.slane %v2577, 4
      %v2591 = vsel %vm806, %v2590, %v2553
      %v2592 = vrot.slane %v2553, 4
      %v2593 = vsel %vm806, %v2577, %v2592
      %v2594 = vrot.slane %v2581, 4
      %v2595 = vsel %vm806, %v2594, %v2557
      %v2596 = vrot.slane %v2557, 4
      %v2597 = vsel %vm806, %v2581, %v2596
      %v2598 = vrot.slane %v1579, 4
      %v2599 = vsel %vm806, %v2598, %v1575
      %v2600 = vrot.slane %v1575, 4
      %v2601 = vsel %vm806, %v1579, %v2600
      %v2603 = vunpack.c.l.s4 1983009808
      %v2604 = vunpack.c.0.s8 %v2603
      %v2605 = vperm.slane %v2599, %v2604
      %v2607 = vunpack.c.l.s4 1983009808
      %v2608 = vunpack.c.0.s8 %v2607
      %v2609 = vperm.slane %v2601, %v2608
      %v2610 = vrot.slane %v1581, 4
      %v2611 = vsel %vm806, %v2610, %v1577
      %v2612 = vrot.slane %v1577, 4
      %v2613 = vsel %vm806, %v1581, %v2612
      %v2615 = vunpack.c.l.s4 1983009808
      %v2616 = vunpack.c.0.s8 %v2615
      %v2617 = vperm.slane %v2611, %v2616
      %v2619 = vunpack.c.l.s4 1983009808
      %v2620 = vunpack.c.0.s8 %v2619
      %v2621 = vperm.slane %v2613, %v2620
      %v2622 = vrot.slane %v1587, 4
      %v2623 = vsel %vm806, %v2622, %v1583
      %v2624 = vrot.slane %v1583, 4
      %v2625 = vsel %vm806, %v1587, %v2624
      %v2627 = vunpack.c.l.s4 1983009808
      %v2628 = vunpack.c.0.s8 %v2627
      %v2629 = vperm.slane %v2623, %v2628
      %v2631 = vunpack.c.l.s4 1983009808
      %v2632 = vunpack.c.0.s8 %v2631
      %v2633 = vperm.slane %v2625, %v2632
      %v2634 = vrot.slane %v1589, 4
      %v2635 = vsel %vm806, %v2634, %v1585
      %v2636 = vrot.slane %v1585, 4
      %v2637 = vsel %vm806, %v1589, %v2636
      %v2639 = vunpack.c.l.s4 1983009808
      %v2640 = vunpack.c.0.s8 %v2639
      %v2641 = vperm.slane %v2635, %v2640
      %v2643 = vunpack.c.l.s4 1983009808
      %v2644 = vunpack.c.0.s8 %v2643
      %v2645 = vperm.slane %v2637, %v2644
      %v2646 = vrot.slane %v2617, 4
      %v2647 = vsel %vm806, %v2646, %v2605
      %v2648 = vrot.slane %v2605, 4
      %v2649 = vsel %vm806, %v2617, %v2648
      %v2651 = vunpack.c.l.s4 1934713408
      %v2652 = vunpack.c.0.s8 %v2651
      %v2653 = vperm.slane %v2647, %v2652
      %v2655 = vunpack.c.l.s4 1934713408
      %v2656 = vunpack.c.0.s8 %v2655
      %v2657 = vperm.slane %v2649, %v2656
      %v2658 = vrot.slane %v2621, 4
      %v2659 = vsel %vm806, %v2658, %v2609
      %v2660 = vrot.slane %v2609, 4
      %v2661 = vsel %vm806, %v2621, %v2660
      %v2663 = vunpack.c.l.s4 1934713408
      %v2664 = vunpack.c.0.s8 %v2663
      %v2665 = vperm.slane %v2659, %v2664
      %v2667 = vunpack.c.l.s4 1934713408
      %v2668 = vunpack.c.0.s8 %v2667
      %v2669 = vperm.slane %v2661, %v2668
      %v2670 = vrot.slane %v2641, 4
      %v2671 = vsel %vm806, %v2670, %v2629
      %v2672 = vrot.slane %v2629, 4
      %v2673 = vsel %vm806, %v2641, %v2672
      %v2675 = vunpack.c.l.s4 1934713408
      %v2676 = vunpack.c.0.s8 %v2675
      %v2677 = vperm.slane %v2671, %v2676
      %v2679 = vunpack.c.l.s4 1934713408
      %v2680 = vunpack.c.0.s8 %v2679
      %v2681 = vperm.slane %v2673, %v2680
      %v2682 = vrot.slane %v2645, 4
      %v2683 = vsel %vm806, %v2682, %v2633
      %v2684 = vrot.slane %v2633, 4
      %v2685 = vsel %vm806, %v2645, %v2684
      %v2687 = vunpack.c.l.s4 1934713408
      %v2688 = vunpack.c.0.s8 %v2687
      %v2689 = vperm.slane %v2683, %v2688
      %v2691 = vunpack.c.l.s4 1934713408
      %v2692 = vunpack.c.0.s8 %v2691
      %v2693 = vperm.slane %v2685, %v2692
      %v2694 = vrot.slane %v2677, 4
      %v2695 = vsel %vm806, %v2694, %v2653
      %v2696 = vrot.slane %v2653, 4
      %v2697 = vsel %vm806, %v2677, %v2696
      %v2698 = vrot.slane %v2681, 4
      %v2699 = vsel %vm806, %v2698, %v2657
      %v2700 = vrot.slane %v2657, 4
      %v2701 = vsel %vm806, %v2681, %v2700
      %v2702 = vrot.slane %v2689, 4
      %v2703 = vsel %vm806, %v2702, %v2665
      %v2704 = vrot.slane %v2665, 4
      %v2705 = vsel %vm806, %v2689, %v2704
      %v2706 = vrot.slane %v2693, 4
      %v2707 = vsel %vm806, %v2706, %v2669
      %v2708 = vrot.slane %v2669, 4
      %v2709 = vsel %vm806, %v2693, %v2708
      %v2710 = vrot.slane %v1747, 4
      %v2711 = vsel %vm806, %v2710, %v1743
      %v2712 = vrot.slane %v1743, 4
      %v2713 = vsel %vm806, %v1747, %v2712
      %v2715 = vunpack.c.l.s4 1983009808
      %v2716 = vunpack.c.0.s8 %v2715
      %v2717 = vperm.slane %v2711, %v2716
      %v2719 = vunpack.c.l.s4 1983009808
      %v2720 = vunpack.c.0.s8 %v2719
      %v2721 = vperm.slane %v2713, %v2720
      %v2722 = vrot.slane %v1749, 4
      %v2723 = vsel %vm806, %v2722, %v1745
      %v2724 = vrot.slane %v1745, 4
      %v2725 = vsel %vm806, %v1749, %v2724
      %v2727 = vunpack.c.l.s4 1983009808
      %v2728 = vunpack.c.0.s8 %v2727
      %v2729 = vperm.slane %v2723, %v2728
      %v2731 = vunpack.c.l.s4 1983009808
      %v2732 = vunpack.c.0.s8 %v2731
      %v2733 = vperm.slane %v2725, %v2732
      %v2734 = vrot.slane %v1755, 4
      %v2735 = vsel %vm806, %v2734, %v1751
      %v2736 = vrot.slane %v1751, 4
      %v2737 = vsel %vm806, %v1755, %v2736
      %v2739 = vunpack.c.l.s4 1983009808
      %v2740 = vunpack.c.0.s8 %v2739
      %v2741 = vperm.slane %v2735, %v2740
      %v2743 = vunpack.c.l.s4 1983009808
      %v2744 = vunpack.c.0.s8 %v2743
      %v2745 = vperm.slane %v2737, %v2744
      %v2746 = vrot.slane %v1757, 4
      %v2747 = vsel %vm806, %v2746, %v1753
      %v2748 = vrot.slane %v1753, 4
      %v2749 = vsel %vm806, %v1757, %v2748
      %v2751 = vunpack.c.l.s4 1983009808
      %v2752 = vunpack.c.0.s8 %v2751
      %v2753 = vperm.slane %v2747, %v2752
      %v2755 = vunpack.c.l.s4 1983009808
      %v2756 = vunpack.c.0.s8 %v2755
      %v2757 = vperm.slane %v2749, %v2756
      %v2758 = vrot.slane %v2729, 4
      %v2759 = vsel %vm806, %v2758, %v2717
      %v2760 = vrot.slane %v2717, 4
      %v2761 = vsel %vm806, %v2729, %v2760
      %v2763 = vunpack.c.l.s4 1934713408
      %v2764 = vunpack.c.0.s8 %v2763
      %v2765 = vperm.slane %v2759, %v2764
      %v2767 = vunpack.c.l.s4 1934713408
      %v2768 = vunpack.c.0.s8 %v2767
      %v2769 = vperm.slane %v2761, %v2768
      %v2770 = vrot.slane %v2733, 4
      %v2771 = vsel %vm806, %v2770, %v2721
      %v2772 = vrot.slane %v2721, 4
      %v2773 = vsel %vm806, %v2733, %v2772
      %v2775 = vunpack.c.l.s4 1934713408
      %v2776 = vunpack.c.0.s8 %v2775
      %v2777 = vperm.slane %v2771, %v2776
      %v2779 = vunpack.c.l.s4 1934713408
      %v2780 = vunpack.c.0.s8 %v2779
      %v2781 = vperm.slane %v2773, %v2780
      %v2782 = vrot.slane %v2753, 4
      %v2783 = vsel %vm806, %v2782, %v2741
      %v2784 = vrot.slane %v2741, 4
      %v2785 = vsel %vm806, %v2753, %v2784
      %v2787 = vunpack.c.l.s4 1934713408
      %v2788 = vunpack.c.0.s8 %v2787
      %v2789 = vperm.slane %v2783, %v2788
      %v2791 = vunpack.c.l.s4 1934713408
      %v2792 = vunpack.c.0.s8 %v2791
      %v2793 = vperm.slane %v2785, %v2792
      %v2794 = vrot.slane %v2757, 4
      %v2795 = vsel %vm806, %v2794, %v2745
      %v2796 = vrot.slane %v2745, 4
      %v2797 = vsel %vm806, %v2757, %v2796
      %v2799 = vunpack.c.l.s4 1934713408
      %v2800 = vunpack.c.0.s8 %v2799
      %v2801 = vperm.slane %v2795, %v2800
      %v2803 = vunpack.c.l.s4 1934713408
      %v2804 = vunpack.c.0.s8 %v2803
      %v2805 = vperm.slane %v2797, %v2804
      %v2806 = vrot.slane %v2789, 4
      %v2807 = vsel %vm806, %v2806, %v2765
      %v2808 = vrot.slane %v2765, 4
      %v2809 = vsel %vm806, %v2789, %v2808
      %v2810 = vrot.slane %v2793, 4
      %v2811 = vsel %vm806, %v2810, %v2769
      %v2812 = vrot.slane %v2769, 4
      %v2813 = vsel %vm806, %v2793, %v2812
      %v2814 = vrot.slane %v2801, 4
      %v2815 = vsel %vm806, %v2814, %v2777
      %v2816 = vrot.slane %v2777, 4
      %v2817 = vsel %vm806, %v2801, %v2816
      %v2818 = vrot.slane %v2805, 4
      %v2819 = vsel %vm806, %v2818, %v2781
      %v2820 = vrot.slane %v2781, 4
      %v2821 = vsel %vm806, %v2805, %v2820
      %v2822 = vrot.slane %v1915, 4
      %v2823 = vsel %vm806, %v2822, %v1911
      %v2824 = vrot.slane %v1911, 4
      %v2825 = vsel %vm806, %v1915, %v2824
      %v2827 = vunpack.c.l.s4 1983009808
      %v2828 = vunpack.c.0.s8 %v2827
      %v2829 = vperm.slane %v2823, %v2828
      %v2831 = vunpack.c.l.s4 1983009808
      %v2832 = vunpack.c.0.s8 %v2831
      %v2833 = vperm.slane %v2825, %v2832
      %v2834 = vrot.slane %v1917, 4
      %v2835 = vsel %vm806, %v2834, %v1913
      %v2836 = vrot.slane %v1913, 4
      %v2837 = vsel %vm806, %v1917, %v2836
      %v2839 = vunpack.c.l.s4 1983009808
      %v2840 = vunpack.c.0.s8 %v2839
      %v2841 = vperm.slane %v2835, %v2840
      %v2843 = vunpack.c.l.s4 1983009808
      %v2844 = vunpack.c.0.s8 %v2843
      %v2845 = vperm.slane %v2837, %v2844
      %v2846 = vrot.slane %v1923, 4
      %v2847 = vsel %vm806, %v2846, %v1919
      %v2848 = vrot.slane %v1919, 4
      %v2849 = vsel %vm806, %v1923, %v2848
      %v2851 = vunpack.c.l.s4 1983009808
      %v2852 = vunpack.c.0.s8 %v2851
      %v2853 = vperm.slane %v2847, %v2852
      %v2855 = vunpack.c.l.s4 1983009808
      %v2856 = vunpack.c.0.s8 %v2855
      %v2857 = vperm.slane %v2849, %v2856
      %v2858 = vrot.slane %v1925, 4
      %v2859 = vsel %vm806, %v2858, %v1921
      %v2860 = vrot.slane %v1921, 4
      %v2861 = vsel %vm806, %v1925, %v2860
      %v2863 = vunpack.c.l.s4 1983009808
      %v2864 = vunpack.c.0.s8 %v2863
      %v2865 = vperm.slane %v2859, %v2864
      %v2867 = vunpack.c.l.s4 1983009808
      %v2868 = vunpack.c.0.s8 %v2867
      %v2869 = vperm.slane %v2861, %v2868
      %v2870 = vrot.slane %v2841, 4
      %v2871 = vsel %vm806, %v2870, %v2829
      %v2872 = vrot.slane %v2829, 4
      %v2873 = vsel %vm806, %v2841, %v2872
      %v2875 = vunpack.c.l.s4 1934713408
      %v2876 = vunpack.c.0.s8 %v2875
      %v2877 = vperm.slane %v2871, %v2876
      %v2879 = vunpack.c.l.s4 1934713408
      %v2880 = vunpack.c.0.s8 %v2879
      %v2881 = vperm.slane %v2873, %v2880
      %v2882 = vrot.slane %v2845, 4
      %v2883 = vsel %vm806, %v2882, %v2833
      %v2884 = vrot.slane %v2833, 4
      %v2885 = vsel %vm806, %v2845, %v2884
      %v2887 = vunpack.c.l.s4 1934713408
      %v2888 = vunpack.c.0.s8 %v2887
      %v2889 = vperm.slane %v2883, %v2888
      %v2891 = vunpack.c.l.s4 1934713408
      %v2892 = vunpack.c.0.s8 %v2891
      %v2893 = vperm.slane %v2885, %v2892
      %v2894 = vrot.slane %v2865, 4
      %v2895 = vsel %vm806, %v2894, %v2853
      %v2896 = vrot.slane %v2853, 4
      %v2897 = vsel %vm806, %v2865, %v2896
      %v2899 = vunpack.c.l.s4 1934713408
      %v2900 = vunpack.c.0.s8 %v2899
      %v2901 = vperm.slane %v2895, %v2900
      %v2903 = vunpack.c.l.s4 1934713408
      %v2904 = vunpack.c.0.s8 %v2903
      %v2905 = vperm.slane %v2897, %v2904
      %v2906 = vrot.slane %v2869, 4
      %v2907 = vsel %vm806, %v2906, %v2857
      %v2908 = vrot.slane %v2857, 4
      %v2909 = vsel %vm806, %v2869, %v2908
      %v2911 = vunpack.c.l.s4 1934713408
      %v2912 = vunpack.c.0.s8 %v2911
      %v2913 = vperm.slane %v2907, %v2912
      %v2915 = vunpack.c.l.s4 1934713408
      %v2916 = vunpack.c.0.s8 %v2915
      %v2917 = vperm.slane %v2909, %v2916
      %v2918 = vrot.slane %v2901, 4
      %v2919 = vsel %vm806, %v2918, %v2877
      %v2920 = vrot.slane %v2877, 4
      %v2921 = vsel %vm806, %v2901, %v2920
      %v2922 = vrot.slane %v2905, 4
      %v2923 = vsel %vm806, %v2922, %v2881
      %v2924 = vrot.slane %v2881, 4
      %v2925 = vsel %vm806, %v2905, %v2924
      %v2926 = vrot.slane %v2913, 4
      %v2927 = vsel %vm806, %v2926, %v2889
      %v2928 = vrot.slane %v2889, 4
      %v2929 = vsel %vm806, %v2913, %v2928
      %v2930 = vrot.slane %v2917, 4
      %v2931 = vsel %vm806, %v2930, %v2893
      %v2932 = vrot.slane %v2893, 4
      %v2933 = vsel %vm806, %v2917, %v2932
      %v2934 = vrot.slane %v2083, 4
      %v2935 = vsel %vm806, %v2934, %v2079
      %v2936 = vrot.slane %v2079, 4
      %v2937 = vsel %vm806, %v2083, %v2936
      %v2939 = vunpack.c.l.s4 1983009808
      %v2940 = vunpack.c.0.s8 %v2939
      %v2941 = vperm.slane %v2935, %v2940
      %v2943 = vunpack.c.l.s4 1983009808
      %v2944 = vunpack.c.0.s8 %v2943
      %v2945 = vperm.slane %v2937, %v2944
      %v2946 = vrot.slane %v2085, 4
      %v2947 = vsel %vm806, %v2946, %v2081
      %v2948 = vrot.slane %v2081, 4
      %v2949 = vsel %vm806, %v2085, %v2948
      %v2951 = vunpack.c.l.s4 1983009808
      %v2952 = vunpack.c.0.s8 %v2951
      %v2953 = vperm.slane %v2947, %v2952
      %v2955 = vunpack.c.l.s4 1983009808
      %v2956 = vunpack.c.0.s8 %v2955
      %v2957 = vperm.slane %v2949, %v2956
      %v2958 = vrot.slane %v2091, 4
      %v2959 = vsel %vm806, %v2958, %v2087
      %v2960 = vrot.slane %v2087, 4
      %v2961 = vsel %vm806, %v2091, %v2960
      %v2963 = vunpack.c.l.s4 1983009808
      %v2964 = vunpack.c.0.s8 %v2963
      %v2965 = vperm.slane %v2959, %v2964
      %v2967 = vunpack.c.l.s4 1983009808
      %v2968 = vunpack.c.0.s8 %v2967
      %v2969 = vperm.slane %v2961, %v2968
      %v2970 = vrot.slane %v2093, 4
      %v2971 = vsel %vm806, %v2970, %v2089
      %v2972 = vrot.slane %v2089, 4
      %v2973 = vsel %vm806, %v2093, %v2972
      %v2975 = vunpack.c.l.s4 1983009808
      %v2976 = vunpack.c.0.s8 %v2975
      %v2977 = vperm.slane %v2971, %v2976
      %v2979 = vunpack.c.l.s4 1983009808
      %v2980 = vunpack.c.0.s8 %v2979
      %v2981 = vperm.slane %v2973, %v2980
      %v2982 = vrot.slane %v2953, 4
      %v2983 = vsel %vm806, %v2982, %v2941
      %v2984 = vrot.slane %v2941, 4
      %v2985 = vsel %vm806, %v2953, %v2984
      %v2987 = vunpack.c.l.s4 1934713408
      %v2988 = vunpack.c.0.s8 %v2987
      %v2989 = vperm.slane %v2983, %v2988
      %v2991 = vunpack.c.l.s4 1934713408
      %v2992 = vunpack.c.0.s8 %v2991
      %v2993 = vperm.slane %v2985, %v2992
      %v2994 = vrot.slane %v2957, 4
      %v2995 = vsel %vm806, %v2994, %v2945
      %v2996 = vrot.slane %v2945, 4
      %v2997 = vsel %vm806, %v2957, %v2996
      %v2999 = vunpack.c.l.s4 1934713408
      %v3000 = vunpack.c.0.s8 %v2999
      %v3001 = vperm.slane %v2995, %v3000
      %v3003 = vunpack.c.l.s4 1934713408
      %v3004 = vunpack.c.0.s8 %v3003
      %v3005 = vperm.slane %v2997, %v3004
      %v3006 = vrot.slane %v2977, 4
      %v3007 = vsel %vm806, %v3006, %v2965
      %v3008 = vrot.slane %v2965, 4
      %v3009 = vsel %vm806, %v2977, %v3008
      %v3011 = vunpack.c.l.s4 1934713408
      %v3012 = vunpack.c.0.s8 %v3011
      %v3013 = vperm.slane %v3007, %v3012
      %v3015 = vunpack.c.l.s4 1934713408
      %v3016 = vunpack.c.0.s8 %v3015
      %v3017 = vperm.slane %v3009, %v3016
      %v3018 = vrot.slane %v2981, 4
      %v3019 = vsel %vm806, %v3018, %v2969
      %v3020 = vrot.slane %v2969, 4
      %v3021 = vsel %vm806, %v2981, %v3020
      %v3023 = vunpack.c.l.s4 1934713408
      %v3024 = vunpack.c.0.s8 %v3023
      %v3025 = vperm.slane %v3019, %v3024
      %v3027 = vunpack.c.l.s4 1934713408
      %v3028 = vunpack.c.0.s8 %v3027
      %v3029 = vperm.slane %v3021, %v3028
      %v3030 = vrot.slane %v3013, 4
      %v3031 = vsel %vm806, %v3030, %v2989
      %v3032 = vrot.slane %v2989, 4
      %v3033 = vsel %vm806, %v3013, %v3032
      %v3034 = vrot.slane %v3017, 4
      %v3035 = vsel %vm806, %v3034, %v2993
      %v3036 = vrot.slane %v2993, 4
      %v3037 = vsel %vm806, %v3017, %v3036
      %v3038 = vrot.slane %v3025, 4
      %v3039 = vsel %vm806, %v3038, %v3001
      %v3040 = vrot.slane %v3001, 4
      %v3041 = vsel %vm806, %v3025, %v3040
      %v3042 = vrot.slane %v3029, 4
      %v3043 = vsel %vm806, %v3042, %v3005
      %v3044 = vrot.slane %v3005, 4
      %v3045 = vsel %vm806, %v3029, %v3044
      %v3046 = vsel %vm806, %v968, %v949
      %v3048 = vunpack.c.l.s4 1983009808
      %v3049 = vunpack.c.0.s8 %v3048
      %v3050 = vperm.slane %v3046, %v3049
      %v3051 = vrot.slane %v969, 4
      %v3052 = vsel %vm806, %v3051, %v967
      %v3054 = vunpack.c.l.s4 1983009808
      %v3055 = vunpack.c.0.s8 %v3054
      %v3056 = vperm.slane %v3052, %v3055
      %v3057 = vsel %vm806, %v972, %v961
      %v3059 = vunpack.c.l.s4 1983009808
      %v3060 = vunpack.c.0.s8 %v3059
      %v3061 = vperm.slane %v3057, %v3060
      %v3062 = vrot.slane %v973, 4
      %v3063 = vsel %vm806, %v3062, %v971
      %v3065 = vunpack.c.l.s4 1983009808
      %v3066 = vunpack.c.0.s8 %v3065
      %v3067 = vperm.slane %v3063, %v3066
      %v3068 = vrot.slane %v3056, 4
      %v3069 = vsel %vm806, %v3068, %v3050
      %v3070 = vrot.slane %v3050, 4
      %v3071 = vsel %vm806, %v3056, %v3070
      %v3073 = vunpack.c.l.s4 1934713408
      %v3074 = vunpack.c.0.s8 %v3073
      %v3075 = vperm.slane %v3069, %v3074
      %v3077 = vunpack.c.l.s4 1934713408
      %v3078 = vunpack.c.0.s8 %v3077
      %v3079 = vperm.slane %v3071, %v3078
      %v3080 = vrot.slane %v3067, 4
      %v3081 = vsel %vm806, %v3080, %v3061
      %v3082 = vrot.slane %v3061, 4
      %v3083 = vsel %vm806, %v3067, %v3082
      %v3085 = vunpack.c.l.s4 1934713408
      %v3086 = vunpack.c.0.s8 %v3085
      %v3087 = vperm.slane %v3081, %v3086
      %v3089 = vunpack.c.l.s4 1934713408
      %v3090 = vunpack.c.0.s8 %v3089
      %v3091 = vperm.slane %v3083, %v3090
      %v3092 = vrot.slane %v3087, 4
      %v3093 = vsel %vm806, %v3092, %v3075
      %v3094 = vrot.slane %v3075, 4
      %v3095 = vsel %vm806, %v3087, %v3094
      %v3096 = vrot.slane %v3091, 4
      %v3097 = vsel %vm806, %v3096, %v3079
      %v3098 = vrot.slane %v3079, 4
      %v3099 = vsel %vm806, %v3091, %v3098
      %v3100 = vsel %vm806, %v1136, %v1117
      %v3102 = vunpack.c.l.s4 1983009808
      %v3103 = vunpack.c.0.s8 %v3102
      %v3104 = vperm.slane %v3100, %v3103
      %v3105 = vrot.slane %v1137, 4
      %v3106 = vsel %vm806, %v3105, %v1135
      %v3108 = vunpack.c.l.s4 1983009808
      %v3109 = vunpack.c.0.s8 %v3108
      %v3110 = vperm.slane %v3106, %v3109
      %v3111 = vsel %vm806, %v1140, %v1129
      %v3113 = vunpack.c.l.s4 1983009808
      %v3114 = vunpack.c.0.s8 %v3113
      %v3115 = vperm.slane %v3111, %v3114
      %v3116 = vrot.slane %v1141, 4
      %v3117 = vsel %vm806, %v3116, %v1139
      %v3119 = vunpack.c.l.s4 1983009808
      %v3120 = vunpack.c.0.s8 %v3119
      %v3121 = vperm.slane %v3117, %v3120
      %v3122 = vrot.slane %v3110, 4
      %v3123 = vsel %vm806, %v3122, %v3104
      %v3124 = vrot.slane %v3104, 4
      %v3125 = vsel %vm806, %v3110, %v3124
      %v3127 = vunpack.c.l.s4 1934713408
      %v3128 = vunpack.c.0.s8 %v3127
      %v3129 = vperm.slane %v3123, %v3128
      %v3131 = vunpack.c.l.s4 1934713408
      %v3132 = vunpack.c.0.s8 %v3131
      %v3133 = vperm.slane %v3125, %v3132
      %v3134 = vrot.slane %v3121, 4
      %v3135 = vsel %vm806, %v3134, %v3115
      %v3136 = vrot.slane %v3115, 4
      %v3137 = vsel %vm806, %v3121, %v3136
      %v3139 = vunpack.c.l.s4 1934713408
      %v3140 = vunpack.c.0.s8 %v3139
      %v3141 = vperm.slane %v3135, %v3140
      %v3143 = vunpack.c.l.s4 1934713408
      %v3144 = vunpack.c.0.s8 %v3143
      %v3145 = vperm.slane %v3137, %v3144
      %v3146 = vrot.slane %v3141, 4
      %v3147 = vsel %vm806, %v3146, %v3129
      %v3148 = vrot.slane %v3129, 4
      %v3149 = vsel %vm806, %v3141, %v3148
      %v3150 = vrot.slane %v3145, 4
      %v3151 = vsel %vm806, %v3150, %v3133
      %v3152 = vrot.slane %v3133, 4
      %v3153 = vsel %vm806, %v3145, %v3152
      %v3154 = vsel %vm806, %v1304, %v1285
      %v3156 = vunpack.c.l.s4 1983009808
      %v3157 = vunpack.c.0.s8 %v3156
      %v3158 = vperm.slane %v3154, %v3157
      %v3159 = vrot.slane %v1305, 4
      %v3160 = vsel %vm806, %v3159, %v1303
      %v3162 = vunpack.c.l.s4 1983009808
      %v3163 = vunpack.c.0.s8 %v3162
      %v3164 = vperm.slane %v3160, %v3163
      %v3165 = vsel %vm806, %v1308, %v1297
      %v3167 = vunpack.c.l.s4 1983009808
      %v3168 = vunpack.c.0.s8 %v3167
      %v3169 = vperm.slane %v3165, %v3168
      %v3170 = vrot.slane %v1309, 4
      %v3171 = vsel %vm806, %v3170, %v1307
      %v3173 = vunpack.c.l.s4 1983009808
      %v3174 = vunpack.c.0.s8 %v3173
      %v3175 = vperm.slane %v3171, %v3174
      %v3176 = vrot.slane %v3164, 4
      %v3177 = vsel %vm806, %v3176, %v3158
      %v3178 = vrot.slane %v3158, 4
      %v3179 = vsel %vm806, %v3164, %v3178
      %v3181 = vunpack.c.l.s4 1934713408
      %v3182 = vunpack.c.0.s8 %v3181
      %v3183 = vperm.slane %v3177, %v3182
      %v3185 = vunpack.c.l.s4 1934713408
      %v3186 = vunpack.c.0.s8 %v3185
      %v3187 = vperm.slane %v3179, %v3186
      %v3188 = vrot.slane %v3175, 4
      %v3189 = vsel %vm806, %v3188, %v3169
      %v3190 = vrot.slane %v3169, 4
      %v3191 = vsel %vm806, %v3175, %v3190
      %v3193 = vunpack.c.l.s4 1934713408
      %v3194 = vunpack.c.0.s8 %v3193
      %v3195 = vperm.slane %v3189, %v3194
      %v3197 = vunpack.c.l.s4 1934713408
      %v3198 = vunpack.c.0.s8 %v3197
      %v3199 = vperm.slane %v3191, %v3198
      %v3200 = vrot.slane %v3195, 4
      %v3201 = vsel %vm806, %v3200, %v3183
      %v3202 = vrot.slane %v3183, 4
      %v3203 = vsel %vm806, %v3195, %v3202
      %v3204 = vrot.slane %v3199, 4
      %v3205 = vsel %vm806, %v3204, %v3187
      %v3206 = vrot.slane %v3187, 4
      %v3207 = vsel %vm806, %v3199, %v3206
      %v3208 = vsel %vm806, %v1472, %v1453
      %v3210 = vunpack.c.l.s4 1983009808
      %v3211 = vunpack.c.0.s8 %v3210
      %v3212 = vperm.slane %v3208, %v3211
      %v3213 = vrot.slane %v1473, 4
      %v3214 = vsel %vm806, %v3213, %v1471
      %v3216 = vunpack.c.l.s4 1983009808
      %v3217 = vunpack.c.0.s8 %v3216
      %v3218 = vperm.slane %v3214, %v3217
      %v3219 = vsel %vm806, %v1476, %v1465
      %v3221 = vunpack.c.l.s4 1983009808
      %v3222 = vunpack.c.0.s8 %v3221
      %v3223 = vperm.slane %v3219, %v3222
      %v3224 = vrot.slane %v1477, 4
      %v3225 = vsel %vm806, %v3224, %v1475
      %v3227 = vunpack.c.l.s4 1983009808
      %v3228 = vunpack.c.0.s8 %v3227
      %v3229 = vperm.slane %v3225, %v3228
      %v3230 = vrot.slane %v3218, 4
      %v3231 = vsel %vm806, %v3230, %v3212
      %v3232 = vrot.slane %v3212, 4
      %v3233 = vsel %vm806, %v3218, %v3232
      %v3235 = vunpack.c.l.s4 1934713408
      %v3236 = vunpack.c.0.s8 %v3235
      %v3237 = vperm.slane %v3231, %v3236
      %v3239 = vunpack.c.l.s4 1934713408
      %v3240 = vunpack.c.0.s8 %v3239
      %v3241 = vperm.slane %v3233, %v3240
      %v3242 = vrot.slane %v3229, 4
      %v3243 = vsel %vm806, %v3242, %v3223
      %v3244 = vrot.slane %v3223, 4
      %v3245 = vsel %vm806, %v3229, %v3244
      %v3247 = vunpack.c.l.s4 1934713408
      %v3248 = vunpack.c.0.s8 %v3247
      %v3249 = vperm.slane %v3243, %v3248
      %v3251 = vunpack.c.l.s4 1934713408
      %v3252 = vunpack.c.0.s8 %v3251
      %v3253 = vperm.slane %v3245, %v3252
      %v3254 = vrot.slane %v3249, 4
      %v3255 = vsel %vm806, %v3254, %v3237
      %v3256 = vrot.slane %v3237, 4
      %v3257 = vsel %vm806, %v3249, %v3256
      %v3258 = vrot.slane %v3253, 4
      %v3259 = vsel %vm806, %v3258, %v3241
      %v3260 = vrot.slane %v3241, 4
      %v3261 = vsel %vm806, %v3253, %v3260
      %v3262 = vsel %vm806, %v1640, %v1621
      %v3264 = vunpack.c.l.s4 1983009808
      %v3265 = vunpack.c.0.s8 %v3264
      %v3266 = vperm.slane %v3262, %v3265
      %v3267 = vrot.slane %v1641, 4
      %v3268 = vsel %vm806, %v3267, %v1639
      %v3270 = vunpack.c.l.s4 1983009808
      %v3271 = vunpack.c.0.s8 %v3270
      %v3272 = vperm.slane %v3268, %v3271
      %v3273 = vsel %vm806, %v1644, %v1633
      %v3275 = vunpack.c.l.s4 1983009808
      %v3276 = vunpack.c.0.s8 %v3275
      %v3277 = vperm.slane %v3273, %v3276
      %v3278 = vrot.slane %v1645, 4
      %v3279 = vsel %vm806, %v3278, %v1643
      %v3281 = vunpack.c.l.s4 1983009808
      %v3282 = vunpack.c.0.s8 %v3281
      %v3283 = vperm.slane %v3279, %v3282
      %v3284 = vrot.slane %v3272, 4
      %v3285 = vsel %vm806, %v3284, %v3266
      %v3286 = vrot.slane %v3266, 4
      %v3287 = vsel %vm806, %v3272, %v3286
      %v3289 = vunpack.c.l.s4 1934713408
      %v3290 = vunpack.c.0.s8 %v3289
      %v3291 = vperm.slane %v3285, %v3290
      %v3293 = vunpack.c.l.s4 1934713408
      %v3294 = vunpack.c.0.s8 %v3293
      %v3295 = vperm.slane %v3287, %v3294
      %v3296 = vrot.slane %v3283, 4
      %v3297 = vsel %vm806, %v3296, %v3277
      %v3298 = vrot.slane %v3277, 4
      %v3299 = vsel %vm806, %v3283, %v3298
      %v3301 = vunpack.c.l.s4 1934713408
      %v3302 = vunpack.c.0.s8 %v3301
      %v3303 = vperm.slane %v3297, %v3302
      %v3305 = vunpack.c.l.s4 1934713408
      %v3306 = vunpack.c.0.s8 %v3305
      %v3307 = vperm.slane %v3299, %v3306
      %v3308 = vrot.slane %v3303, 4
      %v3309 = vsel %vm806, %v3308, %v3291
      %v3310 = vrot.slane %v3291, 4
      %v3311 = vsel %vm806, %v3303, %v3310
      %v3312 = vrot.slane %v3307, 4
      %v3313 = vsel %vm806, %v3312, %v3295
      %v3314 = vrot.slane %v3295, 4
      %v3315 = vsel %vm806, %v3307, %v3314
      %v3316 = vsel %vm806, %v1808, %v1789
      %v3318 = vunpack.c.l.s4 1983009808
      %v3319 = vunpack.c.0.s8 %v3318
      %v3320 = vperm.slane %v3316, %v3319
      %v3321 = vrot.slane %v1809, 4
      %v3322 = vsel %vm806, %v3321, %v1807
      %v3324 = vunpack.c.l.s4 1983009808
      %v3325 = vunpack.c.0.s8 %v3324
      %v3326 = vperm.slane %v3322, %v3325
      %v3327 = vsel %vm806, %v1812, %v1801
      %v3329 = vunpack.c.l.s4 1983009808
      %v3330 = vunpack.c.0.s8 %v3329
      %v3331 = vperm.slane %v3327, %v3330
      %v3332 = vrot.slane %v1813, 4
      %v3333 = vsel %vm806, %v3332, %v1811
      %v3335 = vunpack.c.l.s4 1983009808
      %v3336 = vunpack.c.0.s8 %v3335
      %v3337 = vperm.slane %v3333, %v3336
      %v3338 = vrot.slane %v3326, 4
      %v3339 = vsel %vm806, %v3338, %v3320
      %v3340 = vrot.slane %v3320, 4
      %v3341 = vsel %vm806, %v3326, %v3340
      %v3343 = vunpack.c.l.s4 1934713408
      %v3344 = vunpack.c.0.s8 %v3343
      %v3345 = vperm.slane %v3339, %v3344
      %v3347 = vunpack.c.l.s4 1934713408
      %v3348 = vunpack.c.0.s8 %v3347
      %v3349 = vperm.slane %v3341, %v3348
      %v3350 = vrot.slane %v3337, 4
      %v3351 = vsel %vm806, %v3350, %v3331
      %v3352 = vrot.slane %v3331, 4
      %v3353 = vsel %vm806, %v3337, %v3352
      %v3355 = vunpack.c.l.s4 1934713408
      %v3356 = vunpack.c.0.s8 %v3355
      %v3357 = vperm.slane %v3351, %v3356
      %v3359 = vunpack.c.l.s4 1934713408
      %v3360 = vunpack.c.0.s8 %v3359
      %v3361 = vperm.slane %v3353, %v3360
      %v3362 = vrot.slane %v3357, 4
      %v3363 = vsel %vm806, %v3362, %v3345
      %v3364 = vrot.slane %v3345, 4
      %v3365 = vsel %vm806, %v3357, %v3364
      %v3366 = vrot.slane %v3361, 4
      %v3367 = vsel %vm806, %v3366, %v3349
      %v3368 = vrot.slane %v3349, 4
      %v3369 = vsel %vm806, %v3361, %v3368
      %v3370 = vsel %vm806, %v1976, %v1957
      %v3372 = vunpack.c.l.s4 1983009808
      %v3373 = vunpack.c.0.s8 %v3372
      %v3374 = vperm.slane %v3370, %v3373
      %v3375 = vrot.slane %v1977, 4
      %v3376 = vsel %vm806, %v3375, %v1975
      %v3378 = vunpack.c.l.s4 1983009808
      %v3379 = vunpack.c.0.s8 %v3378
      %v3380 = vperm.slane %v3376, %v3379
      %v3381 = vsel %vm806, %v1980, %v1969
      %v3383 = vunpack.c.l.s4 1983009808
      %v3384 = vunpack.c.0.s8 %v3383
      %v3385 = vperm.slane %v3381, %v3384
      %v3386 = vrot.slane %v1981, 4
      %v3387 = vsel %vm806, %v3386, %v1979
      %v3389 = vunpack.c.l.s4 1983009808
      %v3390 = vunpack.c.0.s8 %v3389
      %v3391 = vperm.slane %v3387, %v3390
      %v3392 = vrot.slane %v3380, 4
      %v3393 = vsel %vm806, %v3392, %v3374
      %v3394 = vrot.slane %v3374, 4
      %v3395 = vsel %vm806, %v3380, %v3394
      %v3397 = vunpack.c.l.s4 1934713408
      %v3398 = vunpack.c.0.s8 %v3397
      %v3399 = vperm.slane %v3393, %v3398
      %v3401 = vunpack.c.l.s4 1934713408
      %v3402 = vunpack.c.0.s8 %v3401
      %v3403 = vperm.slane %v3395, %v3402
      %v3404 = vrot.slane %v3391, 4
      %v3405 = vsel %vm806, %v3404, %v3385
      %v3406 = vrot.slane %v3385, 4
      %v3407 = vsel %vm806, %v3391, %v3406
      %v3409 = vunpack.c.l.s4 1934713408
      %v3410 = vunpack.c.0.s8 %v3409
      %v3411 = vperm.slane %v3405, %v3410
      %v3413 = vunpack.c.l.s4 1934713408
      %v3414 = vunpack.c.0.s8 %v3413
      %v3415 = vperm.slane %v3407, %v3414
      %v3416 = vrot.slane %v3411, 4
      %v3417 = vsel %vm806, %v3416, %v3399
      %v3418 = vrot.slane %v3399, 4
      %v3419 = vsel %vm806, %v3411, %v3418
      %v3420 = vrot.slane %v3415, 4
      %v3421 = vsel %vm806, %v3420, %v3403
      %v3422 = vrot.slane %v3403, 4
      %v3423 = vsel %vm806, %v3415, %v3422
      %v3424 = vsel %vm806, %v2144, %v2125
      %v3426 = vunpack.c.l.s4 1983009808
      %v3427 = vunpack.c.0.s8 %v3426
      %v3428 = vperm.slane %v3424, %v3427
      %v3429 = vrot.slane %v2145, 4
      %v3430 = vsel %vm806, %v3429, %v2143
      %v3432 = vunpack.c.l.s4 1983009808
      %v3433 = vunpack.c.0.s8 %v3432
      %v3434 = vperm.slane %v3430, %v3433
      %v3435 = vsel %vm806, %v2148, %v2137
      %v3437 = vunpack.c.l.s4 1983009808
      %v3438 = vunpack.c.0.s8 %v3437
      %v3439 = vperm.slane %v3435, %v3438
      %v3440 = vrot.slane %v2149, 4
      %v3441 = vsel %vm806, %v3440, %v2147
      %v3443 = vunpack.c.l.s4 1983009808
      %v3444 = vunpack.c.0.s8 %v3443
      %v3445 = vperm.slane %v3441, %v3444
      %v3446 = vrot.slane %v3434, 4
      %v3447 = vsel %vm806, %v3446, %v3428
      %v3448 = vrot.slane %v3428, 4
      %v3449 = vsel %vm806, %v3434, %v3448
      %v3451 = vunpack.c.l.s4 1934713408
      %v3452 = vunpack.c.0.s8 %v3451
      %v3453 = vperm.slane %v3447, %v3452
      %v3455 = vunpack.c.l.s4 1934713408
      %v3456 = vunpack.c.0.s8 %v3455
      %v3457 = vperm.slane %v3449, %v3456
      %v3458 = vrot.slane %v3445, 4
      %v3459 = vsel %vm806, %v3458, %v3439
      %v3460 = vrot.slane %v3439, 4
      %v3461 = vsel %vm806, %v3445, %v3460
      %v3463 = vunpack.c.l.s4 1934713408
      %v3464 = vunpack.c.0.s8 %v3463
      %v3465 = vperm.slane %v3459, %v3464
      %v3467 = vunpack.c.l.s4 1934713408
      %v3468 = vunpack.c.0.s8 %v3467
      %v3469 = vperm.slane %v3461, %v3468
      %v3470 = vrot.slane %v3465, 4
      %v3471 = vsel %vm806, %v3470, %v3453
      %v3472 = vrot.slane %v3453, 4
      %v3473 = vsel %vm806, %v3465, %v3472
      %v3474 = vrot.slane %v3469, 4
      %v3475 = vsel %vm806, %v3474, %v3457
      %v3476 = vrot.slane %v3457, 4
      %v3477 = vsel %vm806, %v3469, %v3476
      %v3478 = vpack.c.bf16 %v2247, %v2247
      %v3479 = vpack.c.bf16 %v2359, %v2359
      %v3480 = vpack.c.bf16 %v2471, %v2471
      %v3481 = vpack.c.bf16 %v2583, %v2583
      %v3482 = vpack.c.bf16 %v2695, %v2695
      %v3483 = vpack.c.bf16 %v2807, %v2807
      %v3484 = vpack.c.bf16 %v2919, %v2919
      %v3485 = vpack.c.bf16 %v3031, %v3031
      %v3486 = vpack.c.bf16 %v2249, %v2249
      %v3487 = vpack.c.bf16 %v2361, %v2361
      %v3488 = vpack.c.bf16 %v2473, %v2473
      %v3489 = vpack.c.bf16 %v2585, %v2585
      %v3490 = vpack.c.bf16 %v2697, %v2697
      %v3491 = vpack.c.bf16 %v2809, %v2809
      %v3492 = vpack.c.bf16 %v2921, %v2921
      %v3493 = vpack.c.bf16 %v3033, %v3033
      %v3494 = vpack.c.bf16 %v2251, %v2251
      %v3495 = vpack.c.bf16 %v2363, %v2363
      %v3496 = vpack.c.bf16 %v2475, %v2475
      %v3497 = vpack.c.bf16 %v2587, %v2587
      %v3498 = vpack.c.bf16 %v2699, %v2699
      %v3499 = vpack.c.bf16 %v2811, %v2811
      %v3500 = vpack.c.bf16 %v2923, %v2923
      %v3501 = vpack.c.bf16 %v3035, %v3035
      %v3502 = vpack.c.bf16 %v2253, %v2253
      %v3503 = vpack.c.bf16 %v2365, %v2365
      %v3504 = vpack.c.bf16 %v2477, %v2477
      %v3505 = vpack.c.bf16 %v2589, %v2589
      %v3506 = vpack.c.bf16 %v2701, %v2701
      %v3507 = vpack.c.bf16 %v2813, %v2813
      %v3508 = vpack.c.bf16 %v2925, %v2925
      %v3509 = vpack.c.bf16 %v3037, %v3037
      %v3510 = vpack.c.bf16 %v2255, %v2255
      %v3511 = vpack.c.bf16 %v2367, %v2367
      %v3512 = vpack.c.bf16 %v2479, %v2479
      %v3513 = vpack.c.bf16 %v2591, %v2591
      %v3514 = vpack.c.bf16 %v2703, %v2703
      %v3515 = vpack.c.bf16 %v2815, %v2815
      %v3516 = vpack.c.bf16 %v2927, %v2927
      %v3517 = vpack.c.bf16 %v3039, %v3039
      %v3518 = vpack.c.bf16 %v2257, %v2257
      %v3519 = vpack.c.bf16 %v2369, %v2369
      %v3520 = vpack.c.bf16 %v2481, %v2481
      %v3521 = vpack.c.bf16 %v2593, %v2593
      %v3522 = vpack.c.bf16 %v2705, %v2705
      %v3523 = vpack.c.bf16 %v2817, %v2817
      %v3524 = vpack.c.bf16 %v2929, %v2929
      %v3525 = vpack.c.bf16 %v3041, %v3041
      %v3526 = vpack.c.bf16 %v2259, %v2259
      %v3527 = vpack.c.bf16 %v2371, %v2371
      %v3528 = vpack.c.bf16 %v2483, %v2483
      %v3529 = vpack.c.bf16 %v2595, %v2595
      %v3530 = vpack.c.bf16 %v2707, %v2707
      %v3531 = vpack.c.bf16 %v2819, %v2819
      %v3532 = vpack.c.bf16 %v2931, %v2931
      %v3533 = vpack.c.bf16 %v3043, %v3043
      %v3534 = vpack.c.bf16 %v2261, %v2261
      %v3535 = vpack.c.bf16 %v2373, %v2373
      %v3536 = vpack.c.bf16 %v2485, %v2485
      %v3537 = vpack.c.bf16 %v2597, %v2597
      %v3538 = vpack.c.bf16 %v2709, %v2709
      %v3539 = vpack.c.bf16 %v2821, %v2821
      %v3540 = vpack.c.bf16 %v2933, %v2933
      %v3541 = vpack.c.bf16 %v3045, %v3045
      %v3542 = vpack.c.bf16 %v3093, %v3093
      %v3543 = vpack.c.bf16 %v3147, %v3147
      %v3544 = vpack.c.bf16 %v3201, %v3201
      %v3545 = vpack.c.bf16 %v3255, %v3255
      %v3546 = vpack.c.bf16 %v3309, %v3309
      %v3547 = vpack.c.bf16 %v3363, %v3363
      %v3548 = vpack.c.bf16 %v3417, %v3417
      %v3549 = vpack.c.bf16 %v3471, %v3471
      %v3550 = vpack.c.bf16 %v3095, %v3095
      %v3551 = vpack.c.bf16 %v3149, %v3149
      %v3552 = vpack.c.bf16 %v3203, %v3203
      %v3553 = vpack.c.bf16 %v3257, %v3257
      %v3554 = vpack.c.bf16 %v3311, %v3311
      %v3555 = vpack.c.bf16 %v3365, %v3365
      %v3556 = vpack.c.bf16 %v3419, %v3419
      %v3557 = vpack.c.bf16 %v3473, %v3473
      %v3558 = vpack.c.bf16 %v3097, %v3097
      %v3559 = vpack.c.bf16 %v3151, %v3151
      %v3560 = vpack.c.bf16 %v3205, %v3205
      %v3561 = vpack.c.bf16 %v3259, %v3259
      %v3562 = vpack.c.bf16 %v3313, %v3313
      %v3563 = vpack.c.bf16 %v3367, %v3367
      %v3564 = vpack.c.bf16 %v3421, %v3421
      %v3565 = vpack.c.bf16 %v3475, %v3475
      %v3566 = vpack.c.bf16 %v3099, %v3099
      %v3567 = vpack.c.bf16 %v3153, %v3153
      %v3568 = vpack.c.bf16 %v3207, %v3207
      %v3569 = vpack.c.bf16 %v3261, %v3261
      %v3570 = vpack.c.bf16 %v3315, %v3315
      %v3571 = vpack.c.bf16 %v3369, %v3369
      %v3572 = vpack.c.bf16 %v3423, %v3423
      %v3573 = vpack.c.bf16 %v3477, %v3477
      %v3582 = vunpack.c.l.b16 %v3478
      %v3583 = vunpack.c.l.b16 %v3479
      %v3584 = vunpack.c.l.b16 %v3480
      %v3585 = vunpack.c.l.b16 %v3481
      %v3586 = vunpack.c.l.b16 %v3482
      %v3587 = vunpack.c.l.b16 %v3483
      %v3588 = vunpack.c.l.b16 %v3484
      %v3589 = vunpack.c.l.b16 %v3485
      %v3590 = vpack.c.b16 %v3583, %v3582
      %v3591 = vpack.c.b16 %v3585, %v3584
      %v3592 = vpack.c.b16 %v3587, %v3586
      %v3593 = vpack.c.b16 %v3589, %v3588
      %v3602 = vunpack.c.l.b16 %v3510
      %v3603 = vunpack.c.l.b16 %v3511
      %v3604 = vunpack.c.l.b16 %v3512
      %v3605 = vunpack.c.l.b16 %v3513
      %v3606 = vunpack.c.l.b16 %v3514
      %v3607 = vunpack.c.l.b16 %v3515
      %v3608 = vunpack.c.l.b16 %v3516
      %v3609 = vunpack.c.l.b16 %v3517
      %v3610 = vpack.c.b16 %v3603, %v3602
      %v3611 = vpack.c.b16 %v3605, %v3604
      %v3612 = vpack.c.b16 %v3607, %v3606
      %v3613 = vpack.c.b16 %v3609, %v3608
      %vm3614 = vcmask 261120
      %v3616 = vsel %vm3614, %v3590, 0
      %v3619 = vsel %vm3614, %v3591, 0
      %v3622 = vsel %vm3614, %v3592, 0
      %v3625 = vsel %vm3614, %v3593, 0
      %v3628 = vsel %vm3614, %v3610, 0
      %v3631 = vsel %vm3614, %v3611, 0
      %v3634 = vsel %vm3614, %v3612, 0
      %v3637 = vsel %vm3614, %v3613, 0
      %3639 = vmatpush.bf16.xpose.msra.mxu0 0
      %3640 = vmatpush.bf16.xpose.msra.mxu0 0
      %3641 = vmatpush.bf16.xpose.msra.mxu0 0
      %3642 = vmatpush.bf16.xpose.msra.mxu0 0
      %3643 = vmatpush.bf16.xpose.msra.mxu0 %v3637
      %3644 = vmatpush.bf16.xpose.msra.mxu0 %v3634
      %3645 = vmatpush.bf16.xpose.msra.mxu0 %v3631
      %3646 = vmatpush.bf16.xpose.msra.mxu0 %v3628
      %3647 = vmatmul.bf16.gmra.mxu0 %v3616
      %v3648 = vpop.f32.mrf.mxu0
      %v3649 = vadd.f32 0.0, %v3648
      %v3650 = vpop.f32.mrf.mxu0
      %v3651 = vadd.f32 0.0, %v3650
      %3652 = vmatmul.bf16.gmra.mxu0 %v3619
      %v3653 = vpop.f32.mrf.mxu0
      %v3654 = vadd.f32 0.0, %v3653
      %v3655 = vpop.f32.mrf.mxu0
      %v3656 = vadd.f32 0.0, %v3655
      %3657 = vmatmul.bf16.gmra.mxu0 %v3622
      %v3658 = vpop.f32.mrf.mxu0
      %v3659 = vadd.f32 0.0, %v3658
      %v3660 = vpop.f32.mrf.mxu0
      %v3661 = vadd.f32 0.0, %v3660
      %3662 = vmatmul.bf16.gmra.mxu0 %v3625
      %v3663 = vpop.f32.mrf.mxu0
      %v3664 = vadd.f32 0.0, %v3663
      %v3665 = vpop.f32.mrf.mxu0
      %v3666 = vadd.f32 0.0, %v3665
      %3667 = vdwg.mxu0
      %v3676 = vunpack.c.l.b16 %v3486
      %v3677 = vunpack.c.l.b16 %v3487
      %v3678 = vunpack.c.l.b16 %v3488
      %v3679 = vunpack.c.l.b16 %v3489
      %v3680 = vunpack.c.l.b16 %v3490
      %v3681 = vunpack.c.l.b16 %v3491
      %v3682 = vunpack.c.l.b16 %v3492
      %v3683 = vunpack.c.l.b16 %v3493
      %v3684 = vpack.c.b16 %v3677, %v3676
      %v3685 = vpack.c.b16 %v3679, %v3678
      %v3686 = vpack.c.b16 %v3681, %v3680
      %v3687 = vpack.c.b16 %v3683, %v3682
      %v3696 = vunpack.c.l.b16 %v3518
      %v3697 = vunpack.c.l.b16 %v3519
      %v3698 = vunpack.c.l.b16 %v3520
      %v3699 = vunpack.c.l.b16 %v3521
      %v3700 = vunpack.c.l.b16 %v3522
      %v3701 = vunpack.c.l.b16 %v3523
      %v3702 = vunpack.c.l.b16 %v3524
      %v3703 = vunpack.c.l.b16 %v3525
      %v3704 = vpack.c.b16 %v3697, %v3696
      %v3705 = vpack.c.b16 %v3699, %v3698
      %v3706 = vpack.c.b16 %v3701, %v3700
      %v3707 = vpack.c.b16 %v3703, %v3702
      %v3709 = vsel %vm3614, %v3684, 0
      %v3712 = vsel %vm3614, %v3685, 0
      %v3715 = vsel %vm3614, %v3686, 0
      %v3718 = vsel %vm3614, %v3687, 0
      %v3721 = vsel %vm3614, %v3704, 0
      %v3724 = vsel %vm3614, %v3705, 0
      %v3727 = vsel %vm3614, %v3706, 0
      %v3730 = vsel %vm3614, %v3707, 0
      %3732 = vmatpush.bf16.xpose.msra.mxu0 0
      %3733 = vmatpush.bf16.xpose.msra.mxu0 0
      %3734 = vmatpush.bf16.xpose.msra.mxu0 0
      %3735 = vmatpush.bf16.xpose.msra.mxu0 0
      %3736 = vmatpush.bf16.xpose.msra.mxu0 %v3730
      %3737 = vmatpush.bf16.xpose.msra.mxu0 %v3727
      %3738 = vmatpush.bf16.xpose.msra.mxu0 %v3724
      %3739 = vmatpush.bf16.xpose.msra.mxu0 %v3721
      %3740 = vmatmul.bf16.gmra.mxu0 %v3709
      %v3741 = vpop.f32.mrf.mxu0
      %v3742 = vadd.f32 0.0, %v3741
      %v3743 = vpop.f32.mrf.mxu0
      %v3744 = vadd.f32 0.0, %v3743
      %3745 = vmatmul.bf16.gmra.mxu0 %v3712
      %v3746 = vpop.f32.mrf.mxu0
      %v3747 = vadd.f32 0.0, %v3746
      %v3748 = vpop.f32.mrf.mxu0
      %v3749 = vadd.f32 0.0, %v3748
      %3750 = vmatmul.bf16.gmra.mxu0 %v3715
      %v3751 = vpop.f32.mrf.mxu0
      %v3752 = vadd.f32 0.0, %v3751
      %v3753 = vpop.f32.mrf.mxu0
      %v3754 = vadd.f32 0.0, %v3753
      %3755 = vmatmul.bf16.gmra.mxu0 %v3718
      %v3756 = vpop.f32.mrf.mxu0
      %v3757 = vadd.f32 0.0, %v3756
      %v3758 = vpop.f32.mrf.mxu0
      %v3759 = vadd.f32 0.0, %v3758
      %3760 = vdwg.mxu0
      %v3769 = vunpack.c.l.b16 %v3494
      %v3770 = vunpack.c.l.b16 %v3495
      %v3771 = vunpack.c.l.b16 %v3496
      %v3772 = vunpack.c.l.b16 %v3497
      %v3773 = vunpack.c.l.b16 %v3498
      %v3774 = vunpack.c.l.b16 %v3499
      %v3775 = vunpack.c.l.b16 %v3500
      %v3776 = vunpack.c.l.b16 %v3501
      %v3777 = vpack.c.b16 %v3770, %v3769
      %v3778 = vpack.c.b16 %v3772, %v3771
      %v3779 = vpack.c.b16 %v3774, %v3773
      %v3780 = vpack.c.b16 %v3776, %v3775
      %v3789 = vunpack.c.l.b16 %v3526
      %v3790 = vunpack.c.l.b16 %v3527
      %v3791 = vunpack.c.l.b16 %v3528
      %v3792 = vunpack.c.l.b16 %v3529
      %v3793 = vunpack.c.l.b16 %v3530
      %v3794 = vunpack.c.l.b16 %v3531
      %v3795 = vunpack.c.l.b16 %v3532
      %v3796 = vunpack.c.l.b16 %v3533
      %v3797 = vpack.c.b16 %v3790, %v3789
      %v3798 = vpack.c.b16 %v3792, %v3791
      %v3799 = vpack.c.b16 %v3794, %v3793
      %v3800 = vpack.c.b16 %v3796, %v3795
      %v3802 = vsel %vm3614, %v3777, 0
      %v3805 = vsel %vm3614, %v3778, 0
      %v3808 = vsel %vm3614, %v3779, 0
      %v3811 = vsel %vm3614, %v3780, 0
      %v3814 = vsel %vm3614, %v3797, 0
      %v3817 = vsel %vm3614, %v3798, 0
      %v3820 = vsel %vm3614, %v3799, 0
      %v3823 = vsel %vm3614, %v3800, 0
      %3825 = vmatpush.bf16.xpose.msra.mxu0 0
      %3826 = vmatpush.bf16.xpose.msra.mxu0 0
      %3827 = vmatpush.bf16.xpose.msra.mxu0 0
      %3828 = vmatpush.bf16.xpose.msra.mxu0 0
      %3829 = vmatpush.bf16.xpose.msra.mxu0 %v3823
      %3830 = vmatpush.bf16.xpose.msra.mxu0 %v3820
      %3831 = vmatpush.bf16.xpose.msra.mxu0 %v3817
      %3832 = vmatpush.bf16.xpose.msra.mxu0 %v3814
      %3833 = vmatmul.bf16.gmra.mxu0 %v3802
      %v3834 = vpop.f32.mrf.mxu0
      %v3835 = vadd.f32 0.0, %v3834
      %v3836 = vpop.f32.mrf.mxu0
      %v3837 = vadd.f32 0.0, %v3836
      %3838 = vmatmul.bf16.gmra.mxu0 %v3805
      %v3839 = vpop.f32.mrf.mxu0
      %v3840 = vadd.f32 0.0, %v3839
      %v3841 = vpop.f32.mrf.mxu0
      %v3842 = vadd.f32 0.0, %v3841
      %3843 = vmatmul.bf16.gmra.mxu0 %v3808
      %v3844 = vpop.f32.mrf.mxu0
      %v3845 = vadd.f32 0.0, %v3844
      %v3846 = vpop.f32.mrf.mxu0
      %v3847 = vadd.f32 0.0, %v3846
      %3848 = vmatmul.bf16.gmra.mxu0 %v3811
      %v3849 = vpop.f32.mrf.mxu0
      %v3850 = vadd.f32 0.0, %v3849
      %v3851 = vpop.f32.mrf.mxu0
      %v3852 = vadd.f32 0.0, %v3851
      %3853 = vdwg.mxu0
      %v3862 = vunpack.c.l.b16 %v3502
      %v3863 = vunpack.c.l.b16 %v3503
      %v3864 = vunpack.c.l.b16 %v3504
      %v3865 = vunpack.c.l.b16 %v3505
      %v3866 = vunpack.c.l.b16 %v3506
      %v3867 = vunpack.c.l.b16 %v3507
      %v3868 = vunpack.c.l.b16 %v3508
      %v3869 = vunpack.c.l.b16 %v3509
      %v3870 = vpack.c.b16 %v3863, %v3862
      %v3871 = vpack.c.b16 %v3865, %v3864
      %v3872 = vpack.c.b16 %v3867, %v3866
      %v3873 = vpack.c.b16 %v3869, %v3868
      %v3882 = vunpack.c.l.b16 %v3534
      %v3883 = vunpack.c.l.b16 %v3535
      %v3884 = vunpack.c.l.b16 %v3536
      %v3885 = vunpack.c.l.b16 %v3537
      %v3886 = vunpack.c.l.b16 %v3538
      %v3887 = vunpack.c.l.b16 %v3539
      %v3888 = vunpack.c.l.b16 %v3540
      %v3889 = vunpack.c.l.b16 %v3541
      %v3890 = vpack.c.b16 %v3883, %v3882
      %v3891 = vpack.c.b16 %v3885, %v3884
      %v3892 = vpack.c.b16 %v3887, %v3886
      %v3893 = vpack.c.b16 %v3889, %v3888
      %v3895 = vsel %vm3614, %v3870, 0
      %v3898 = vsel %vm3614, %v3871, 0
      %v3901 = vsel %vm3614, %v3872, 0
      %v3904 = vsel %vm3614, %v3873, 0
      %v3907 = vsel %vm3614, %v3890, 0
      %v3910 = vsel %vm3614, %v3891, 0
      %v3913 = vsel %vm3614, %v3892, 0
      %v3916 = vsel %vm3614, %v3893, 0
      %3918 = vmatpush.bf16.xpose.msra.mxu0 0
      %3919 = vmatpush.bf16.xpose.msra.mxu0 0
      %3920 = vmatpush.bf16.xpose.msra.mxu0 0
      %3921 = vmatpush.bf16.xpose.msra.mxu0 0
      %3922 = vmatpush.bf16.xpose.msra.mxu0 %v3916
      %3923 = vmatpush.bf16.xpose.msra.mxu0 %v3913
      %3924 = vmatpush.bf16.xpose.msra.mxu0 %v3910
      %3925 = vmatpush.bf16.xpose.msra.mxu0 %v3907
      %3926 = vmatmul.bf16.gmra.mxu0 %v3895
      %v3927 = vpop.f32.mrf.mxu0
      %v3928 = vadd.f32 0.0, %v3927
      %v3929 = vpop.f32.mrf.mxu0
      %v3930 = vadd.f32 0.0, %v3929
      %3931 = vmatmul.bf16.gmra.mxu0 %v3898
      %v3932 = vpop.f32.mrf.mxu0
      %v3933 = vadd.f32 0.0, %v3932
      %v3934 = vpop.f32.mrf.mxu0
      %v3935 = vadd.f32 0.0, %v3934
      %3936 = vmatmul.bf16.gmra.mxu0 %v3901
      %v3937 = vpop.f32.mrf.mxu0
      %v3938 = vadd.f32 0.0, %v3937
      %v3939 = vpop.f32.mrf.mxu0
      %v3940 = vadd.f32 0.0, %v3939
      %3941 = vmatmul.bf16.gmra.mxu0 %v3904
      %v3942 = vpop.f32.mrf.mxu0
      %v3943 = vadd.f32 0.0, %v3942
      %v3944 = vpop.f32.mrf.mxu0
      %v3945 = vadd.f32 0.0, %v3944
      %3946 = vdwg.mxu0
      %vm3947 = vcmask 523264
      %v3948 = vsel %vm3947, %v3649, -inf
      %3949 = vmax.xlane.f32.xlu0 %v3948
      %v3950 = vpop.xlane.xlu0 %3949
      %v3951 = vsel %vm3947, %v3651, -inf
      %3952 = vmax.xlane.f32.xlu0 %v3951
      %v3953 = vpop.xlane.xlu0 %3952
      %v3954 = vsel %vm3947, %v3654, -inf
      %3955 = vmax.xlane.f32.xlu0 %v3954
      %v3956 = vpop.xlane.xlu0 %3955
      %v3957 = vsel %vm3947, %v3656, -inf
      %3958 = vmax.xlane.f32.xlu0 %v3957
      %v3959 = vpop.xlane.xlu0 %3958
      %v3960 = vsel %vm3947, %v3659, -inf
      %3961 = vmax.xlane.f32.xlu0 %v3960
      %v3962 = vpop.xlane.xlu0 %3961
      %v3963 = vsel %vm3947, %v3661, -inf
      %3964 = vmax.xlane.f32.xlu0 %v3963
      %v3965 = vpop.xlane.xlu0 %3964
      %v3966 = vsel %vm3947, %v3664, -inf
      %3967 = vmax.xlane.f32.xlu0 %v3966
      %v3968 = vpop.xlane.xlu0 %3967
      %v3969 = vsel %vm3947, %v3666, -inf
      %3970 = vmax.xlane.f32.xlu0 %v3969
      %v3971 = vpop.xlane.xlu0 %3970
      %v3972 = vsel %vm3947, %v3742, -inf
      %3973 = vmax.xlane.f32.xlu0 %v3972
      %v3974 = vpop.xlane.xlu0 %3973
      %v3975 = vsel %vm3947, %v3744, -inf
      %3976 = vmax.xlane.f32.xlu0 %v3975
      %v3977 = vpop.xlane.xlu0 %3976
      %v3978 = vsel %vm3947, %v3747, -inf
      %3979 = vmax.xlane.f32.xlu0 %v3978
      %v3980 = vpop.xlane.xlu0 %3979
      %v3981 = vsel %vm3947, %v3749, -inf
      %3982 = vmax.xlane.f32.xlu0 %v3981
      %v3983 = vpop.xlane.xlu0 %3982
      %v3984 = vsel %vm3947, %v3752, -inf
      %3985 = vmax.xlane.f32.xlu0 %v3984
      %v3986 = vpop.xlane.xlu0 %3985
      %v3987 = vsel %vm3947, %v3754, -inf
      %3988 = vmax.xlane.f32.xlu0 %v3987
      %v3989 = vpop.xlane.xlu0 %3988
      %v3990 = vsel %vm3947, %v3757, -inf
      %3991 = vmax.xlane.f32.xlu0 %v3990
      %v3992 = vpop.xlane.xlu0 %3991
      %v3993 = vsel %vm3947, %v3759, -inf
      %3994 = vmax.xlane.f32.xlu0 %v3993
      %v3995 = vpop.xlane.xlu0 %3994
      %v3996 = vsel %vm3947, %v3835, -inf
      %3997 = vmax.xlane.f32.xlu0 %v3996
      %v3998 = vpop.xlane.xlu0 %3997
      %v3999 = vsel %vm3947, %v3837, -inf
      %4000 = vmax.xlane.f32.xlu0 %v3999
      %v4001 = vpop.xlane.xlu0 %4000
      %v4002 = vsel %vm3947, %v3840, -inf
      %4003 = vmax.xlane.f32.xlu0 %v4002
      %v4004 = vpop.xlane.xlu0 %4003
      %v4005 = vsel %vm3947, %v3842, -inf
      %4006 = vmax.xlane.f32.xlu0 %v4005
      %v4007 = vpop.xlane.xlu0 %4006
      %v4008 = vsel %vm3947, %v3845, -inf
      %4009 = vmax.xlane.f32.xlu0 %v4008
      %v4010 = vpop.xlane.xlu0 %4009
      %v4011 = vsel %vm3947, %v3847, -inf
      %4012 = vmax.xlane.f32.xlu0 %v4011
      %v4013 = vpop.xlane.xlu0 %4012
      %v4014 = vsel %vm3947, %v3850, -inf
      %4015 = vmax.xlane.f32.xlu0 %v4014
      %v4016 = vpop.xlane.xlu0 %4015
      %v4017 = vsel %vm3947, %v3852, -inf
      %4018 = vmax.xlane.f32.xlu0 %v4017
      %v4019 = vpop.xlane.xlu0 %4018
      %v4020 = vsel %vm3947, %v3928, -inf
      %4021 = vmax.xlane.f32.xlu0 %v4020
      %v4022 = vpop.xlane.xlu0 %4021
      %v4023 = vsel %vm3947, %v3930, -inf
      %4024 = vmax.xlane.f32.xlu0 %v4023
      %v4025 = vpop.xlane.xlu0 %4024
      %v4026 = vsel %vm3947, %v3933, -inf
      %4027 = vmax.xlane.f32.xlu0 %v4026
      %v4028 = vpop.xlane.xlu0 %4027
      %v4029 = vsel %vm3947, %v3935, -inf
      %4030 = vmax.xlane.f32.xlu0 %v4029
      %v4031 = vpop.xlane.xlu0 %4030
      %v4032 = vsel %vm3947, %v3938, -inf
      %4033 = vmax.xlane.f32.xlu0 %v4032
      %v4034 = vpop.xlane.xlu0 %4033
      %v4035 = vsel %vm3947, %v3940, -inf
      %4036 = vmax.xlane.f32.xlu0 %v4035
      %v4037 = vpop.xlane.xlu0 %4036
      %v4038 = vsel %vm3947, %v3943, -inf
      %4039 = vmax.xlane.f32.xlu0 %v4038
      %v4040 = vpop.xlane.xlu0 %4039
      %v4041 = vsel %vm3947, %v3945, -inf
      %4042 = vmax.xlane.f32.xlu0 %v4041
      %v4043 = vpop.xlane.xlu0 %4042
      %v4044 = vsub.f32 %v3649, %v3950
      %v4045 = vsub.f32 %v3651, %v3953
      %v4046 = vsub.f32 %v3654, %v3956
      %v4047 = vsub.f32 %v3656, %v3959
      %v4048 = vsub.f32 %v3659, %v3962
      %v4049 = vsub.f32 %v3661, %v3965
      %v4050 = vsub.f32 %v3664, %v3968
      %v4051 = vsub.f32 %v3666, %v3971
      %v4052 = vsub.f32 %v3742, %v3974
      %v4053 = vsub.f32 %v3744, %v3977
      %v4054 = vsub.f32 %v3747, %v3980
      %v4055 = vsub.f32 %v3749, %v3983
      %v4056 = vsub.f32 %v3752, %v3986
      %v4057 = vsub.f32 %v3754, %v3989
      %v4058 = vsub.f32 %v3757, %v3992
      %v4059 = vsub.f32 %v3759, %v3995
      %v4060 = vsub.f32 %v3835, %v3998
      %v4061 = vsub.f32 %v3837, %v4001
      %v4062 = vsub.f32 %v3840, %v4004
      %v4063 = vsub.f32 %v3842, %v4007
      %v4064 = vsub.f32 %v3845, %v4010
      %v4065 = vsub.f32 %v3847, %v4013
      %v4066 = vsub.f32 %v3850, %v4016
      %v4067 = vsub.f32 %v3852, %v4019
      %v4068 = vsub.f32 %v3928, %v4022
      %v4069 = vsub.f32 %v3930, %v4025
      %v4070 = vsub.f32 %v3933, %v4028
      %v4071 = vsub.f32 %v3935, %v4031
      %v4072 = vsub.f32 %v3938, %v4034
      %v4073 = vsub.f32 %v3940, %v4037
      %v4074 = vsub.f32 %v3943, %v4040
      %v4075 = vsub.f32 %v3945, %v4043
      %v4076 = vmul.f32 %v4044, 1.442695
      %v4077 = vpow.pop %v4076
      %v4078 = vmul.f32 %v4045, 1.442695
      %v4079 = vpow.pop %v4078
      %v4080 = vmul.f32 %v4046, 1.442695
      %v4081 = vpow.pop %v4080
      %v4082 = vmul.f32 %v4047, 1.442695
      %v4083 = vpow.pop %v4082
      %v4084 = vmul.f32 %v4048, 1.442695
      %v4085 = vpow.pop %v4084
      %v4086 = vmul.f32 %v4049, 1.442695
      %v4087 = vpow.pop %v4086
      %v4088 = vmul.f32 %v4050, 1.442695
      %v4089 = vpow.pop %v4088
      %v4090 = vmul.f32 %v4051, 1.442695
      %v4091 = vpow.pop %v4090
      %v4092 = vmul.f32 %v4052, 1.442695
      %v4093 = vpow.pop %v4092
      %v4094 = vmul.f32 %v4053, 1.442695
      %v4095 = vpow.pop %v4094
      %v4096 = vmul.f32 %v4054, 1.442695
      %v4097 = vpow.pop %v4096
      %v4098 = vmul.f32 %v4055, 1.442695
      %v4099 = vpow.pop %v4098
      %v4100 = vmul.f32 %v4056, 1.442695
      %v4101 = vpow.pop %v4100
      %v4102 = vmul.f32 %v4057, 1.442695
      %v4103 = vpow.pop %v4102
      %v4104 = vmul.f32 %v4058, 1.442695
      %v4105 = vpow.pop %v4104
      %v4106 = vmul.f32 %v4059, 1.442695
      %v4107 = vpow.pop %v4106
      %v4108 = vmul.f32 %v4060, 1.442695
      %v4109 = vpow.pop %v4108
      %v4110 = vmul.f32 %v4061, 1.442695
      %v4111 = vpow.pop %v4110
      %v4112 = vmul.f32 %v4062, 1.442695
      %v4113 = vpow.pop %v4112
      %v4114 = vmul.f32 %v4063, 1.442695
      %v4115 = vpow.pop %v4114
      %v4116 = vmul.f32 %v4064, 1.442695
      %v4117 = vpow.pop %v4116
      %v4118 = vmul.f32 %v4065, 1.442695
      %v4119 = vpow.pop %v4118
      %v4120 = vmul.f32 %v4066, 1.442695
      %v4121 = vpow.pop %v4120
      %v4122 = vmul.f32 %v4067, 1.442695
      %v4123 = vpow.pop %v4122
      %v4124 = vmul.f32 %v4068, 1.442695
      %v4125 = vpow.pop %v4124
      %v4126 = vmul.f32 %v4069, 1.442695
      %v4127 = vpow.pop %v4126
      %v4128 = vmul.f32 %v4070, 1.442695
      %v4129 = vpow.pop %v4128
      %v4130 = vmul.f32 %v4071, 1.442695
      %v4131 = vpow.pop %v4130
      %v4132 = vmul.f32 %v4072, 1.442695
      %v4133 = vpow.pop %v4132
      %v4134 = vmul.f32 %v4073, 1.442695
      %v4135 = vpow.pop %v4134
      %v4136 = vmul.f32 %v4074, 1.442695
      %v4137 = vpow.pop %v4136
      %v4138 = vmul.f32 %v4075, 1.442695
      %v4139 = vpow.pop %v4138
      %v4140 = vsel %vm3947, %v4077, 0.0
      %4141 = vadd.xlane.f32.xlu0 %v4140
      %v4142 = vpop.xlane.xlu0 %4141
      %v4143 = vsel %vm3947, %v4079, 0.0
      %4144 = vadd.xlane.f32.xlu0 %v4143
      %v4145 = vpop.xlane.xlu0 %4144
      %v4146 = vsel %vm3947, %v4081, 0.0
      %4147 = vadd.xlane.f32.xlu0 %v4146
      %v4148 = vpop.xlane.xlu0 %4147
      %v4149 = vsel %vm3947, %v4083, 0.0
      %4150 = vadd.xlane.f32.xlu0 %v4149
      %v4151 = vpop.xlane.xlu0 %4150
      %v4152 = vsel %vm3947, %v4085, 0.0
      %4153 = vadd.xlane.f32.xlu0 %v4152
      %v4154 = vpop.xlane.xlu0 %4153
      %v4155 = vsel %vm3947, %v4087, 0.0
      %4156 = vadd.xlane.f32.xlu0 %v4155
      %v4157 = vpop.xlane.xlu0 %4156
      %v4158 = vsel %vm3947, %v4089, 0.0
      %4159 = vadd.xlane.f32.xlu0 %v4158
      %v4160 = vpop.xlane.xlu0 %4159
      %v4161 = vsel %vm3947, %v4091, 0.0
      %4162 = vadd.xlane.f32.xlu0 %v4161
      %v4163 = vpop.xlane.xlu0 %4162
      %v4164 = vsel %vm3947, %v4093, 0.0
      %4165 = vadd.xlane.f32.xlu0 %v4164
      %v4166 = vpop.xlane.xlu0 %4165
      %v4167 = vsel %vm3947, %v4095, 0.0
      %4168 = vadd.xlane.f32.xlu0 %v4167
      %v4169 = vpop.xlane.xlu0 %4168
      %v4170 = vsel %vm3947, %v4097, 0.0
      %4171 = vadd.xlane.f32.xlu0 %v4170
      %v4172 = vpop.xlane.xlu0 %4171
      %v4173 = vsel %vm3947, %v4099, 0.0
      %4174 = vadd.xlane.f32.xlu0 %v4173
      %v4175 = vpop.xlane.xlu0 %4174
      %v4176 = vsel %vm3947, %v4101, 0.0
      %4177 = vadd.xlane.f32.xlu0 %v4176
      %v4178 = vpop.xlane.xlu0 %4177
      %v4179 = vsel %vm3947, %v4103, 0.0
      %4180 = vadd.xlane.f32.xlu0 %v4179
      %v4181 = vpop.xlane.xlu0 %4180
      %v4182 = vsel %vm3947, %v4105, 0.0
      %4183 = vadd.xlane.f32.xlu0 %v4182
      %v4184 = vpop.xlane.xlu0 %4183
      %v4185 = vsel %vm3947, %v4107, 0.0
      %4186 = vadd.xlane.f32.xlu0 %v4185
      %v4187 = vpop.xlane.xlu0 %4186
      %v4188 = vsel %vm3947, %v4109, 0.0
      %4189 = vadd.xlane.f32.xlu0 %v4188
      %v4190 = vpop.xlane.xlu0 %4189
      %v4191 = vsel %vm3947, %v4111, 0.0
      %4192 = vadd.xlane.f32.xlu0 %v4191
      %v4193 = vpop.xlane.xlu0 %4192
      %v4194 = vsel %vm3947, %v4113, 0.0
      %4195 = vadd.xlane.f32.xlu0 %v4194
      %v4196 = vpop.xlane.xlu0 %4195
      %v4197 = vsel %vm3947, %v4115, 0.0
      %4198 = vadd.xlane.f32.xlu0 %v4197
      %v4199 = vpop.xlane.xlu0 %4198
      %v4200 = vsel %vm3947, %v4117, 0.0
      %4201 = vadd.xlane.f32.xlu0 %v4200
      %v4202 = vpop.xlane.xlu0 %4201
      %v4203 = vsel %vm3947, %v4119, 0.0
      %4204 = vadd.xlane.f32.xlu0 %v4203
      %v4205 = vpop.xlane.xlu0 %4204
      %v4206 = vsel %vm3947, %v4121, 0.0
      %4207 = vadd.xlane.f32.xlu0 %v4206
      %v4208 = vpop.xlane.xlu0 %4207
      %v4209 = vsel %vm3947, %v4123, 0.0
      %4210 = vadd.xlane.f32.xlu0 %v4209
      %v4211 = vpop.xlane.xlu0 %4210
      %v4212 = vsel %vm3947, %v4125, 0.0
      %4213 = vadd.xlane.f32.xlu0 %v4212
      %v4214 = vpop.xlane.xlu0 %4213
      %v4215 = vsel %vm3947, %v4127, 0.0
      %4216 = vadd.xlane.f32.xlu0 %v4215
      %v4217 = vpop.xlane.xlu0 %4216
      %v4218 = vsel %vm3947, %v4129, 0.0
      %4219 = vadd.xlane.f32.xlu0 %v4218
      %v4220 = vpop.xlane.xlu0 %4219
      %v4221 = vsel %vm3947, %v4131, 0.0
      %4222 = vadd.xlane.f32.xlu0 %v4221
      %v4223 = vpop.xlane.xlu0 %4222
      %v4224 = vsel %vm3947, %v4133, 0.0
      %4225 = vadd.xlane.f32.xlu0 %v4224
      %v4226 = vpop.xlane.xlu0 %4225
      %v4227 = vsel %vm3947, %v4135, 0.0
      %4228 = vadd.xlane.f32.xlu0 %v4227
      %v4229 = vpop.xlane.xlu0 %4228
      %v4230 = vsel %vm3947, %v4137, 0.0
      %4231 = vadd.xlane.f32.xlu0 %v4230
      %v4232 = vpop.xlane.xlu0 %4231
      %v4233 = vsel %vm3947, %v4139, 0.0
      %4234 = vadd.xlane.f32.xlu0 %v4233
      %v4235 = vpop.xlane.xlu0 %4234
      %v4236 = vpack.c.bf16 %v4077, %v4077
      %v4237 = vpack.c.bf16 %v4079, %v4079
      %v4238 = vpack.c.bf16 %v4081, %v4081
      %v4239 = vpack.c.bf16 %v4083, %v4083
      %v4240 = vpack.c.bf16 %v4085, %v4085
      %v4241 = vpack.c.bf16 %v4087, %v4087
      %v4242 = vpack.c.bf16 %v4089, %v4089
      %v4243 = vpack.c.bf16 %v4091, %v4091
      %v4244 = vpack.c.bf16 %v4093, %v4093
      %v4245 = vpack.c.bf16 %v4095, %v4095
      %v4246 = vpack.c.bf16 %v4097, %v4097
      %v4247 = vpack.c.bf16 %v4099, %v4099
      %v4248 = vpack.c.bf16 %v4101, %v4101
      %v4249 = vpack.c.bf16 %v4103, %v4103
      %v4250 = vpack.c.bf16 %v4105, %v4105
      %v4251 = vpack.c.bf16 %v4107, %v4107
      %v4252 = vpack.c.bf16 %v4109, %v4109
      %v4253 = vpack.c.bf16 %v4111, %v4111
      %v4254 = vpack.c.bf16 %v4113, %v4113
      %v4255 = vpack.c.bf16 %v4115, %v4115
      %v4256 = vpack.c.bf16 %v4117, %v4117
      %v4257 = vpack.c.bf16 %v4119, %v4119
      %v4258 = vpack.c.bf16 %v4121, %v4121
      %v4259 = vpack.c.bf16 %v4123, %v4123
      %v4260 = vpack.c.bf16 %v4125, %v4125
      %v4261 = vpack.c.bf16 %v4127, %v4127
      %v4262 = vpack.c.bf16 %v4129, %v4129
      %v4263 = vpack.c.bf16 %v4131, %v4131
      %v4264 = vpack.c.bf16 %v4133, %v4133
      %v4265 = vpack.c.bf16 %v4135, %v4135
      %v4266 = vpack.c.bf16 %v4137, %v4137
      %v4267 = vpack.c.bf16 %v4139, %v4139
      %v4276 = vunpack.c.l.b16 %v4236
      %v4277 = vunpack.c.l.b16 %v4237
      %v4278 = vunpack.c.l.b16 %v4238
      %v4279 = vunpack.c.l.b16 %v4239
      %v4280 = vunpack.c.l.b16 %v4240
      %v4281 = vunpack.c.l.b16 %v4241
      %v4282 = vunpack.c.l.b16 %v4242
      %v4283 = vunpack.c.l.b16 %v4243
      %v4284 = vpack.c.b16 %v4277, %v4276
      %v4285 = vpack.c.b16 %v4279, %v4278
      %v4286 = vpack.c.b16 %v4281, %v4280
      %v4287 = vpack.c.b16 %v4283, %v4282
      %v4296 = vunpack.c.l.b16 %v3542
      %v4297 = vunpack.c.l.b16 %v3543
      %v4298 = vunpack.c.l.b16 %v3544
      %v4299 = vunpack.c.l.b16 %v3545
      %v4300 = vunpack.c.l.b16 %v3546
      %v4301 = vunpack.c.l.b16 %v3547
      %v4302 = vunpack.c.l.b16 %v3548
      %v4303 = vunpack.c.l.b16 %v3549
      %v4304 = vpack.c.b16 %v4297, %v4296
      %v4305 = vpack.c.b16 %v4299, %v4298
      %v4306 = vpack.c.b16 %v4301, %v4300
      %v4307 = vpack.c.b16 %v4303, %v4302
      %v4313 = vsel %vm3947, %v4284, 0
      %v4316 = vsel %vm3947, %v4285, 0
      %v4319 = vsel %vm3947, %v4286, 0
      %v4322 = vsel %vm3947, %v4287, 0
      %4324 = vmatpush.bf16.msra.mxu0 0
      %4325 = vmatpush.bf16.msra.mxu0 0
      %4326 = vmatpush.bf16.msra.mxu0 0
      %4327 = vmatpush.bf16.msra.mxu0 0
      %4328 = vmatpush.bf16.msra.mxu0 %v4307
      %4329 = vmatpush.bf16.msra.mxu0 %v4306
      %4330 = vmatpush.bf16.msra.mxu0 %v4305
      %4331 = vmatpush.bf16.msra.mxu0 %v4304
      %4332 = vmatmul.bf16.gmra.mxu0 %v4313
      %v4333 = vpop.f32.mrf.mxu0
      %v4334 = vadd.f32 0.0, %v4333
      %v4335 = vpop.f32.mrf.mxu0
      %v4336 = vadd.f32 0.0, %v4335
      %4337 = vmatmul.bf16.gmra.mxu0 %v4316
      %v4338 = vpop.f32.mrf.mxu0
      %v4339 = vadd.f32 0.0, %v4338
      %v4340 = vpop.f32.mrf.mxu0
      %v4341 = vadd.f32 0.0, %v4340
      %4342 = vmatmul.bf16.gmra.mxu0 %v4319
      %v4343 = vpop.f32.mrf.mxu0
      %v4344 = vadd.f32 0.0, %v4343
      %v4345 = vpop.f32.mrf.mxu0
      %v4346 = vadd.f32 0.0, %v4345
      %4347 = vmatmul.bf16.gmra.mxu0 %v4322
      %v4348 = vpop.f32.mrf.mxu0
      %v4349 = vadd.f32 0.0, %v4348
      %v4350 = vpop.f32.mrf.mxu0
      %v4351 = vadd.f32 0.0, %v4350
      %4352 = vdwg.mxu0
      %v4361 = vunpack.c.l.b16 %v4244
      %v4362 = vunpack.c.l.b16 %v4245
      %v4363 = vunpack.c.l.b16 %v4246
      %v4364 = vunpack.c.l.b16 %v4247
      %v4365 = vunpack.c.l.b16 %v4248
      %v4366 = vunpack.c.l.b16 %v4249
      %v4367 = vunpack.c.l.b16 %v4250
      %v4368 = vunpack.c.l.b16 %v4251
      %v4369 = vpack.c.b16 %v4362, %v4361
      %v4370 = vpack.c.b16 %v4364, %v4363
      %v4371 = vpack.c.b16 %v4366, %v4365
      %v4372 = vpack.c.b16 %v4368, %v4367
      %v4381 = vunpack.c.l.b16 %v3550
      %v4382 = vunpack.c.l.b16 %v3551
      %v4383 = vunpack.c.l.b16 %v3552
      %v4384 = vunpack.c.l.b16 %v3553
      %v4385 = vunpack.c.l.b16 %v3554
      %v4386 = vunpack.c.l.b16 %v3555
      %v4387 = vunpack.c.l.b16 %v3556
      %v4388 = vunpack.c.l.b16 %v3557
      %v4389 = vpack.c.b16 %v4382, %v4381
      %v4390 = vpack.c.b16 %v4384, %v4383
      %v4391 = vpack.c.b16 %v4386, %v4385
      %v4392 = vpack.c.b16 %v4388, %v4387
      %v4398 = vsel %vm3947, %v4369, 0
      %v4401 = vsel %vm3947, %v4370, 0
      %v4404 = vsel %vm3947, %v4371, 0
      %v4407 = vsel %vm3947, %v4372, 0
      %4409 = vmatpush.bf16.msra.mxu0 0
      %4410 = vmatpush.bf16.msra.mxu0 0
      %4411 = vmatpush.bf16.msra.mxu0 0
      %4412 = vmatpush.bf16.msra.mxu0 0
      %4413 = vmatpush.bf16.msra.mxu0 %v4392
      %4414 = vmatpush.bf16.msra.mxu0 %v4391
      %4415 = vmatpush.bf16.msra.mxu0 %v4390
      %4416 = vmatpush.bf16.msra.mxu0 %v4389
      %4417 = vmatmul.bf16.gmra.mxu0 %v4398
      %v4418 = vpop.f32.mrf.mxu0
      %v4419 = vadd.f32 0.0, %v4418
      %v4420 = vpop.f32.mrf.mxu0
      %v4421 = vadd.f32 0.0, %v4420
      %4422 = vmatmul.bf16.gmra.mxu0 %v4401
      %v4423 = vpop.f32.mrf.mxu0
      %v4424 = vadd.f32 0.0, %v4423
      %v4425 = vpop.f32.mrf.mxu0
      %v4426 = vadd.f32 0.0, %v4425
      %4427 = vmatmul.bf16.gmra.mxu0 %v4404
      %v4428 = vpop.f32.mrf.mxu0
      %v4429 = vadd.f32 0.0, %v4428
      %v4430 = vpop.f32.mrf.mxu0
      %v4431 = vadd.f32 0.0, %v4430
      %4432 = vmatmul.bf16.gmra.mxu0 %v4407
      %v4433 = vpop.f32.mrf.mxu0
      %v4434 = vadd.f32 0.0, %v4433
      %v4435 = vpop.f32.mrf.mxu0
      %v4436 = vadd.f32 0.0, %v4435
      %4437 = vdwg.mxu0
      %v4446 = vunpack.c.l.b16 %v4252
      %v4447 = vunpack.c.l.b16 %v4253
      %v4448 = vunpack.c.l.b16 %v4254
      %v4449 = vunpack.c.l.b16 %v4255
      %v4450 = vunpack.c.l.b16 %v4256
      %v4451 = vunpack.c.l.b16 %v4257
      %v4452 = vunpack.c.l.b16 %v4258
      %v4453 = vunpack.c.l.b16 %v4259
      %v4454 = vpack.c.b16 %v4447, %v4446
      %v4455 = vpack.c.b16 %v4449, %v4448
      %v4456 = vpack.c.b16 %v4451, %v4450
      %v4457 = vpack.c.b16 %v4453, %v4452
      %v4466 = vunpack.c.l.b16 %v3558
      %v4467 = vunpack.c.l.b16 %v3559
      %v4468 = vunpack.c.l.b16 %v3560
      %v4469 = vunpack.c.l.b16 %v3561
      %v4470 = vunpack.c.l.b16 %v3562
      %v4471 = vunpack.c.l.b16 %v3563
      %v4472 = vunpack.c.l.b16 %v3564
      %v4473 = vunpack.c.l.b16 %v3565
      %v4474 = vpack.c.b16 %v4467, %v4466
      %v4475 = vpack.c.b16 %v4469, %v4468
      %v4476 = vpack.c.b16 %v4471, %v4470
      %v4477 = vpack.c.b16 %v4473, %v4472
      %v4483 = vsel %vm3947, %v4454, 0
      %v4486 = vsel %vm3947, %v4455, 0
      %v4489 = vsel %vm3947, %v4456, 0
      %v4492 = vsel %vm3947, %v4457, 0
      %4494 = vmatpush.bf16.msra.mxu0 0
      %4495 = vmatpush.bf16.msra.mxu0 0
      %4496 = vmatpush.bf16.msra.mxu0 0
      %4497 = vmatpush.bf16.msra.mxu0 0
      %4498 = vmatpush.bf16.msra.mxu0 %v4477
      %4499 = vmatpush.bf16.msra.mxu0 %v4476
      %4500 = vmatpush.bf16.msra.mxu0 %v4475
      %4501 = vmatpush.bf16.msra.mxu0 %v4474
      %4502 = vmatmul.bf16.gmra.mxu0 %v4483
      %v4503 = vpop.f32.mrf.mxu0
      %v4504 = vadd.f32 0.0, %v4503
      %v4505 = vpop.f32.mrf.mxu0
      %v4506 = vadd.f32 0.0, %v4505
      %4507 = vmatmul.bf16.gmra.mxu0 %v4486
      %v4508 = vpop.f32.mrf.mxu0
      %v4509 = vadd.f32 0.0, %v4508
      %v4510 = vpop.f32.mrf.mxu0
      %v4511 = vadd.f32 0.0, %v4510
      %4512 = vmatmul.bf16.gmra.mxu0 %v4489
      %v4513 = vpop.f32.mrf.mxu0
      %v4514 = vadd.f32 0.0, %v4513
      %v4515 = vpop.f32.mrf.mxu0
      %v4516 = vadd.f32 0.0, %v4515
      %4517 = vmatmul.bf16.gmra.mxu0 %v4492
      %v4518 = vpop.f32.mrf.mxu0
      %v4519 = vadd.f32 0.0, %v4518
      %v4520 = vpop.f32.mrf.mxu0
      %v4521 = vadd.f32 0.0, %v4520
      %4522 = vdwg.mxu0
      %v4531 = vunpack.c.l.b16 %v4260
      %v4532 = vunpack.c.l.b16 %v4261
      %v4533 = vunpack.c.l.b16 %v4262
      %v4534 = vunpack.c.l.b16 %v4263
      %v4535 = vunpack.c.l.b16 %v4264
      %v4536 = vunpack.c.l.b16 %v4265
      %v4537 = vunpack.c.l.b16 %v4266
      %v4538 = vunpack.c.l.b16 %v4267
      %v4539 = vpack.c.b16 %v4532, %v4531
      %v4540 = vpack.c.b16 %v4534, %v4533
      %v4541 = vpack.c.b16 %v4536, %v4535
      %v4542 = vpack.c.b16 %v4538, %v4537
      %v4551 = vunpack.c.l.b16 %v3566
      %v4552 = vunpack.c.l.b16 %v3567
      %v4553 = vunpack.c.l.b16 %v3568
      %v4554 = vunpack.c.l.b16 %v3569
      %v4555 = vunpack.c.l.b16 %v3570
      %v4556 = vunpack.c.l.b16 %v3571
      %v4557 = vunpack.c.l.b16 %v3572
      %v4558 = vunpack.c.l.b16 %v3573
      %v4559 = vpack.c.b16 %v4552, %v4551
      %v4560 = vpack.c.b16 %v4554, %v4553
      %v4561 = vpack.c.b16 %v4556, %v4555
      %v4562 = vpack.c.b16 %v4558, %v4557
      %v4568 = vsel %vm3947, %v4539, 0
      %v4571 = vsel %vm3947, %v4540, 0
      %v4574 = vsel %vm3947, %v4541, 0
      %v4577 = vsel %vm3947, %v4542, 0
      %4579 = vmatpush.bf16.msra.mxu0 0
      %4580 = vmatpush.bf16.msra.mxu0 0
      %4581 = vmatpush.bf16.msra.mxu0 0
      %4582 = vmatpush.bf16.msra.mxu0 0
      %4583 = vmatpush.bf16.msra.mxu0 %v4562
      %4584 = vmatpush.bf16.msra.mxu0 %v4561
      %4585 = vmatpush.bf16.msra.mxu0 %v4560
      %4586 = vmatpush.bf16.msra.mxu0 %v4559
      %4587 = vmatmul.bf16.gmra.mxu0 %v4568
      %v4588 = vpop.f32.mrf.mxu0
      %v4589 = vadd.f32 0.0, %v4588
      %v4590 = vpop.f32.mrf.mxu0
      %v4591 = vadd.f32 0.0, %v4590
      %4592 = vmatmul.bf16.gmra.mxu0 %v4571
      %v4593 = vpop.f32.mrf.mxu0
      %v4594 = vadd.f32 0.0, %v4593
      %v4595 = vpop.f32.mrf.mxu0
      %v4596 = vadd.f32 0.0, %v4595
      %4597 = vmatmul.bf16.gmra.mxu0 %v4574
      %v4598 = vpop.f32.mrf.mxu0
      %v4599 = vadd.f32 0.0, %v4598
      %v4600 = vpop.f32.mrf.mxu0
      %v4601 = vadd.f32 0.0, %v4600
      %4602 = vmatmul.bf16.gmra.mxu0 %v4577
      %v4603 = vpop.f32.mrf.mxu0
      %v4604 = vadd.f32 0.0, %v4603
      %v4605 = vpop.f32.mrf.mxu0
      %v4606 = vadd.f32 0.0, %v4605
      %4607 = vdwg.mxu0
      %v4608 = vrcp.pop %v4142
      %v4609 = vmul.f32 %v4142, %v4608
      %v4610 = vsub.f32 1.0, %v4609
      %v4611 = vmul.f32 %v4608, %v4610
      %v4612 = vadd.f32 %v4608, %v4611
      %vm4613 = vweird.f32 %v4142
      %vm4614 = vweird.f32 %v4608
      %vm4615 = vmor %vm4613, %vm4614
      %v4616 = vsel %vm4615, %v4608, %v4612
      %v4617 = vand.u32 2147483647, %v4142
      %vm4618 = vcmp.eq.f32.partialorder %v4617, 8.507059e+37
      %v4619 = vand.u32 %v4142, 2147483648
      %v4620 = vor.u32 1.1754944e-38, %v4619
      %v4621 = vsel %vm4618, %v4620, %v4616
      %v4622 = vrcp.pop %v4145
      %v4623 = vmul.f32 %v4145, %v4622
      %v4624 = vsub.f32 1.0, %v4623
      %v4625 = vmul.f32 %v4622, %v4624
      %v4626 = vadd.f32 %v4622, %v4625
      %vm4627 = vweird.f32 %v4145
      %vm4628 = vweird.f32 %v4622
      %vm4629 = vmor %vm4627, %vm4628
      %v4630 = vsel %vm4629, %v4622, %v4626
      %v4631 = vand.u32 2147483647, %v4145
      %vm4632 = vcmp.eq.f32.partialorder %v4631, 8.507059e+37
      %v4633 = vand.u32 %v4145, 2147483648
      %v4634 = vor.u32 1.1754944e-38, %v4633
      %v4635 = vsel %vm4632, %v4634, %v4630
      %v4636 = vrcp.pop %v4148
      %v4637 = vmul.f32 %v4148, %v4636
      %v4638 = vsub.f32 1.0, %v4637
      %v4639 = vmul.f32 %v4636, %v4638
      %v4640 = vadd.f32 %v4636, %v4639
      %vm4641 = vweird.f32 %v4148
      %vm4642 = vweird.f32 %v4636
      %vm4643 = vmor %vm4641, %vm4642
      %v4644 = vsel %vm4643, %v4636, %v4640
      %v4645 = vand.u32 2147483647, %v4148
      %vm4646 = vcmp.eq.f32.partialorder %v4645, 8.507059e+37
      %v4647 = vand.u32 %v4148, 2147483648
      %v4648 = vor.u32 1.1754944e-38, %v4647
      %v4649 = vsel %vm4646, %v4648, %v4644
      %v4650 = vrcp.pop %v4151
      %v4651 = vmul.f32 %v4151, %v4650
      %v4652 = vsub.f32 1.0, %v4651
      %v4653 = vmul.f32 %v4650, %v4652
      %v4654 = vadd.f32 %v4650, %v4653
      %vm4655 = vweird.f32 %v4151
      %vm4656 = vweird.f32 %v4650
      %vm4657 = vmor %vm4655, %vm4656
      %v4658 = vsel %vm4657, %v4650, %v4654
      %v4659 = vand.u32 2147483647, %v4151
      %vm4660 = vcmp.eq.f32.partialorder %v4659, 8.507059e+37
      %v4661 = vand.u32 %v4151, 2147483648
      %v4662 = vor.u32 1.1754944e-38, %v4661
      %v4663 = vsel %vm4660, %v4662, %v4658
      %v4664 = vrcp.pop %v4154
      %v4665 = vmul.f32 %v4154, %v4664
      %v4666 = vsub.f32 1.0, %v4665
      %v4667 = vmul.f32 %v4664, %v4666
      %v4668 = vadd.f32 %v4664, %v4667
      %vm4669 = vweird.f32 %v4154
      %vm4670 = vweird.f32 %v4664
      %vm4671 = vmor %vm4669, %vm4670
      %v4672 = vsel %vm4671, %v4664, %v4668
      %v4673 = vand.u32 2147483647, %v4154
      %vm4674 = vcmp.eq.f32.partialorder %v4673, 8.507059e+37
      %v4675 = vand.u32 %v4154, 2147483648
      %v4676 = vor.u32 1.1754944e-38, %v4675
      %v4677 = vsel %vm4674, %v4676, %v4672
      %v4678 = vrcp.pop %v4157
      %v4679 = vmul.f32 %v4157, %v4678
      %v4680 = vsub.f32 1.0, %v4679
      %v4681 = vmul.f32 %v4678, %v4680
      %v4682 = vadd.f32 %v4678, %v4681
      %vm4683 = vweird.f32 %v4157
      %vm4684 = vweird.f32 %v4678
      %vm4685 = vmor %vm4683, %vm4684
      %v4686 = vsel %vm4685, %v4678, %v4682
      %v4687 = vand.u32 2147483647, %v4157
      %vm4688 = vcmp.eq.f32.partialorder %v4687, 8.507059e+37
      %v4689 = vand.u32 %v4157, 2147483648
      %v4690 = vor.u32 1.1754944e-38, %v4689
      %v4691 = vsel %vm4688, %v4690, %v4686
      %v4692 = vrcp.pop %v4160
      %v4693 = vmul.f32 %v4160, %v4692
      %v4694 = vsub.f32 1.0, %v4693
      %v4695 = vmul.f32 %v4692, %v4694
      %v4696 = vadd.f32 %v4692, %v4695
      %vm4697 = vweird.f32 %v4160
      %vm4698 = vweird.f32 %v4692
      %vm4699 = vmor %vm4697, %vm4698
      %v4700 = vsel %vm4699, %v4692, %v4696
      %v4701 = vand.u32 2147483647, %v4160
      %vm4702 = vcmp.eq.f32.partialorder %v4701, 8.507059e+37
      %v4703 = vand.u32 %v4160, 2147483648
      %v4704 = vor.u32 1.1754944e-38, %v4703
      %v4705 = vsel %vm4702, %v4704, %v4700
      %v4706 = vrcp.pop %v4163
      %v4707 = vmul.f32 %v4163, %v4706
      %v4708 = vsub.f32 1.0, %v4707
      %v4709 = vmul.f32 %v4706, %v4708
      %v4710 = vadd.f32 %v4706, %v4709
      %vm4711 = vweird.f32 %v4163
      %vm4712 = vweird.f32 %v4706
      %vm4713 = vmor %vm4711, %vm4712
      %v4714 = vsel %vm4713, %v4706, %v4710
      %v4715 = vand.u32 2147483647, %v4163
      %vm4716 = vcmp.eq.f32.partialorder %v4715, 8.507059e+37
      %v4717 = vand.u32 %v4163, 2147483648
      %v4718 = vor.u32 1.1754944e-38, %v4717
      %v4719 = vsel %vm4716, %v4718, %v4714
      %v4720 = vrcp.pop %v4166
      %v4721 = vmul.f32 %v4166, %v4720
      %v4722 = vsub.f32 1.0, %v4721
      %v4723 = vmul.f32 %v4720, %v4722
      %v4724 = vadd.f32 %v4720, %v4723
      %vm4725 = vweird.f32 %v4166
      %vm4726 = vweird.f32 %v4720
      %vm4727 = vmor %vm4725, %vm4726
      %v4728 = vsel %vm4727, %v4720, %v4724
      %v4729 = vand.u32 2147483647, %v4166
      %vm4730 = vcmp.eq.f32.partialorder %v4729, 8.507059e+37
      %v4731 = vand.u32 %v4166, 2147483648
      %v4732 = vor.u32 1.1754944e-38, %v4731
      %v4733 = vsel %vm4730, %v4732, %v4728
      %v4734 = vrcp.pop %v4169
      %v4735 = vmul.f32 %v4169, %v4734
      %v4736 = vsub.f32 1.0, %v4735
      %v4737 = vmul.f32 %v4734, %v4736
      %v4738 = vadd.f32 %v4734, %v4737
      %vm4739 = vweird.f32 %v4169
      %vm4740 = vweird.f32 %v4734
      %vm4741 = vmor %vm4739, %vm4740
      %v4742 = vsel %vm4741, %v4734, %v4738
      %v4743 = vand.u32 2147483647, %v4169
      %vm4744 = vcmp.eq.f32.partialorder %v4743, 8.507059e+37
      %v4745 = vand.u32 %v4169, 2147483648
      %v4746 = vor.u32 1.1754944e-38, %v4745
      %v4747 = vsel %vm4744, %v4746, %v4742
      %v4748 = vrcp.pop %v4172
      %v4749 = vmul.f32 %v4172, %v4748
      %v4750 = vsub.f32 1.0, %v4749
      %v4751 = vmul.f32 %v4748, %v4750
      %v4752 = vadd.f32 %v4748, %v4751
      %vm4753 = vweird.f32 %v4172
      %vm4754 = vweird.f32 %v4748
      %vm4755 = vmor %vm4753, %vm4754
      %v4756 = vsel %vm4755, %v4748, %v4752
      %v4757 = vand.u32 2147483647, %v4172
      %vm4758 = vcmp.eq.f32.partialorder %v4757, 8.507059e+37
      %v4759 = vand.u32 %v4172, 2147483648
      %v4760 = vor.u32 1.1754944e-38, %v4759
      %v4761 = vsel %vm4758, %v4760, %v4756
      %v4762 = vrcp.pop %v4175
      %v4763 = vmul.f32 %v4175, %v4762
      %v4764 = vsub.f32 1.0, %v4763
      %v4765 = vmul.f32 %v4762, %v4764
      %v4766 = vadd.f32 %v4762, %v4765
      %vm4767 = vweird.f32 %v4175
      %vm4768 = vweird.f32 %v4762
      %vm4769 = vmor %vm4767, %vm4768
      %v4770 = vsel %vm4769, %v4762, %v4766
      %v4771 = vand.u32 2147483647, %v4175
      %vm4772 = vcmp.eq.f32.partialorder %v4771, 8.507059e+37
      %v4773 = vand.u32 %v4175, 2147483648
      %v4774 = vor.u32 1.1754944e-38, %v4773
      %v4775 = vsel %vm4772, %v4774, %v4770
      %v4776 = vrcp.pop %v4178
      %v4777 = vmul.f32 %v4178, %v4776
      %v4778 = vsub.f32 1.0, %v4777
      %v4779 = vmul.f32 %v4776, %v4778
      %v4780 = vadd.f32 %v4776, %v4779
      %vm4781 = vweird.f32 %v4178
      %vm4782 = vweird.f32 %v4776
      %vm4783 = vmor %vm4781, %vm4782
      %v4784 = vsel %vm4783, %v4776, %v4780
      %v4785 = vand.u32 2147483647, %v4178
      %vm4786 = vcmp.eq.f32.partialorder %v4785, 8.507059e+37
      %v4787 = vand.u32 %v4178, 2147483648
      %v4788 = vor.u32 1.1754944e-38, %v4787
      %v4789 = vsel %vm4786, %v4788, %v4784
      %v4790 = vrcp.pop %v4181
      %v4791 = vmul.f32 %v4181, %v4790
      %v4792 = vsub.f32 1.0, %v4791
      %v4793 = vmul.f32 %v4790, %v4792
      %v4794 = vadd.f32 %v4790, %v4793
      %vm4795 = vweird.f32 %v4181
      %vm4796 = vweird.f32 %v4790
      %vm4797 = vmor %vm4795, %vm4796
      %v4798 = vsel %vm4797, %v4790, %v4794
      %v4799 = vand.u32 2147483647, %v4181
      %vm4800 = vcmp.eq.f32.partialorder %v4799, 8.507059e+37
      %v4801 = vand.u32 %v4181, 2147483648
      %v4802 = vor.u32 1.1754944e-38, %v4801
      %v4803 = vsel %vm4800, %v4802, %v4798
      %v4804 = vrcp.pop %v4184
      %v4805 = vmul.f32 %v4184, %v4804
      %v4806 = vsub.f32 1.0, %v4805
      %v4807 = vmul.f32 %v4804, %v4806
      %v4808 = vadd.f32 %v4804, %v4807
      %vm4809 = vweird.f32 %v4184
      %vm4810 = vweird.f32 %v4804
      %vm4811 = vmor %vm4809, %vm4810
      %v4812 = vsel %vm4811, %v4804, %v4808
      %v4813 = vand.u32 2147483647, %v4184
      %vm4814 = vcmp.eq.f32.partialorder %v4813, 8.507059e+37
      %v4815 = vand.u32 %v4184, 2147483648
      %v4816 = vor.u32 1.1754944e-38, %v4815
      %v4817 = vsel %vm4814, %v4816, %v4812
      %v4818 = vrcp.pop %v4187
      %v4819 = vmul.f32 %v4187, %v4818
      %v4820 = vsub.f32 1.0, %v4819
      %v4821 = vmul.f32 %v4818, %v4820
      %v4822 = vadd.f32 %v4818, %v4821
      %vm4823 = vweird.f32 %v4187
      %vm4824 = vweird.f32 %v4818
      %vm4825 = vmor %vm4823, %vm4824
      %v4826 = vsel %vm4825, %v4818, %v4822
      %v4827 = vand.u32 2147483647, %v4187
      %vm4828 = vcmp.eq.f32.partialorder %v4827, 8.507059e+37
      %v4829 = vand.u32 %v4187, 2147483648
      %v4830 = vor.u32 1.1754944e-38, %v4829
      %v4831 = vsel %vm4828, %v4830, %v4826
      %v4832 = vrcp.pop %v4190
      %v4833 = vmul.f32 %v4190, %v4832
      %v4834 = vsub.f32 1.0, %v4833
      %v4835 = vmul.f32 %v4832, %v4834
      %v4836 = vadd.f32 %v4832, %v4835
      %vm4837 = vweird.f32 %v4190
      %vm4838 = vweird.f32 %v4832
      %vm4839 = vmor %vm4837, %vm4838
      %v4840 = vsel %vm4839, %v4832, %v4836
      %v4841 = vand.u32 2147483647, %v4190
      %vm4842 = vcmp.eq.f32.partialorder %v4841, 8.507059e+37
      %v4843 = vand.u32 %v4190, 2147483648
      %v4844 = vor.u32 1.1754944e-38, %v4843
      %v4845 = vsel %vm4842, %v4844, %v4840
      %v4846 = vrcp.pop %v4193
      %v4847 = vmul.f32 %v4193, %v4846
      %v4848 = vsub.f32 1.0, %v4847
      %v4849 = vmul.f32 %v4846, %v4848
      %v4850 = vadd.f32 %v4846, %v4849
      %vm4851 = vweird.f32 %v4193
      %vm4852 = vweird.f32 %v4846
      %vm4853 = vmor %vm4851, %vm4852
      %v4854 = vsel %vm4853, %v4846, %v4850
      %v4855 = vand.u32 2147483647, %v4193
      %vm4856 = vcmp.eq.f32.partialorder %v4855, 8.507059e+37
      %v4857 = vand.u32 %v4193, 2147483648
      %v4858 = vor.u32 1.1754944e-38, %v4857
      %v4859 = vsel %vm4856, %v4858, %v4854
      %v4860 = vrcp.pop %v4196
      %v4861 = vmul.f32 %v4196, %v4860
      %v4862 = vsub.f32 1.0, %v4861
      %v4863 = vmul.f32 %v4860, %v4862
      %v4864 = vadd.f32 %v4860, %v4863
      %vm4865 = vweird.f32 %v4196
      %vm4866 = vweird.f32 %v4860
      %vm4867 = vmor %vm4865, %vm4866
      %v4868 = vsel %vm4867, %v4860, %v4864
      %v4869 = vand.u32 2147483647, %v4196
      %vm4870 = vcmp.eq.f32.partialorder %v4869, 8.507059e+37
      %v4871 = vand.u32 %v4196, 2147483648
      %v4872 = vor.u32 1.1754944e-38, %v4871
      %v4873 = vsel %vm4870, %v4872, %v4868
      %v4874 = vrcp.pop %v4199
      %v4875 = vmul.f32 %v4199, %v4874
      %v4876 = vsub.f32 1.0, %v4875
      %v4877 = vmul.f32 %v4874, %v4876
      %v4878 = vadd.f32 %v4874, %v4877
      %vm4879 = vweird.f32 %v4199
      %vm4880 = vweird.f32 %v4874
      %vm4881 = vmor %vm4879, %vm4880
      %v4882 = vsel %vm4881, %v4874, %v4878
      %v4883 = vand.u32 2147483647, %v4199
      %vm4884 = vcmp.eq.f32.partialorder %v4883, 8.507059e+37
      %v4885 = vand.u32 %v4199, 2147483648
      %v4886 = vor.u32 1.1754944e-38, %v4885
      %v4887 = vsel %vm4884, %v4886, %v4882
      %v4888 = vrcp.pop %v4202
      %v4889 = vmul.f32 %v4202, %v4888
      %v4890 = vsub.f32 1.0, %v4889
      %v4891 = vmul.f32 %v4888, %v4890
      %v4892 = vadd.f32 %v4888, %v4891
      %vm4893 = vweird.f32 %v4202
      %vm4894 = vweird.f32 %v4888
      %vm4895 = vmor %vm4893, %vm4894
      %v4896 = vsel %vm4895, %v4888, %v4892
      %v4897 = vand.u32 2147483647, %v4202
      %vm4898 = vcmp.eq.f32.partialorder %v4897, 8.507059e+37
      %v4899 = vand.u32 %v4202, 2147483648
      %v4900 = vor.u32 1.1754944e-38, %v4899
      %v4901 = vsel %vm4898, %v4900, %v4896
      %v4902 = vrcp.pop %v4205
      %v4903 = vmul.f32 %v4205, %v4902
      %v4904 = vsub.f32 1.0, %v4903
      %v4905 = vmul.f32 %v4902, %v4904
      %v4906 = vadd.f32 %v4902, %v4905
      %vm4907 = vweird.f32 %v4205
      %vm4908 = vweird.f32 %v4902
      %vm4909 = vmor %vm4907, %vm4908
      %v4910 = vsel %vm4909, %v4902, %v4906
      %v4911 = vand.u32 2147483647, %v4205
      %vm4912 = vcmp.eq.f32.partialorder %v4911, 8.507059e+37
      %v4913 = vand.u32 %v4205, 2147483648
      %v4914 = vor.u32 1.1754944e-38, %v4913
      %v4915 = vsel %vm4912, %v4914, %v4910
      %v4916 = vrcp.pop %v4208
      %v4917 = vmul.f32 %v4208, %v4916
      %v4918 = vsub.f32 1.0, %v4917
      %v4919 = vmul.f32 %v4916, %v4918
      %v4920 = vadd.f32 %v4916, %v4919
      %vm4921 = vweird.f32 %v4208
      %vm4922 = vweird.f32 %v4916
      %vm4923 = vmor %vm4921, %vm4922
      %v4924 = vsel %vm4923, %v4916, %v4920
      %v4925 = vand.u32 2147483647, %v4208
      %vm4926 = vcmp.eq.f32.partialorder %v4925, 8.507059e+37
      %v4927 = vand.u32 %v4208, 2147483648
      %v4928 = vor.u32 1.1754944e-38, %v4927
      %v4929 = vsel %vm4926, %v4928, %v4924
      %v4930 = vrcp.pop %v4211
      %v4931 = vmul.f32 %v4211, %v4930
      %v4932 = vsub.f32 1.0, %v4931
      %v4933 = vmul.f32 %v4930, %v4932
      %v4934 = vadd.f32 %v4930, %v4933
      %vm4935 = vweird.f32 %v4211
      %vm4936 = vweird.f32 %v4930
      %vm4937 = vmor %vm4935, %vm4936
      %v4938 = vsel %vm4937, %v4930, %v4934
      %v4939 = vand.u32 2147483647, %v4211
      %vm4940 = vcmp.eq.f32.partialorder %v4939, 8.507059e+37
      %v4941 = vand.u32 %v4211, 2147483648
      %v4942 = vor.u32 1.1754944e-38, %v4941
      %v4943 = vsel %vm4940, %v4942, %v4938
      %v4944 = vrcp.pop %v4214
      %v4945 = vmul.f32 %v4214, %v4944
      %v4946 = vsub.f32 1.0, %v4945
      %v4947 = vmul.f32 %v4944, %v4946
      %v4948 = vadd.f32 %v4944, %v4947
      %vm4949 = vweird.f32 %v4214
      %vm4950 = vweird.f32 %v4944
      %vm4951 = vmor %vm4949, %vm4950
      %v4952 = vsel %vm4951, %v4944, %v4948
      %v4953 = vand.u32 2147483647, %v4214
      %vm4954 = vcmp.eq.f32.partialorder %v4953, 8.507059e+37
      %v4955 = vand.u32 %v4214, 2147483648
      %v4956 = vor.u32 1.1754944e-38, %v4955
      %v4957 = vsel %vm4954, %v4956, %v4952
      %v4958 = vrcp.pop %v4217
      %v4959 = vmul.f32 %v4217, %v4958
      %v4960 = vsub.f32 1.0, %v4959
      %v4961 = vmul.f32 %v4958, %v4960
      %v4962 = vadd.f32 %v4958, %v4961
      %vm4963 = vweird.f32 %v4217
      %vm4964 = vweird.f32 %v4958
      %vm4965 = vmor %vm4963, %vm4964
      %v4966 = vsel %vm4965, %v4958, %v4962
      %v4967 = vand.u32 2147483647, %v4217
      %vm4968 = vcmp.eq.f32.partialorder %v4967, 8.507059e+37
      %v4969 = vand.u32 %v4217, 2147483648
      %v4970 = vor.u32 1.1754944e-38, %v4969
      %v4971 = vsel %vm4968, %v4970, %v4966
      %v4972 = vrcp.pop %v4220
      %v4973 = vmul.f32 %v4220, %v4972
      %v4974 = vsub.f32 1.0, %v4973
      %v4975 = vmul.f32 %v4972, %v4974
      %v4976 = vadd.f32 %v4972, %v4975
      %vm4977 = vweird.f32 %v4220
      %vm4978 = vweird.f32 %v4972
      %vm4979 = vmor %vm4977, %vm4978
      %v4980 = vsel %vm4979, %v4972, %v4976
      %v4981 = vand.u32 2147483647, %v4220
      %vm4982 = vcmp.eq.f32.partialorder %v4981, 8.507059e+37
      %v4983 = vand.u32 %v4220, 2147483648
      %v4984 = vor.u32 1.1754944e-38, %v4983
      %v4985 = vsel %vm4982, %v4984, %v4980
      %v4986 = vrcp.pop %v4223
      %v4987 = vmul.f32 %v4223, %v4986
      %v4988 = vsub.f32 1.0, %v4987
      %v4989 = vmul.f32 %v4986, %v4988
      %v4990 = vadd.f32 %v4986, %v4989
      %vm4991 = vweird.f32 %v4223
      %vm4992 = vweird.f32 %v4986
      %vm4993 = vmor %vm4991, %vm4992
      %v4994 = vsel %vm4993, %v4986, %v4990
      %v4995 = vand.u32 2147483647, %v4223
      %vm4996 = vcmp.eq.f32.partialorder %v4995, 8.507059e+37
      %v4997 = vand.u32 %v4223, 2147483648
      %v4998 = vor.u32 1.1754944e-38, %v4997
      %v4999 = vsel %vm4996, %v4998, %v4994
      %v5000 = vrcp.pop %v4226
      %v5001 = vmul.f32 %v4226, %v5000
      %v5002 = vsub.f32 1.0, %v5001
      %v5003 = vmul.f32 %v5000, %v5002
      %v5004 = vadd.f32 %v5000, %v5003
      %vm5005 = vweird.f32 %v4226
      %vm5006 = vweird.f32 %v5000
      %vm5007 = vmor %vm5005, %vm5006
      %v5008 = vsel %vm5007, %v5000, %v5004
      %v5009 = vand.u32 2147483647, %v4226
      %vm5010 = vcmp.eq.f32.partialorder %v5009, 8.507059e+37
      %v5011 = vand.u32 %v4226, 2147483648
      %v5012 = vor.u32 1.1754944e-38, %v5011
      %v5013 = vsel %vm5010, %v5012, %v5008
      %v5014 = vrcp.pop %v4229
      %v5015 = vmul.f32 %v4229, %v5014
      %v5016 = vsub.f32 1.0, %v5015
      %v5017 = vmul.f32 %v5014, %v5016
      %v5018 = vadd.f32 %v5014, %v5017
      %vm5019 = vweird.f32 %v4229
      %vm5020 = vweird.f32 %v5014
      %vm5021 = vmor %vm5019, %vm5020
      %v5022 = vsel %vm5021, %v5014, %v5018
      %v5023 = vand.u32 2147483647, %v4229
      %vm5024 = vcmp.eq.f32.partialorder %v5023, 8.507059e+37
      %v5025 = vand.u32 %v4229, 2147483648
      %v5026 = vor.u32 1.1754944e-38, %v5025
      %v5027 = vsel %vm5024, %v5026, %v5022
      %v5028 = vrcp.pop %v4232
      %v5029 = vmul.f32 %v4232, %v5028
      %v5030 = vsub.f32 1.0, %v5029
      %v5031 = vmul.f32 %v5028, %v5030
      %v5032 = vadd.f32 %v5028, %v5031
      %vm5033 = vweird.f32 %v4232
      %vm5034 = vweird.f32 %v5028
      %vm5035 = vmor %vm5033, %vm5034
      %v5036 = vsel %vm5035, %v5028, %v5032
      %v5037 = vand.u32 2147483647, %v4232
      %vm5038 = vcmp.eq.f32.partialorder %v5037, 8.507059e+37
      %v5039 = vand.u32 %v4232, 2147483648
      %v5040 = vor.u32 1.1754944e-38, %v5039
      %v5041 = vsel %vm5038, %v5040, %v5036
      %v5042 = vrcp.pop %v4235
      %v5043 = vmul.f32 %v4235, %v5042
      %v5044 = vsub.f32 1.0, %v5043
      %v5045 = vmul.f32 %v5042, %v5044
      %v5046 = vadd.f32 %v5042, %v5045
      %vm5047 = vweird.f32 %v4235
      %vm5048 = vweird.f32 %v5042
      %vm5049 = vmor %vm5047, %vm5048
      %v5050 = vsel %vm5049, %v5042, %v5046
      %v5051 = vand.u32 2147483647, %v4235
      %vm5052 = vcmp.eq.f32.partialorder %v5051, 8.507059e+37
      %v5053 = vand.u32 %v4235, 2147483648
      %v5054 = vor.u32 1.1754944e-38, %v5053
      %v5055 = vsel %vm5052, %v5054, %v5050
      %v5056 = vmul.f32 %v4334, %v4621
      %v5057 = vmul.f32 %v4336, %v4635
      %v5058 = vmul.f32 %v4339, %v4649
      %v5059 = vmul.f32 %v4341, %v4663
      %v5060 = vmul.f32 %v4344, %v4677
      %v5061 = vmul.f32 %v4346, %v4691
      %v5062 = vmul.f32 %v4349, %v4705
      %v5063 = vmul.f32 %v4351, %v4719
      %v5064 = vmul.f32 %v4419, %v4733
      %v5065 = vmul.f32 %v4421, %v4747
      %v5066 = vmul.f32 %v4424, %v4761
      %v5067 = vmul.f32 %v4426, %v4775
      %v5068 = vmul.f32 %v4429, %v4789
      %v5069 = vmul.f32 %v4431, %v4803
      %v5070 = vmul.f32 %v4434, %v4817
      %v5071 = vmul.f32 %v4436, %v4831
      %v5072 = vmul.f32 %v4504, %v4845
      %v5073 = vmul.f32 %v4506, %v4859
      %v5074 = vmul.f32 %v4509, %v4873
      %v5075 = vmul.f32 %v4511, %v4887
      %v5076 = vmul.f32 %v4514, %v4901
      %v5077 = vmul.f32 %v4516, %v4915
      %v5078 = vmul.f32 %v4519, %v4929
      %v5079 = vmul.f32 %v4521, %v4943
      %v5080 = vmul.f32 %v4589, %v4957
      %v5081 = vmul.f32 %v4591, %v4971
      %v5082 = vmul.f32 %v4594, %v4985
      %v5083 = vmul.f32 %v4596, %v4999
      %v5084 = vmul.f32 %v4599, %v5013
      %v5085 = vmul.f32 %v4601, %v5027
      %v5086 = vmul.f32 %v4604, %v5041
      %v5087 = vmul.f32 %v4606, %v5055
      %v5088 = vrot.slane %v5072, 4
      %v5089 = vsel %vm806, %v5088, %v5056
      %v5090 = vrot.slane %v5056, 4
      %v5091 = vsel %vm806, %v5072, %v5090
      %v5093 = vunpack.c.l.s4 1983009808
      %v5094 = vunpack.c.0.s8 %v5093
      %v5095 = vperm.slane %v5089, %v5094
      %v5097 = vunpack.c.l.s4 1983009808
      %v5098 = vunpack.c.0.s8 %v5097
      %v5099 = vperm.slane %v5091, %v5098
      %v5100 = vrot.slane %v5080, 4
      %v5101 = vsel %vm806, %v5100, %v5064
      %v5102 = vrot.slane %v5064, 4
      %v5103 = vsel %vm806, %v5080, %v5102
      %v5105 = vunpack.c.l.s4 1983009808
      %v5106 = vunpack.c.0.s8 %v5105
      %v5107 = vperm.slane %v5101, %v5106
      %v5109 = vunpack.c.l.s4 1983009808
      %v5110 = vunpack.c.0.s8 %v5109
      %v5111 = vperm.slane %v5103, %v5110
      %v5112 = vrot.slane %v5107, 4
      %v5113 = vsel %vm806, %v5112, %v5095
      %v5114 = vrot.slane %v5095, 4
      %v5115 = vsel %vm806, %v5107, %v5114
      %v5117 = vunpack.c.l.s4 1934713408
      %v5118 = vunpack.c.0.s8 %v5117
      %v5119 = vperm.slane %v5113, %v5118
      %v5121 = vunpack.c.l.s4 1934713408
      %v5122 = vunpack.c.0.s8 %v5121
      %v5123 = vperm.slane %v5115, %v5122
      %v5124 = vrot.slane %v5111, 4
      %v5125 = vsel %vm806, %v5124, %v5099
      %v5126 = vrot.slane %v5099, 4
      %v5127 = vsel %vm806, %v5111, %v5126
      %v5129 = vunpack.c.l.s4 1934713408
      %v5130 = vunpack.c.0.s8 %v5129
      %v5131 = vperm.slane %v5125, %v5130
      %v5133 = vunpack.c.l.s4 1934713408
      %v5134 = vunpack.c.0.s8 %v5133
      %v5135 = vperm.slane %v5127, %v5134
      %v5136 = vrot.slane %v5119, 4
      %v5137 = vsel %vm806, 0.0, %v5136
      %v5138 = vrot.slane %v5123, 4
      %v5139 = vsel %vm806, 0.0, %v5138
      %v5140 = vrot.slane %v5131, 4
      %v5141 = vsel %vm806, 0.0, %v5140
      %v5142 = vrot.slane %v5135, 4
      %v5143 = vsel %vm806, 0.0, %v5142
      %v5144 = vrot.slane %v5073, 4
      %v5145 = vsel %vm806, %v5144, %v5057
      %v5146 = vrot.slane %v5057, 4
      %v5147 = vsel %vm806, %v5073, %v5146
      %v5149 = vunpack.c.l.s4 1983009808
      %v5150 = vunpack.c.0.s8 %v5149
      %v5151 = vperm.slane %v5145, %v5150
      %v5153 = vunpack.c.l.s4 1983009808
      %v5154 = vunpack.c.0.s8 %v5153
      %v5155 = vperm.slane %v5147, %v5154
      %v5156 = vrot.slane %v5081, 4
      %v5157 = vsel %vm806, %v5156, %v5065
      %v5158 = vrot.slane %v5065, 4
      %v5159 = vsel %vm806, %v5081, %v5158
      %v5161 = vunpack.c.l.s4 1983009808
      %v5162 = vunpack.c.0.s8 %v5161
      %v5163 = vperm.slane %v5157, %v5162
      %v5165 = vunpack.c.l.s4 1983009808
      %v5166 = vunpack.c.0.s8 %v5165
      %v5167 = vperm.slane %v5159, %v5166
      %v5168 = vrot.slane %v5163, 4
      %v5169 = vsel %vm806, %v5168, %v5151
      %v5170 = vrot.slane %v5151, 4
      %v5171 = vsel %vm806, %v5163, %v5170
      %v5173 = vunpack.c.l.s4 1934713408
      %v5174 = vunpack.c.0.s8 %v5173
      %v5175 = vperm.slane %v5169, %v5174
      %v5177 = vunpack.c.l.s4 1934713408
      %v5178 = vunpack.c.0.s8 %v5177
      %v5179 = vperm.slane %v5171, %v5178
      %v5180 = vrot.slane %v5167, 4
      %v5181 = vsel %vm806, %v5180, %v5155
      %v5182 = vrot.slane %v5155, 4
      %v5183 = vsel %vm806, %v5167, %v5182
      %v5185 = vunpack.c.l.s4 1934713408
      %v5186 = vunpack.c.0.s8 %v5185
      %v5187 = vperm.slane %v5181, %v5186
      %v5189 = vunpack.c.l.s4 1934713408
      %v5190 = vunpack.c.0.s8 %v5189
      %v5191 = vperm.slane %v5183, %v5190
      %v5192 = vrot.slane %v5175, 4
      %v5193 = vsel %vm806, 0.0, %v5192
      %v5194 = vrot.slane %v5179, 4
      %v5195 = vsel %vm806, 0.0, %v5194
      %v5196 = vrot.slane %v5187, 4
      %v5197 = vsel %vm806, 0.0, %v5196
      %v5198 = vrot.slane %v5191, 4
      %v5199 = vsel %vm806, 0.0, %v5198
      %v5200 = vrot.slane %v5074, 4
      %v5201 = vsel %vm806, %v5200, %v5058
      %v5202 = vrot.slane %v5058, 4
      %v5203 = vsel %vm806, %v5074, %v5202
      %v5205 = vunpack.c.l.s4 1983009808
      %v5206 = vunpack.c.0.s8 %v5205
      %v5207 = vperm.slane %v5201, %v5206
      %v5209 = vunpack.c.l.s4 1983009808
      %v5210 = vunpack.c.0.s8 %v5209
      %v5211 = vperm.slane %v5203, %v5210
      %v5212 = vrot.slane %v5082, 4
      %v5213 = vsel %vm806, %v5212, %v5066
      %v5214 = vrot.slane %v5066, 4
      %v5215 = vsel %vm806, %v5082, %v5214
      %v5217 = vunpack.c.l.s4 1983009808
      %v5218 = vunpack.c.0.s8 %v5217
      %v5219 = vperm.slane %v5213, %v5218
      %v5221 = vunpack.c.l.s4 1983009808
      %v5222 = vunpack.c.0.s8 %v5221
      %v5223 = vperm.slane %v5215, %v5222
      %v5224 = vrot.slane %v5219, 4
      %v5225 = vsel %vm806, %v5224, %v5207
      %v5226 = vrot.slane %v5207, 4
      %v5227 = vsel %vm806, %v5219, %v5226
      %v5229 = vunpack.c.l.s4 1934713408
      %v5230 = vunpack.c.0.s8 %v5229
      %v5231 = vperm.slane %v5225, %v5230
      %v5233 = vunpack.c.l.s4 1934713408
      %v5234 = vunpack.c.0.s8 %v5233
      %v5235 = vperm.slane %v5227, %v5234
      %v5236 = vrot.slane %v5223, 4
      %v5237 = vsel %vm806, %v5236, %v5211
      %v5238 = vrot.slane %v5211, 4
      %v5239 = vsel %vm806, %v5223, %v5238
      %v5241 = vunpack.c.l.s4 1934713408
      %v5242 = vunpack.c.0.s8 %v5241
      %v5243 = vperm.slane %v5237, %v5242
      %v5245 = vunpack.c.l.s4 1934713408
      %v5246 = vunpack.c.0.s8 %v5245
      %v5247 = vperm.slane %v5239, %v5246
      %v5248 = vrot.slane %v5231, 4
      %v5249 = vsel %vm806, 0.0, %v5248
      %v5250 = vrot.slane %v5235, 4
      %v5251 = vsel %vm806, 0.0, %v5250
      %v5252 = vrot.slane %v5243, 4
      %v5253 = vsel %vm806, 0.0, %v5252
      %v5254 = vrot.slane %v5247, 4
      %v5255 = vsel %vm806, 0.0, %v5254
      %v5256 = vrot.slane %v5075, 4
      %v5257 = vsel %vm806, %v5256, %v5059
      %v5258 = vrot.slane %v5059, 4
      %v5259 = vsel %vm806, %v5075, %v5258
      %v5261 = vunpack.c.l.s4 1983009808
      %v5262 = vunpack.c.0.s8 %v5261
      %v5263 = vperm.slane %v5257, %v5262
      %v5265 = vunpack.c.l.s4 1983009808
      %v5266 = vunpack.c.0.s8 %v5265
      %v5267 = vperm.slane %v5259, %v5266
      %v5268 = vrot.slane %v5083, 4
      %v5269 = vsel %vm806, %v5268, %v5067
      %v5270 = vrot.slane %v5067, 4
      %v5271 = vsel %vm806, %v5083, %v5270
      %v5273 = vunpack.c.l.s4 1983009808
      %v5274 = vunpack.c.0.s8 %v5273
      %v5275 = vperm.slane %v5269, %v5274
      %v5277 = vunpack.c.l.s4 1983009808
      %v5278 = vunpack.c.0.s8 %v5277
      %v5279 = vperm.slane %v5271, %v5278
      %v5280 = vrot.slane %v5275, 4
      %v5281 = vsel %vm806, %v5280, %v5263
      %v5282 = vrot.slane %v5263, 4
      %v5283 = vsel %vm806, %v5275, %v5282
      %v5285 = vunpack.c.l.s4 1934713408
      %v5286 = vunpack.c.0.s8 %v5285
      %v5287 = vperm.slane %v5281, %v5286
      %v5289 = vunpack.c.l.s4 1934713408
      %v5290 = vunpack.c.0.s8 %v5289
      %v5291 = vperm.slane %v5283, %v5290
      %v5292 = vrot.slane %v5279, 4
      %v5293 = vsel %vm806, %v5292, %v5267
      %v5294 = vrot.slane %v5267, 4
      %v5295 = vsel %vm806, %v5279, %v5294
      %v5297 = vunpack.c.l.s4 1934713408
      %v5298 = vunpack.c.0.s8 %v5297
      %v5299 = vperm.slane %v5293, %v5298
      %v5301 = vunpack.c.l.s4 1934713408
      %v5302 = vunpack.c.0.s8 %v5301
      %v5303 = vperm.slane %v5295, %v5302
      %v5304 = vrot.slane %v5287, 4
      %v5305 = vsel %vm806, 0.0, %v5304
      %v5306 = vrot.slane %v5291, 4
      %v5307 = vsel %vm806, 0.0, %v5306
      %v5308 = vrot.slane %v5299, 4
      %v5309 = vsel %vm806, 0.0, %v5308
      %v5310 = vrot.slane %v5303, 4
      %v5311 = vsel %vm806, 0.0, %v5310
      %v5312 = vrot.slane %v5076, 4
      %v5313 = vsel %vm806, %v5312, %v5060
      %v5314 = vrot.slane %v5060, 4
      %v5315 = vsel %vm806, %v5076, %v5314
      %v5317 = vunpack.c.l.s4 1983009808
      %v5318 = vunpack.c.0.s8 %v5317
      %v5319 = vperm.slane %v5313, %v5318
      %v5321 = vunpack.c.l.s4 1983009808
      %v5322 = vunpack.c.0.s8 %v5321
      %v5323 = vperm.slane %v5315, %v5322
      %v5324 = vrot.slane %v5084, 4
      %v5325 = vsel %vm806, %v5324, %v5068
      %v5326 = vrot.slane %v5068, 4
      %v5327 = vsel %vm806, %v5084, %v5326
      %v5329 = vunpack.c.l.s4 1983009808
      %v5330 = vunpack.c.0.s8 %v5329
      %v5331 = vperm.slane %v5325, %v5330
      %v5333 = vunpack.c.l.s4 1983009808
      %v5334 = vunpack.c.0.s8 %v5333
      %v5335 = vperm.slane %v5327, %v5334
      %v5336 = vrot.slane %v5331, 4
      %v5337 = vsel %vm806, %v5336, %v5319
      %v5338 = vrot.slane %v5319, 4
      %v5339 = vsel %vm806, %v5331, %v5338
      %v5341 = vunpack.c.l.s4 1934713408
      %v5342 = vunpack.c.0.s8 %v5341
      %v5343 = vperm.slane %v5337, %v5342
      %v5345 = vunpack.c.l.s4 1934713408
      %v5346 = vunpack.c.0.s8 %v5345
      %v5347 = vperm.slane %v5339, %v5346
      %v5348 = vrot.slane %v5335, 4
      %v5349 = vsel %vm806, %v5348, %v5323
      %v5350 = vrot.slane %v5323, 4
      %v5351 = vsel %vm806, %v5335, %v5350
      %v5353 = vunpack.c.l.s4 1934713408
      %v5354 = vunpack.c.0.s8 %v5353
      %v5355 = vperm.slane %v5349, %v5354
      %v5357 = vunpack.c.l.s4 1934713408
      %v5358 = vunpack.c.0.s8 %v5357
      %v5359 = vperm.slane %v5351, %v5358
      %v5360 = vrot.slane %v5343, 4
      %v5361 = vsel %vm806, 0.0, %v5360
      %v5362 = vrot.slane %v5347, 4
      %v5363 = vsel %vm806, 0.0, %v5362
      %v5364 = vrot.slane %v5355, 4
      %v5365 = vsel %vm806, 0.0, %v5364
      %v5366 = vrot.slane %v5359, 4
      %v5367 = vsel %vm806, 0.0, %v5366
      %v5368 = vrot.slane %v5077, 4
      %v5369 = vsel %vm806, %v5368, %v5061
      %v5370 = vrot.slane %v5061, 4
      %v5371 = vsel %vm806, %v5077, %v5370
      %v5373 = vunpack.c.l.s4 1983009808
      %v5374 = vunpack.c.0.s8 %v5373
      %v5375 = vperm.slane %v5369, %v5374
      %v5377 = vunpack.c.l.s4 1983009808
      %v5378 = vunpack.c.0.s8 %v5377
      %v5379 = vperm.slane %v5371, %v5378
      %v5380 = vrot.slane %v5085, 4
      %v5381 = vsel %vm806, %v5380, %v5069
      %v5382 = vrot.slane %v5069, 4
      %v5383 = vsel %vm806, %v5085, %v5382
      %v5385 = vunpack.c.l.s4 1983009808
      %v5386 = vunpack.c.0.s8 %v5385
      %v5387 = vperm.slane %v5381, %v5386
      %v5389 = vunpack.c.l.s4 1983009808
      %v5390 = vunpack.c.0.s8 %v5389
      %v5391 = vperm.slane %v5383, %v5390
      %v5392 = vrot.slane %v5387, 4
      %v5393 = vsel %vm806, %v5392, %v5375
      %v5394 = vrot.slane %v5375, 4
      %v5395 = vsel %vm806, %v5387, %v5394
      %v5397 = vunpack.c.l.s4 1934713408
      %v5398 = vunpack.c.0.s8 %v5397
      %v5399 = vperm.slane %v5393, %v5398
      %v5401 = vunpack.c.l.s4 1934713408
      %v5402 = vunpack.c.0.s8 %v5401
      %v5403 = vperm.slane %v5395, %v5402
      %v5404 = vrot.slane %v5391, 4
      %v5405 = vsel %vm806, %v5404, %v5379
      %v5406 = vrot.slane %v5379, 4
      %v5407 = vsel %vm806, %v5391, %v5406
      %v5409 = vunpack.c.l.s4 1934713408
      %v5410 = vunpack.c.0.s8 %v5409
      %v5411 = vperm.slane %v5405, %v5410
      %v5413 = vunpack.c.l.s4 1934713408
      %v5414 = vunpack.c.0.s8 %v5413
      %v5415 = vperm.slane %v5407, %v5414
      %v5416 = vrot.slane %v5399, 4
      %v5417 = vsel %vm806, 0.0, %v5416
      %v5418 = vrot.slane %v5403, 4
      %v5419 = vsel %vm806, 0.0, %v5418
      %v5420 = vrot.slane %v5411, 4
      %v5421 = vsel %vm806, 0.0, %v5420
      %v5422 = vrot.slane %v5415, 4
      %v5423 = vsel %vm806, 0.0, %v5422
      %v5424 = vrot.slane %v5078, 4
      %v5425 = vsel %vm806, %v5424, %v5062
      %v5426 = vrot.slane %v5062, 4
      %v5427 = vsel %vm806, %v5078, %v5426
      %v5429 = vunpack.c.l.s4 1983009808
      %v5430 = vunpack.c.0.s8 %v5429
      %v5431 = vperm.slane %v5425, %v5430
      %v5433 = vunpack.c.l.s4 1983009808
      %v5434 = vunpack.c.0.s8 %v5433
      %v5435 = vperm.slane %v5427, %v5434
      %v5436 = vrot.slane %v5086, 4
      %v5437 = vsel %vm806, %v5436, %v5070
      %v5438 = vrot.slane %v5070, 4
      %v5439 = vsel %vm806, %v5086, %v5438
      %v5441 = vunpack.c.l.s4 1983009808
      %v5442 = vunpack.c.0.s8 %v5441
      %v5443 = vperm.slane %v5437, %v5442
      %v5445 = vunpack.c.l.s4 1983009808
      %v5446 = vunpack.c.0.s8 %v5445
      %v5447 = vperm.slane %v5439, %v5446
      %v5448 = vrot.slane %v5443, 4
      %v5449 = vsel %vm806, %v5448, %v5431
      %v5450 = vrot.slane %v5431, 4
      %v5451 = vsel %vm806, %v5443, %v5450
      %v5453 = vunpack.c.l.s4 1934713408
      %v5454 = vunpack.c.0.s8 %v5453
      %v5455 = vperm.slane %v5449, %v5454
      %v5457 = vunpack.c.l.s4 1934713408
      %v5458 = vunpack.c.0.s8 %v5457
      %v5459 = vperm.slane %v5451, %v5458
      %v5460 = vrot.slane %v5447, 4
      %v5461 = vsel %vm806, %v5460, %v5435
      %v5462 = vrot.slane %v5435, 4
      %v5463 = vsel %vm806, %v5447, %v5462
      %v5465 = vunpack.c.l.s4 1934713408
      %v5466 = vunpack.c.0.s8 %v5465
      %v5467 = vperm.slane %v5461, %v5466
      %v5469 = vunpack.c.l.s4 1934713408
      %v5470 = vunpack.c.0.s8 %v5469
      %v5471 = vperm.slane %v5463, %v5470
      %v5472 = vrot.slane %v5455, 4
      %v5473 = vsel %vm806, 0.0, %v5472
      %v5474 = vrot.slane %v5459, 4
      %v5475 = vsel %vm806, 0.0, %v5474
      %v5476 = vrot.slane %v5467, 4
      %v5477 = vsel %vm806, 0.0, %v5476
      %v5478 = vrot.slane %v5471, 4
      %v5479 = vsel %vm806, 0.0, %v5478
      %v5480 = vrot.slane %v5079, 4
      %v5481 = vsel %vm806, %v5480, %v5063
      %v5482 = vrot.slane %v5063, 4
      %v5483 = vsel %vm806, %v5079, %v5482
      %v5485 = vunpack.c.l.s4 1983009808
      %v5486 = vunpack.c.0.s8 %v5485
      %v5487 = vperm.slane %v5481, %v5486
      %v5489 = vunpack.c.l.s4 1983009808
      %v5490 = vunpack.c.0.s8 %v5489
      %v5491 = vperm.slane %v5483, %v5490
      %v5492 = vrot.slane %v5087, 4
      %v5493 = vsel %vm806, %v5492, %v5071
      %v5494 = vrot.slane %v5071, 4
      %v5495 = vsel %vm806, %v5087, %v5494
      %v5497 = vunpack.c.l.s4 1983009808
      %v5498 = vunpack.c.0.s8 %v5497
      %v5499 = vperm.slane %v5493, %v5498
      %v5501 = vunpack.c.l.s4 1983009808
      %v5502 = vunpack.c.0.s8 %v5501
      %v5503 = vperm.slane %v5495, %v5502
      %v5504 = vrot.slane %v5499, 4
      %v5505 = vsel %vm806, %v5504, %v5487
      %v5506 = vrot.slane %v5487, 4
      %v5507 = vsel %vm806, %v5499, %v5506
      %v5509 = vunpack.c.l.s4 1934713408
      %v5510 = vunpack.c.0.s8 %v5509
      %v5511 = vperm.slane %v5505, %v5510
      %v5513 = vunpack.c.l.s4 1934713408
      %v5514 = vunpack.c.0.s8 %v5513
      %v5515 = vperm.slane %v5507, %v5514
      %v5516 = vrot.slane %v5503, 4
      %v5517 = vsel %vm806, %v5516, %v5491
      %v5518 = vrot.slane %v5491, 4
      %v5519 = vsel %vm806, %v5503, %v5518
      %v5521 = vunpack.c.l.s4 1934713408
      %v5522 = vunpack.c.0.s8 %v5521
      %v5523 = vperm.slane %v5517, %v5522
      %v5525 = vunpack.c.l.s4 1934713408
      %v5526 = vunpack.c.0.s8 %v5525
      %v5527 = vperm.slane %v5519, %v5526
      %v5528 = vrot.slane %v5511, 4
      %v5529 = vsel %vm806, 0.0, %v5528
      %v5530 = vrot.slane %v5515, 4
      %v5531 = vsel %vm806, 0.0, %v5530
      %v5532 = vrot.slane %v5523, 4
      %v5533 = vsel %vm806, 0.0, %v5532
      %v5534 = vrot.slane %v5527, 4
      %v5535 = vsel %vm806, 0.0, %v5534
      %v5536 = vsel %vm806, %v5138, %v5119
      %v5538 = vunpack.c.l.s4 1983009808
      %v5539 = vunpack.c.0.s8 %v5538
      %v5540 = vperm.slane %v5536, %v5539
      %v5541 = vrot.slane %v5139, 4
      %v5542 = vsel %vm806, %v5541, %v5137
      %v5544 = vunpack.c.l.s4 1983009808
      %v5545 = vunpack.c.0.s8 %v5544
      %v5546 = vperm.slane %v5542, %v5545
      %v5547 = vsel %vm806, %v5142, %v5131
      %v5549 = vunpack.c.l.s4 1983009808
      %v5550 = vunpack.c.0.s8 %v5549
      %v5551 = vperm.slane %v5547, %v5550
      %v5552 = vrot.slane %v5143, 4
      %v5553 = vsel %vm806, %v5552, %v5141
      %v5555 = vunpack.c.l.s4 1983009808
      %v5556 = vunpack.c.0.s8 %v5555
      %v5557 = vperm.slane %v5553, %v5556
      %v5558 = vrot.slane %v5546, 4
      %v5559 = vsel %vm806, %v5558, %v5540
      %v5560 = vrot.slane %v5540, 4
      %v5561 = vsel %vm806, %v5546, %v5560
      %v5563 = vunpack.c.l.s4 1934713408
      %v5564 = vunpack.c.0.s8 %v5563
      %v5565 = vperm.slane %v5559, %v5564
      %v5567 = vunpack.c.l.s4 1934713408
      %v5568 = vunpack.c.0.s8 %v5567
      %v5569 = vperm.slane %v5561, %v5568
      %v5570 = vrot.slane %v5557, 4
      %v5571 = vsel %vm806, %v5570, %v5551
      %v5572 = vrot.slane %v5551, 4
      %v5573 = vsel %vm806, %v5557, %v5572
      %v5575 = vunpack.c.l.s4 1934713408
      %v5576 = vunpack.c.0.s8 %v5575
      %v5577 = vperm.slane %v5571, %v5576
      %v5579 = vunpack.c.l.s4 1934713408
      %v5580 = vunpack.c.0.s8 %v5579
      %v5581 = vperm.slane %v5573, %v5580
      %v5582 = vrot.slane %v5577, 4
      %v5583 = vsel %vm806, %v5582, %v5565
      %v5584 = vrot.slane %v5565, 4
      %v5585 = vsel %vm806, %v5577, %v5584
      %v5586 = vrot.slane %v5581, 4
      %v5587 = vsel %vm806, %v5586, %v5569
      %v5588 = vrot.slane %v5569, 4
      %v5589 = vsel %vm806, %v5581, %v5588
      %v5590 = vsel %vm806, %v5194, %v5175
      %v5592 = vunpack.c.l.s4 1983009808
      %v5593 = vunpack.c.0.s8 %v5592
      %v5594 = vperm.slane %v5590, %v5593
      %v5595 = vrot.slane %v5195, 4
      %v5596 = vsel %vm806, %v5595, %v5193
      %v5598 = vunpack.c.l.s4 1983009808
      %v5599 = vunpack.c.0.s8 %v5598
      %v5600 = vperm.slane %v5596, %v5599
      %v5601 = vsel %vm806, %v5198, %v5187
      %v5603 = vunpack.c.l.s4 1983009808
      %v5604 = vunpack.c.0.s8 %v5603
      %v5605 = vperm.slane %v5601, %v5604
      %v5606 = vrot.slane %v5199, 4
      %v5607 = vsel %vm806, %v5606, %v5197
      %v5609 = vunpack.c.l.s4 1983009808
      %v5610 = vunpack.c.0.s8 %v5609
      %v5611 = vperm.slane %v5607, %v5610
      %v5612 = vrot.slane %v5600, 4
      %v5613 = vsel %vm806, %v5612, %v5594
      %v5614 = vrot.slane %v5594, 4
      %v5615 = vsel %vm806, %v5600, %v5614
      %v5617 = vunpack.c.l.s4 1934713408
      %v5618 = vunpack.c.0.s8 %v5617
      %v5619 = vperm.slane %v5613, %v5618
      %v5621 = vunpack.c.l.s4 1934713408
      %v5622 = vunpack.c.0.s8 %v5621
      %v5623 = vperm.slane %v5615, %v5622
      %v5624 = vrot.slane %v5611, 4
      %v5625 = vsel %vm806, %v5624, %v5605
      %v5626 = vrot.slane %v5605, 4
      %v5627 = vsel %vm806, %v5611, %v5626
      %v5629 = vunpack.c.l.s4 1934713408
      %v5630 = vunpack.c.0.s8 %v5629
      %v5631 = vperm.slane %v5625, %v5630
      %v5633 = vunpack.c.l.s4 1934713408
      %v5634 = vunpack.c.0.s8 %v5633
      %v5635 = vperm.slane %v5627, %v5634
      %v5636 = vrot.slane %v5631, 4
      %v5637 = vsel %vm806, %v5636, %v5619
      %v5638 = vrot.slane %v5619, 4
      %v5639 = vsel %vm806, %v5631, %v5638
      %v5640 = vrot.slane %v5635, 4
      %v5641 = vsel %vm806, %v5640, %v5623
      %v5642 = vrot.slane %v5623, 4
      %v5643 = vsel %vm806, %v5635, %v5642
      %v5644 = vsel %vm806, %v5250, %v5231
      %v5646 = vunpack.c.l.s4 1983009808
      %v5647 = vunpack.c.0.s8 %v5646
      %v5648 = vperm.slane %v5644, %v5647
      %v5649 = vrot.slane %v5251, 4
      %v5650 = vsel %vm806, %v5649, %v5249
      %v5652 = vunpack.c.l.s4 1983009808
      %v5653 = vunpack.c.0.s8 %v5652
      %v5654 = vperm.slane %v5650, %v5653
      %v5655 = vsel %vm806, %v5254, %v5243
      %v5657 = vunpack.c.l.s4 1983009808
      %v5658 = vunpack.c.0.s8 %v5657
      %v5659 = vperm.slane %v5655, %v5658
      %v5660 = vrot.slane %v5255, 4
      %v5661 = vsel %vm806, %v5660, %v5253
      %v5663 = vunpack.c.l.s4 1983009808
      %v5664 = vunpack.c.0.s8 %v5663
      %v5665 = vperm.slane %v5661, %v5664
      %v5666 = vrot.slane %v5654, 4
      %v5667 = vsel %vm806, %v5666, %v5648
      %v5668 = vrot.slane %v5648, 4
      %v5669 = vsel %vm806, %v5654, %v5668
      %v5671 = vunpack.c.l.s4 1934713408
      %v5672 = vunpack.c.0.s8 %v5671
      %v5673 = vperm.slane %v5667, %v5672
      %v5675 = vunpack.c.l.s4 1934713408
      %v5676 = vunpack.c.0.s8 %v5675
      %v5677 = vperm.slane %v5669, %v5676
      %v5678 = vrot.slane %v5665, 4
      %v5679 = vsel %vm806, %v5678, %v5659
      %v5680 = vrot.slane %v5659, 4
      %v5681 = vsel %vm806, %v5665, %v5680
      %v5683 = vunpack.c.l.s4 1934713408
      %v5684 = vunpack.c.0.s8 %v5683
      %v5685 = vperm.slane %v5679, %v5684
      %v5687 = vunpack.c.l.s4 1934713408
      %v5688 = vunpack.c.0.s8 %v5687
      %v5689 = vperm.slane %v5681, %v5688
      %v5690 = vrot.slane %v5685, 4
      %v5691 = vsel %vm806, %v5690, %v5673
      %v5692 = vrot.slane %v5673, 4
      %v5693 = vsel %vm806, %v5685, %v5692
      %v5694 = vrot.slane %v5689, 4
      %v5695 = vsel %vm806, %v5694, %v5677
      %v5696 = vrot.slane %v5677, 4
      %v5697 = vsel %vm806, %v5689, %v5696
      %v5698 = vsel %vm806, %v5306, %v5287
      %v5700 = vunpack.c.l.s4 1983009808
      %v5701 = vunpack.c.0.s8 %v5700
      %v5702 = vperm.slane %v5698, %v5701
      %v5703 = vrot.slane %v5307, 4
      %v5704 = vsel %vm806, %v5703, %v5305
      %v5706 = vunpack.c.l.s4 1983009808
      %v5707 = vunpack.c.0.s8 %v5706
      %v5708 = vperm.slane %v5704, %v5707
      %v5709 = vsel %vm806, %v5310, %v5299
      %v5711 = vunpack.c.l.s4 1983009808
      %v5712 = vunpack.c.0.s8 %v5711
      %v5713 = vperm.slane %v5709, %v5712
      %v5714 = vrot.slane %v5311, 4
      %v5715 = vsel %vm806, %v5714, %v5309
      %v5717 = vunpack.c.l.s4 1983009808
      %v5718 = vunpack.c.0.s8 %v5717
      %v5719 = vperm.slane %v5715, %v5718
      %v5720 = vrot.slane %v5708, 4
      %v5721 = vsel %vm806, %v5720, %v5702
      %v5722 = vrot.slane %v5702, 4
      %v5723 = vsel %vm806, %v5708, %v5722
      %v5725 = vunpack.c.l.s4 1934713408
      %v5726 = vunpack.c.0.s8 %v5725
      %v5727 = vperm.slane %v5721, %v5726
      %v5729 = vunpack.c.l.s4 1934713408
      %v5730 = vunpack.c.0.s8 %v5729
      %v5731 = vperm.slane %v5723, %v5730
      %v5732 = vrot.slane %v5719, 4
      %v5733 = vsel %vm806, %v5732, %v5713
      %v5734 = vrot.slane %v5713, 4
      %v5735 = vsel %vm806, %v5719, %v5734
      %v5737 = vunpack.c.l.s4 1934713408
      %v5738 = vunpack.c.0.s8 %v5737
      %v5739 = vperm.slane %v5733, %v5738
      %v5741 = vunpack.c.l.s4 1934713408
      %v5742 = vunpack.c.0.s8 %v5741
      %v5743 = vperm.slane %v5735, %v5742
      %v5744 = vrot.slane %v5739, 4
      %v5745 = vsel %vm806, %v5744, %v5727
      %v5746 = vrot.slane %v5727, 4
      %v5747 = vsel %vm806, %v5739, %v5746
      %v5748 = vrot.slane %v5743, 4
      %v5749 = vsel %vm806, %v5748, %v5731
      %v5750 = vrot.slane %v5731, 4
      %v5751 = vsel %vm806, %v5743, %v5750
      %v5752 = vsel %vm806, %v5362, %v5343
      %v5754 = vunpack.c.l.s4 1983009808
      %v5755 = vunpack.c.0.s8 %v5754
      %v5756 = vperm.slane %v5752, %v5755
      %v5757 = vrot.slane %v5363, 4
      %v5758 = vsel %vm806, %v5757, %v5361
      %v5760 = vunpack.c.l.s4 1983009808
      %v5761 = vunpack.c.0.s8 %v5760
      %v5762 = vperm.slane %v5758, %v5761
      %v5763 = vsel %vm806, %v5366, %v5355
      %v5765 = vunpack.c.l.s4 1983009808
      %v5766 = vunpack.c.0.s8 %v5765
      %v5767 = vperm.slane %v5763, %v5766
      %v5768 = vrot.slane %v5367, 4
      %v5769 = vsel %vm806, %v5768, %v5365
      %v5771 = vunpack.c.l.s4 1983009808
      %v5772 = vunpack.c.0.s8 %v5771
      %v5773 = vperm.slane %v5769, %v5772
      %v5774 = vrot.slane %v5762, 4
      %v5775 = vsel %vm806, %v5774, %v5756
      %v5776 = vrot.slane %v5756, 4
      %v5777 = vsel %vm806, %v5762, %v5776
      %v5779 = vunpack.c.l.s4 1934713408
      %v5780 = vunpack.c.0.s8 %v5779
      %v5781 = vperm.slane %v5775, %v5780
      %v5783 = vunpack.c.l.s4 1934713408
      %v5784 = vunpack.c.0.s8 %v5783
      %v5785 = vperm.slane %v5777, %v5784
      %v5786 = vrot.slane %v5773, 4
      %v5787 = vsel %vm806, %v5786, %v5767
      %v5788 = vrot.slane %v5767, 4
      %v5789 = vsel %vm806, %v5773, %v5788
      %v5791 = vunpack.c.l.s4 1934713408
      %v5792 = vunpack.c.0.s8 %v5791
      %v5793 = vperm.slane %v5787, %v5792
      %v5795 = vunpack.c.l.s4 1934713408
      %v5796 = vunpack.c.0.s8 %v5795
      %v5797 = vperm.slane %v5789, %v5796
      %v5798 = vrot.slane %v5793, 4
      %v5799 = vsel %vm806, %v5798, %v5781
      %v5800 = vrot.slane %v5781, 4
      %v5801 = vsel %vm806, %v5793, %v5800
      %v5802 = vrot.slane %v5797, 4
      %v5803 = vsel %vm806, %v5802, %v5785
      %v5804 = vrot.slane %v5785, 4
      %v5805 = vsel %vm806, %v5797, %v5804
      %v5806 = vsel %vm806, %v5418, %v5399
      %v5808 = vunpack.c.l.s4 1983009808
      %v5809 = vunpack.c.0.s8 %v5808
      %v5810 = vperm.slane %v5806, %v5809
      %v5811 = vrot.slane %v5419, 4
      %v5812 = vsel %vm806, %v5811, %v5417
      %v5814 = vunpack.c.l.s4 1983009808
      %v5815 = vunpack.c.0.s8 %v5814
      %v5816 = vperm.slane %v5812, %v5815
      %v5817 = vsel %vm806, %v5422, %v5411
      %v5819 = vunpack.c.l.s4 1983009808
      %v5820 = vunpack.c.0.s8 %v5819
      %v5821 = vperm.slane %v5817, %v5820
      %v5822 = vrot.slane %v5423, 4
      %v5823 = vsel %vm806, %v5822, %v5421
      %v5825 = vunpack.c.l.s4 1983009808
      %v5826 = vunpack.c.0.s8 %v5825
      %v5827 = vperm.slane %v5823, %v5826
      %v5828 = vrot.slane %v5816, 4
      %v5829 = vsel %vm806, %v5828, %v5810
      %v5830 = vrot.slane %v5810, 4
      %v5831 = vsel %vm806, %v5816, %v5830
      %v5833 = vunpack.c.l.s4 1934713408
      %v5834 = vunpack.c.0.s8 %v5833
      %v5835 = vperm.slane %v5829, %v5834
      %v5837 = vunpack.c.l.s4 1934713408
      %v5838 = vunpack.c.0.s8 %v5837
      %v5839 = vperm.slane %v5831, %v5838
      %v5840 = vrot.slane %v5827, 4
      %v5841 = vsel %vm806, %v5840, %v5821
      %v5842 = vrot.slane %v5821, 4
      %v5843 = vsel %vm806, %v5827, %v5842
      %v5845 = vunpack.c.l.s4 1934713408
      %v5846 = vunpack.c.0.s8 %v5845
      %v5847 = vperm.slane %v5841, %v5846
      %v5849 = vunpack.c.l.s4 1934713408
      %v5850 = vunpack.c.0.s8 %v5849
      %v5851 = vperm.slane %v5843, %v5850
      %v5852 = vrot.slane %v5847, 4
      %v5853 = vsel %vm806, %v5852, %v5835
      %v5854 = vrot.slane %v5835, 4
      %v5855 = vsel %vm806, %v5847, %v5854
      %v5856 = vrot.slane %v5851, 4
      %v5857 = vsel %vm806, %v5856, %v5839
      %v5858 = vrot.slane %v5839, 4
      %v5859 = vsel %vm806, %v5851, %v5858
      %v5860 = vsel %vm806, %v5474, %v5455
      %v5862 = vunpack.c.l.s4 1983009808
      %v5863 = vunpack.c.0.s8 %v5862
      %v5864 = vperm.slane %v5860, %v5863
      %v5865 = vrot.slane %v5475, 4
      %v5866 = vsel %vm806, %v5865, %v5473
      %v5868 = vunpack.c.l.s4 1983009808
      %v5869 = vunpack.c.0.s8 %v5868
      %v5870 = vperm.slane %v5866, %v5869
      %v5871 = vsel %vm806, %v5478, %v5467
      %v5873 = vunpack.c.l.s4 1983009808
      %v5874 = vunpack.c.0.s8 %v5873
      %v5875 = vperm.slane %v5871, %v5874
      %v5876 = vrot.slane %v5479, 4
      %v5877 = vsel %vm806, %v5876, %v5477
      %v5879 = vunpack.c.l.s4 1983009808
      %v5880 = vunpack.c.0.s8 %v5879
      %v5881 = vperm.slane %v5877, %v5880
      %v5882 = vrot.slane %v5870, 4
      %v5883 = vsel %vm806, %v5882, %v5864
      %v5884 = vrot.slane %v5864, 4
      %v5885 = vsel %vm806, %v5870, %v5884
      %v5887 = vunpack.c.l.s4 1934713408
      %v5888 = vunpack.c.0.s8 %v5887
      %v5889 = vperm.slane %v5883, %v5888
      %v5891 = vunpack.c.l.s4 1934713408
      %v5892 = vunpack.c.0.s8 %v5891
      %v5893 = vperm.slane %v5885, %v5892
      %v5894 = vrot.slane %v5881, 4
      %v5895 = vsel %vm806, %v5894, %v5875
      %v5896 = vrot.slane %v5875, 4
      %v5897 = vsel %vm806, %v5881, %v5896
      %v5899 = vunpack.c.l.s4 1934713408
      %v5900 = vunpack.c.0.s8 %v5899
      %v5901 = vperm.slane %v5895, %v5900
      %v5903 = vunpack.c.l.s4 1934713408
      %v5904 = vunpack.c.0.s8 %v5903
      %v5905 = vperm.slane %v5897, %v5904
      %v5906 = vrot.slane %v5901, 4
      %v5907 = vsel %vm806, %v5906, %v5889
      %v5908 = vrot.slane %v5889, 4
      %v5909 = vsel %vm806, %v5901, %v5908
      %v5910 = vrot.slane %v5905, 4
      %v5911 = vsel %vm806, %v5910, %v5893
      %v5912 = vrot.slane %v5893, 4
      %v5913 = vsel %vm806, %v5905, %v5912
      %v5914 = vsel %vm806, %v5530, %v5511
      %v5916 = vunpack.c.l.s4 1983009808
      %v5917 = vunpack.c.0.s8 %v5916
      %v5918 = vperm.slane %v5914, %v5917
      %v5919 = vrot.slane %v5531, 4
      %v5920 = vsel %vm806, %v5919, %v5529
      %v5922 = vunpack.c.l.s4 1983009808
      %v5923 = vunpack.c.0.s8 %v5922
      %v5924 = vperm.slane %v5920, %v5923
      %v5925 = vsel %vm806, %v5534, %v5523
      %v5927 = vunpack.c.l.s4 1983009808
      %v5928 = vunpack.c.0.s8 %v5927
      %v5929 = vperm.slane %v5925, %v5928
      %v5930 = vrot.slane %v5535, 4
      %v5931 = vsel %vm806, %v5930, %v5533
      %v5933 = vunpack.c.l.s4 1983009808
      %v5934 = vunpack.c.0.s8 %v5933
      %v5935 = vperm.slane %v5931, %v5934
      %v5936 = vrot.slane %v5924, 4
      %v5937 = vsel %vm806, %v5936, %v5918
      %v5938 = vrot.slane %v5918, 4
      %v5939 = vsel %vm806, %v5924, %v5938
      %v5941 = vunpack.c.l.s4 1934713408
      %v5942 = vunpack.c.0.s8 %v5941
      %v5943 = vperm.slane %v5937, %v5942
      %v5945 = vunpack.c.l.s4 1934713408
      %v5946 = vunpack.c.0.s8 %v5945
      %v5947 = vperm.slane %v5939, %v5946
      %v5948 = vrot.slane %v5935, 4
      %v5949 = vsel %vm806, %v5948, %v5929
      %v5950 = vrot.slane %v5929, 4
      %v5951 = vsel %vm806, %v5935, %v5950
      %v5953 = vunpack.c.l.s4 1934713408
      %v5954 = vunpack.c.0.s8 %v5953
      %v5955 = vperm.slane %v5949, %v5954
      %v5957 = vunpack.c.l.s4 1934713408
      %v5958 = vunpack.c.0.s8 %v5957
      %v5959 = vperm.slane %v5951, %v5958
      %v5960 = vrot.slane %v5955, 4
      %v5961 = vsel %vm806, %v5960, %v5943
      %v5962 = vrot.slane %v5943, 4
      %v5963 = vsel %vm806, %v5955, %v5962
      %v5964 = vrot.slane %v5959, 4
      %v5965 = vsel %vm806, %v5964, %v5947
      %v5966 = vrot.slane %v5947, 4
      %v5967 = vsel %vm806, %v5959, %v5966
      %5976 = vrot.lane.b32.xlu0 %v5585, 32
      %v5977 = vpop.permute.xlu0 %5976
      %5978 = vrot.lane.b32.xlu0 %v5639, 32
      %v5979 = vpop.permute.xlu0 %5978
      %5980 = vrot.lane.b32.xlu0 %v5693, 32
      %v5981 = vpop.permute.xlu0 %5980
      %5982 = vrot.lane.b32.xlu0 %v5747, 32
      %v5983 = vpop.permute.xlu0 %5982
      %5984 = vrot.lane.b32.xlu0 %v5801, 32
      %v5985 = vpop.permute.xlu0 %5984
      %5986 = vrot.lane.b32.xlu0 %v5855, 32
      %v5987 = vpop.permute.xlu0 %5986
      %5988 = vrot.lane.b32.xlu0 %v5909, 32
      %v5989 = vpop.permute.xlu0 %5988
      %5990 = vrot.lane.b32.xlu0 %v5963, 32
      %v5991 = vpop.permute.xlu0 %5990
      %6008 = vrot.lane.b32.xlu0 %v5587, 64
      %v6009 = vpop.permute.xlu0 %6008
      %6010 = vrot.lane.b32.xlu0 %v5641, 64
      %v6011 = vpop.permute.xlu0 %6010
      %6012 = vrot.lane.b32.xlu0 %v5695, 64
      %v6013 = vpop.permute.xlu0 %6012
      %6014 = vrot.lane.b32.xlu0 %v5749, 64
      %v6015 = vpop.permute.xlu0 %6014
      %6016 = vrot.lane.b32.xlu0 %v5803, 64
      %v6017 = vpop.permute.xlu0 %6016
      %6018 = vrot.lane.b32.xlu0 %v5857, 64
      %v6019 = vpop.permute.xlu0 %6018
      %6020 = vrot.lane.b32.xlu0 %v5911, 64
      %v6021 = vpop.permute.xlu0 %6020
      %6022 = vrot.lane.b32.xlu0 %v5965, 64
      %v6023 = vpop.permute.xlu0 %6022
      %6040 = vrot.lane.b32.xlu0 %v5589, 96
      %v6041 = vpop.permute.xlu0 %6040
      %6042 = vrot.lane.b32.xlu0 %v5643, 96
      %v6043 = vpop.permute.xlu0 %6042
      %6044 = vrot.lane.b32.xlu0 %v5697, 96
      %v6045 = vpop.permute.xlu0 %6044
      %6046 = vrot.lane.b32.xlu0 %v5751, 96
      %v6047 = vpop.permute.xlu0 %6046
      %6048 = vrot.lane.b32.xlu0 %v5805, 96
      %v6049 = vpop.permute.xlu0 %6048
      %6050 = vrot.lane.b32.xlu0 %v5859, 96
      %v6051 = vpop.permute.xlu0 %6050
      %6052 = vrot.lane.b32.xlu0 %v5913, 96
      %v6053 = vpop.permute.xlu0 %6052
      %6054 = vrot.lane.b32.xlu0 %v5967, 96
      %v6055 = vpop.permute.xlu0 %6054
      %v6064 = vsel %vm3614, %v5583, %v5977
      %v6065 = vsel %vm3614, %v5637, %v5979
      %v6066 = vsel %vm3614, %v5691, %v5981
      %v6067 = vsel %vm3614, %v5745, %v5983
      %v6068 = vsel %vm3614, %v5799, %v5985
      %v6069 = vsel %vm3614, %v5853, %v5987
      %v6070 = vsel %vm3614, %v5907, %v5989
      %v6071 = vsel %vm3614, %v5961, %v5991
      %v6072 = vsel %vm3947, %v6064, %v6009
      %v6073 = vsel %vm3947, %v6065, %v6011
      %v6074 = vsel %vm3947, %v6066, %v6013
      %v6075 = vsel %vm3947, %v6067, %v6015
      %v6076 = vsel %vm3947, %v6068, %v6017
      %v6077 = vsel %vm3947, %v6069, %v6019
      %v6078 = vsel %vm3947, %v6070, %v6021
      %v6079 = vsel %vm3947, %v6071, %v6023
      %vm6080 = vcmask 785408
      %v6081 = vsel %vm6080, %v6072, %v6041
      %v6082 = vsel %vm6080, %v6073, %v6043
      %v6083 = vsel %vm6080, %v6074, %v6045
      %v6084 = vsel %vm6080, %v6075, %v6047
      %v6085 = vsel %vm6080, %v6076, %v6049
      %v6086 = vsel %vm6080, %v6077, %v6051
      %v6087 = vsel %vm6080, %v6078, %v6053
      %v6088 = vsel %vm6080, %v6079, %v6055
      %v6089 = vpack.c.bf16 %v6082, %v6081
      %v6090 = vpack.c.bf16 %v6084, %v6083
      %v6091 = vpack.c.bf16 %v6086, %v6085
      %v6092 = vpack.c.bf16 %v6088, %v6087
      %v6093 = vld [vmem:[%s4] sm:$0xf]
      %v6094 = vld [vmem:[%s4 + $0x4] sm:$0xf]
      %v6095 = vld [vmem:[%s4 + $0x8] sm:$0xf]
      %v6096 = vld [vmem:[%s4 + $0xc] sm:$0xf]
      %v6097 = vld [vmem:[%s4 + $0x10] sm:$0xf]
      %v6098 = vld [vmem:[%s4 + $0x14] sm:$0xf]
      %v6099 = vld [vmem:[%s4 + $0x18] sm:$0xf]
      %v6100 = vld [vmem:[%s4 + $0x1c] sm:$0xf]
      %v6101 = vld [vmem:[%s4 + $0x20] sm:$0xf]
      %v6102 = vld [vmem:[%s4 + $0x24] sm:$0xf]
      %v6103 = vld [vmem:[%s4 + $0x28] sm:$0xf]
      %v6104 = vld [vmem:[%s4 + $0x2c] sm:$0xf]
      %v6105 = vld [vmem:[%s4 + $0x30] sm:$0xf]
      %v6106 = vld [vmem:[%s4 + $0x34] sm:$0xf]
      %v6107 = vld [vmem:[%s4 + $0x38] sm:$0xf]
      %v6108 = vld [vmem:[%s4 + $0x3c] sm:$0xf]
      %v6109 = vld [vmem:[%s5] sm:$0x1]
      %v6111 = vperm.slane %v6109, 0
      %v6129 = vunpack.c.l.b16 %v6093
      %v6130 = vunpack.c.l.b16 %v6094
      %v6131 = vunpack.c.l.b16 %v6095
      %v6132 = vunpack.c.l.b16 %v6096
      %v6133 = vunpack.c.l.b16 %v6097
      %v6134 = vunpack.c.l.b16 %v6098
      %v6135 = vunpack.c.l.b16 %v6099
      %v6136 = vunpack.c.l.b16 %v6100
      %v6137 = vunpack.c.l.b16 %v6101
      %v6138 = vunpack.c.l.b16 %v6102
      %v6139 = vunpack.c.l.b16 %v6103
      %v6140 = vunpack.c.l.b16 %v6104
      %v6141 = vunpack.c.l.b16 %v6105
      %v6142 = vunpack.c.l.b16 %v6106
      %v6143 = vunpack.c.l.b16 %v6107
      %v6144 = vunpack.c.l.b16 %v6108
      %v6145 = vpack.c.b16 %v6130, %v6129
      %v6146 = vpack.c.b16 %v6132, %v6131
      %v6147 = vpack.c.b16 %v6134, %v6133
      %v6148 = vpack.c.b16 %v6136, %v6135
      %v6149 = vpack.c.b16 %v6138, %v6137
      %v6150 = vpack.c.b16 %v6140, %v6139
      %v6151 = vpack.c.b16 %v6142, %v6141
      %v6152 = vpack.c.b16 %v6144, %v6143
      %6161 = vmatpush.bf16.msra.mxu0 %v6152
      %6162 = vmatpush.bf16.msra.mxu0 %v6151
      %6163 = vmatpush.bf16.msra.mxu0 %v6150
      %6164 = vmatpush.bf16.msra.mxu0 %v6149
      %6165 = vmatpush.bf16.msra.mxu0 %v6148
      %6166 = vmatpush.bf16.msra.mxu0 %v6147
      %6167 = vmatpush.bf16.msra.mxu0 %v6146
      %6168 = vmatpush.bf16.msra.mxu0 %v6145
      %6169 = vmatmul.bf16.gmra.mxu0 %v6089
      %v6170 = vpop.f32.mrf.mxu0
      %v6171 = vadd.f32 %v6111, %v6170
      %v6172 = vpop.f32.mrf.mxu0
      %v6173 = vadd.f32 %v6111, %v6172
      %6174 = vmatmul.bf16.gmra.mxu0 %v6090
      %v6175 = vpop.f32.mrf.mxu0
      %v6176 = vadd.f32 %v6111, %v6175
      %v6177 = vpop.f32.mrf.mxu0
      %v6178 = vadd.f32 %v6111, %v6177
      %6179 = vmatmul.bf16.gmra.mxu0 %v6091
      %v6180 = vpop.f32.mrf.mxu0
      %v6181 = vadd.f32 %v6111, %v6180
      %v6182 = vpop.f32.mrf.mxu0
      %v6183 = vadd.f32 %v6111, %v6182
      %6184 = vmatmul.bf16.gmra.mxu0 %v6092
      %v6185 = vpop.f32.mrf.mxu0
      %v6186 = vadd.f32 %v6111, %v6185
      %v6187 = vpop.f32.mrf.mxu0
      %v6188 = vadd.f32 %v6111, %v6187
      %6189 = vdwg.mxu0
      %v6190 = vld [vmem:[%s269] sm:$0xff]
      %v6191 = vld [vmem:[%s269 + $0x8] sm:$0xff]
      %v6192 = vld [vmem:[%s269 + $0x10] sm:$0xff]
      %v6193 = vld [vmem:[%s269 + $0x18] sm:$0xff]
      %v6194 = vld [vmem:[%s269 + $0x20] sm:$0xff]
      %v6195 = vld [vmem:[%s269 + $0x28] sm:$0xff]
      %v6196 = vld [vmem:[%s269 + $0x30] sm:$0xff]
      %v6197 = vld [vmem:[%s269 + $0x38] sm:$0xff]
      %v6198 = vadd.f32 %v6171, %v6190
      %v6199 = vadd.f32 %v6173, %v6191
      %v6200 = vadd.f32 %v6176, %v6192
      %v6201 = vadd.f32 %v6178, %v6193
      %v6202 = vadd.f32 %v6181, %v6194
      %v6203 = vadd.f32 %v6183, %v6195
      %v6204 = vadd.f32 %v6186, %v6196
      %v6205 = vadd.f32 %v6188, %v6197
      %6206 = vst [vmem:[%s275] sm:$0xff] %v6198
      %6207 = vst [vmem:[%s275 + $0x8] sm:$0xff] %v6199
      %6208 = vst [vmem:[%s275 + $0x10] sm:$0xff] %v6200
      %6209 = vst [vmem:[%s275 + $0x18] sm:$0xff] %v6201
      %6210 = vst [vmem:[%s275 + $0x20] sm:$0xff] %v6202
      %6211 = vst [vmem:[%s275 + $0x28] sm:$0xff] %v6203
      %6212 = vst [vmem:[%s275 + $0x30] sm:$0xff] %v6204
      %6213 = vst [vmem:[%s275 + $0x38] sm:$0xff] %v6205
      %s6214 = smul.u32 8, %s17
      %p6215 = scmp.lt.s32.totalorder %s6214, 15
      %s6216 = scalar_select %p6215, %s6214, 15
      %s6217 = smul.addr %s6216, 8
      %s6218 = scalar_lea.vmem %s6, %s6217
      // Predicated region
      $region45: #{qkv_attention_two.1} parent=43 // pred_check
        %p6219 = pneg %p171
      $region46: #{qkv_attention_two.1} parent=43 // pred_check_branch
        %6221 = sbr.rel (%p6219) target = $region48
      $region47: #{qkv_attention_two.1} parent=43 // pred_region
        %s6222 = smul.u32 8, %s17
      $region48: #{qkv_attention_two.1} parent=43 // pred_fallthru
        _
    $region44: #{qkv_attention_two.1} parent=5 // pred_fallthru
      _
    %p6223 = scmp.le.s32.totalorder 2, %s12
    // Predicated region
    $region49: #{qkv_attention_two.1} parent=5 // pred_check
      %p6224 = pneg %p6223
    $region50: #{qkv_attention_two.1} parent=5 // pred_check_branch
      %6226 = sbr.rel (%p6224) target = $region52
    $region51: #{qkv_attention_two.1} parent=5 // pred_region
      %s6227 = ssub.s32 %s12, 2
      // Predicated region
      $region53: #{qkv_attention_two.1} parent=51 // pred_check
        %p6228 = pneg %p177
      $region54: #{qkv_attention_two.1} parent=51 // pred_check_branch
        %6230 = sbr.rel (%p6228) target = $region56
      $region55: #{qkv_attention_two.1} parent=51 // pred_region
        %s6231 = smul.u32 8, %s18
        %p6232 = scmp.lt.s32.totalorder %s6231, 15
        %s6233 = scalar_select %p6232, %s6231, 15
        %s6234 = smul.addr %s6233, 8
        %s6235 = scalar_lea.vmem %s6, %s6234
      $region56: #{qkv_attention_two.1} parent=51 // pred_fallthru
        _
    $region52: #{qkv_attention_two.1} parent=5 // pred_fallthru
      _
  $region6: #{qkv_attention_two.1} parent=0 // loop_footer
    %s16 = sadd.s32 1, %s12
  $region7: #{qkv_attention_two.1} parent=0 // loop_footer_branch
    %11 = sbr.rel target = $region3
  $region8: #{qkv_attention_two.1} parent=0 // loop_exit
    _

</llo_original>
